<compile_context>
chip_gen: v7x
topology: tpu7x:2x2x1
jax: 0.10.0
libtpu: 0.0.40
codegen_flags: <defaults>
</compile_context>

<pallas_src>
import functools
import math

import jax
import jax.numpy as jnp
from jax import lax
from jax.experimental import pallas as pl
from jax.experimental.pallas import tpu as pltpu


# ---------------------------------------------------------------------------
# Helpers
# ---------------------------------------------------------------------------
def _round_up(x, m):
    return ((x + m - 1) // m) * m


def _vmem_limit_bytes():
    """Per-generation scoped VMEM budget (v7x has 64 MiB/TC; v5e/v6e 128 MiB)."""
    try:
        kind = jax.devices()[0].device_kind.lower()
    except Exception:  # pragma: no cover
        kind = ""
    if "v7" in kind:
        return 48 * 1024 * 1024
    if "v5" in kind or "v6" in kind:
        return 96 * 1024 * 1024
    return 32 * 1024 * 1024  # conservative fallback for older/unknown parts


def _pick_batch_tile(b_padded):
    """Largest multiple-of-8 divisor of the padded batch, capped for VMEM and
    (when possible) leaving >=2 batch tiles so both v7x TensorCores get work."""
    cap = max(8, min(32, b_padded // 2))
    for bt in range(cap, 7, -1):
        if bt % 8 == 0 and b_padded % bt == 0:
            return bt
    return 8


def _pick_time_chunk(seq_len, b_tile, in_dim, hp, budget_bytes):
    """Largest divisor of S whose (gates scratch + double-buffered in/out
    blocks) footprint stays under the budget."""
    best = 1
    for tc in range(1, min(seq_len, 512) + 1):
        if seq_len % tc:
            continue
        use = 4 * tc * b_tile * (4 * hp + 2 * in_dim + 2 * hp)
        if use <= budget_bytes:
            best = tc
    return best


def _pad2(x, rows, cols):
    return jnp.pad(x, ((0, rows - x.shape[0]), (0, cols - x.shape[1])))


# ---------------------------------------------------------------------------
# Kernel 1: one LSTM layer — batch-tiled, time-streamed, lane-padded gates
# ---------------------------------------------------------------------------
def lstm_layer_kernel(x_ref, wih_ref, whh_ref, b_ref, out_ref, h_scr, c_scr, gx_scr):
    """Grid = (batch_tiles, time_chunks), all arrays time-major.
         x_ref  : (Tc, Bt, Iin)   input chunk (layer input)
         wih_ref: (Iin, 4*Hp)     input->gate weights, gate order [i, f, o, g]
         whh_ref: (Hp, 4*Hp)      hidden->gate weights
         b_ref  : (1, 4*Hp)       b_ih + b_hh
         out_ref: (Tc, Bt, Hp)    hidden state at each timestep of this chunk
         h_scr  : (Bt, Hp)        running hidden state (persists across chunks)
         c_scr  : (Bt, Hp)        running cell state
         gx_scr : (Tc*Bt, 4*Hp)   staged input projection for the chunk
       Padded lanes [H:Hp) of every gate/bias column are zero, which keeps the
       padded entries of h and c exactly zero through the recurrence.
    """
    Tc, Bt, Iin = x_ref.shape
    Hp = whh_ref.shape[0]

    # New batch tile -> reset recurrent state.
    @pl.when(pl.program_id(1) == 0)
    def _():
        h_scr[...] = jnp.zeros_like(h_scr)
        c_scr[...] = jnp.zeros_like(c_scr)

    # Hoisted input projection: ONE (Tc*Bt, Iin) @ (Iin, 4Hp) MXU matmul per
    # chunk (bias folded in), staged in VMEM so it is not pinned in vregs.
    xc = x_ref[...].reshape(Tc * Bt, Iin)
    gx_scr[...] = (
        jnp.dot(xc, wih_ref[...], preferred_element_type=jnp.float32) + b_ref[...]
    )

    whh = whh_ref[...]  # loop-invariant weight load hoisted out of the loop

    def step(t, carry):
        h, c = carry                                     # (Bt, Hp) each
        row = pl.multiple_of(t * Bt, Bt)                 # 8-aligned row offset
        g_x = gx_scr[pl.ds(row, Bt), :]                  # (Bt, 4Hp) dense slice
        gates = g_x + jnp.dot(h, whh, preferred_element_type=jnp.float32)
        # Gate order [i, f, o, g]: one sigmoid over 3*Hp, one tanh over Hp.
        ifo = jax.nn.sigmoid(gates[:, : 3 * Hp])
        i_g = ifo[:, 0 * Hp:1 * Hp]
        f_g = ifo[:, 1 * Hp:2 * Hp]
        o_g = ifo[:, 2 * Hp:3 * Hp]
        g_g = jnp.tanh(gates[:, 3 * Hp:4 * Hp])
        c_new = f_g * c + i_g * g_g
        h_new = o_g * jnp.tanh(c_new)
        out_ref[t] = h_new                               # dense (Bt, Hp) store
        return (h_new, c_new)

    h_f, c_f = lax.fori_loop(0, Tc, step, (h_scr[...], c_scr[...]),
                             unroll=math.gcd(Tc, 8))     # bounded unroll
    h_scr[...] = h_f
    c_scr[...] = c_f


def _lstm_layer_tm(x_tm, wih_p, whh_p, b_p, *, t_chunk, b_tile, vmem_limit):
    """x_tm: (S, Bp, Iin) time-major; returns (S, Bp, Hp) time-major."""
    S, Bp, Iin = x_tm.shape
    Hp = whh_p.shape[0]
    return pl.pallas_call(
        lstm_layer_kernel,
        out_shape=jax.ShapeDtypeStruct((S, Bp, Hp), jnp.float32),
        grid=(Bp // b_tile, S // t_chunk),
        in_specs=[
            pl.BlockSpec((t_chunk, b_tile, Iin), lambda bi, ci: (ci, bi, 0)),
            pl.BlockSpec((Iin, 4 * Hp), lambda bi, ci: (0, 0)),
            pl.BlockSpec((Hp, 4 * Hp), lambda bi, ci: (0, 0)),
            pl.BlockSpec((1, 4 * Hp), lambda bi, ci: (0, 0)),
        ],
        out_specs=pl.BlockSpec((t_chunk, b_tile, Hp), lambda bi, ci: (ci, bi, 0)),
        scratch_shapes=[
            pltpu.VMEM((b_tile, Hp), jnp.float32),            # h carry
            pltpu.VMEM((b_tile, Hp), jnp.float32),            # c carry
            pltpu.VMEM((t_chunk * b_tile, 4 * Hp), jnp.float32),  # gates_x stage
        ],
        compiler_params=pltpu.CompilerParams(
            dimension_semantics=("parallel", "arbitrary"),
            vmem_limit_bytes=vmem_limit,
        ),
    )(x_tm, wih_p, whh_p, b_p)


# ---------------------------------------------------------------------------
# Kernel 2: dot-product attention + fc + sigmoid (fused), gridded over batch
# ---------------------------------------------------------------------------
def attn_fc_kernel(h_ref, wqkv_ref, bqkv_ref, wfc_ref, bfc_ref, out_ref, *,
                   hidden_size):
    """Grid = (batch,). Per program (batch dim squeezed):
         h_ref   : (S, Hp)        last-layer LSTM outputs (padded lanes zero)
         wqkv_ref: (Hp, 3*Hp)     fused [wq | wk | wv], each padded to Hp lanes
         bqkv_ref: (1, 3*Hp)
         wfc_ref : (Hp, Op), bfc_ref: (1, Op)   fc padded to 128 lanes
         out_ref : (S, Op)        sigmoid(fc(attention(h, h, h)))
    """
    Hp = h_ref.shape[-1]
    h = h_ref[...]
    qkv = jnp.dot(h, wqkv_ref[...], preferred_element_type=jnp.float32) + bqkv_ref[...]
    q = qkv[:, 0 * Hp:1 * Hp]
    k = qkv[:, 1 * Hp:2 * Hp]
    v = qkv[:, 2 * Hp:3 * Hp]

    scale = 1.0 / math.sqrt(hidden_size)                 # true H, not padded Hp
    # q @ k^T without materializing the transpose; padded lanes are zero.
    scores = lax.dot_general(q, k, (((1,), (1,)), ((), ())),
                             preferred_element_type=jnp.float32) * scale  # (S,S)
    m = jnp.max(scores, axis=-1, keepdims=True)
    e = jnp.exp(scores - m)
    p = e * pl.reciprocal(jnp.sum(e, axis=-1, keepdims=True), approx=True)
    attn = jnp.dot(p, v, preferred_element_type=jnp.float32)             # (S,Hp)

    y = jnp.dot(attn, wfc_ref[...], preferred_element_type=jnp.float32) + bfc_ref[...]
    out_ref[...] = jax.nn.sigmoid(y)                     # lane-dense store


def _attention_fc(h_bf, wqkv, bqkv, wfc_p, bfc_p, *, hidden_size, vmem_limit):
    B, S, Hp = h_bf.shape
    Op = wfc_p.shape[1]
    kernel = functools.partial(attn_fc_kernel, hidden_size=hidden_size)
    return pl.pallas_call(
        kernel,
        out_shape=jax.ShapeDtypeStruct((B, S, Op), jnp.float32),
        grid=(B,),
        in_specs=[
            pl.BlockSpec((None, S, Hp), lambda bi: (bi, 0, 0)),
            pl.BlockSpec((Hp, 3 * Hp), lambda bi: (0, 0)),
            pl.BlockSpec((1, 3 * Hp), lambda bi: (0, 0)),
            pl.BlockSpec((Hp, Op), lambda bi: (0, 0)),
            pl.BlockSpec((1, Op), lambda bi: (0, 0)),
        ],
        out_specs=pl.BlockSpec((None, S, Op), lambda bi: (bi, 0, 0)),
        compiler_params=pltpu.CompilerParams(
            dimension_semantics=("parallel",),
            vmem_limit_bytes=vmem_limit,
        ),
    )(h_bf, wqkv, bqkv, wfc_p, bfc_p)


# ---------------------------------------------------------------------------
# Parameter packing (lane padding + gate reorder [i,f,g,o] -> [i,f,o,g])
# ---------------------------------------------------------------------------
def _pack_lstm_params(wih_t, whh_t, b, hp, in_rows):
    """wih_t: (in, 4H), whh_t: (H, 4H), b: (1, 4H) in PyTorch gate order
    [i, f, g, o]; returns lane-padded, gate-reordered (in_rows, 4Hp), (Hp, 4Hp),
    (1, 4Hp) with zero padding in all extra rows/lanes."""
    four_h = wih_t.shape[1]
    H = four_h // 4
    order = (0, 1, 3, 2)  # [i, f, g, o] -> [i, f, o, g]

    def pack_cols(w):
        return jnp.concatenate(
            [jnp.pad(w[:, g * H:(g + 1) * H], ((0, 0), (0, hp - H))) for g in order],
            axis=1)

    wih_p = jnp.pad(pack_cols(wih_t), ((0, in_rows - wih_t.shape[0]), (0, 0)))
    whh_p = jnp.pad(pack_cols(whh_t), ((0, hp - whh_t.shape[0]), (0, 0)))
    b_p = pack_cols(b)
    return wih_p, whh_p, b_p


def _pack_qkv(params, hp):
    wqkv = jnp.concatenate([_pad2(params[k], hp, hp) for k in ("wq", "wk", "wv")], axis=1)
    bqkv = jnp.concatenate([_pad2(params[k], 1, hp) for k in ("bq", "bk", "bv")], axis=1)
    return wqkv, bqkv


# ---------------------------------------------------------------------------
# Forward wrapper
# ---------------------------------------------------------------------------
@functools.partial(jax.jit, static_argnames=("t_chunk", "b_tile"))
def lstm_attention_forward(x, params, t_chunk=None, b_tile=None):
    """x: (B, S, input_size), batch_first=True (PyTorch convention)."""
    B, S, I = x.shape
    H = params["lstm_whh"][0].shape[0]
    Hp = _round_up(H, 128)
    O = params["bfc"].shape[1]
    Op = _round_up(O, 128)
    vmem_limit = _vmem_limit_bytes()

    # Pad batch to a sublane-aligned multiple of 8 and go time-major (S, Bp, I)
    # so every per-timestep load/store inside the kernel is a dense block.
    Bp = _round_up(max(B, 8), 8)
    bt = b_tile if b_tile is not None else _pick_batch_tile(Bp)
    assert Bp % bt == 0 and bt % 8 == 0

    x_tm = jnp.swapaxes(x, 0, 1)                                  # (S, B, I)
    if Bp != B:
        x_tm = jnp.pad(x_tm, ((0, 0), (0, Bp - B), (0, 0)))       # (S, Bp, I)

    h_tm = x_tm
    for li, (wih_t, whh_t, b) in enumerate(
            zip(params["lstm_wih"], params["lstm_whh"], params["lstm_b"])):
        in_rows = h_tm.shape[-1]                                  # I or Hp
        wih_p, whh_p, b_p = _pack_lstm_params(wih_t, whh_t, b, Hp, in_rows)
        tc = t_chunk if t_chunk is not None else _pick_time_chunk(
            S, bt, in_rows, Hp, vmem_limit // 4)
        assert S % tc == 0
        h_tm = _lstm_layer_tm(h_tm, wih_p, whh_p, b_p,
                              t_chunk=tc, b_tile=bt, vmem_limit=vmem_limit)

    # Back to batch-first and drop the padded batch rows before attention.
    h_bf = jnp.swapaxes(h_tm, 0, 1)[:B]                           # (B, S, Hp)

    # TODO(synk): attention `score` and the final (h_n, c_n) are discarded by
    # forward(), so they are intentionally never materialized to HBM.
    wqkv, bqkv = _pack_qkv(params, Hp)
    wfc_p = _pad2(params["wfc"], Hp, Op)
    bfc_p = _pad2(params["bfc"], 1, Op)

    out_pad = _attention_fc(h_bf, wqkv, bqkv, wfc_p, bfc_p,
                            hidden_size=H, vmem_limit=vmem_limit)
    return out_pad[:, :, :O]


# ---------------------------------------------------------------------------
# Deterministic parameter init (PyTorch-style uniform bounds), transposed for
# y = x @ W layout. Packing/padding for the kernels happens in the wrapper.
# ---------------------------------------------------------------------------
def init_params(key, num_layers, input_size, hidden_size, output_size):
    H = hidden_size
    bound = 1.0 / math.sqrt(H)
    lstm_wih, lstm_whh, lstm_b = [], [], []
    for layer in range(num_layers):
        in_dim = input_size if layer == 0 else hidden_size
        key, k1, k2, k3, k4 = jax.random.split(key, 5)
        w_ih = jax.random.uniform(k1, (4 * H, in_dim), jnp.float32, -bound, bound)
        w_hh = jax.random.uniform(k2, (4 * H, H), jnp.float32, -bound, bound)
        b_ih = jax.random.uniform(k3, (4 * H,), jnp.float32, -bound, bound)
        b_hh = jax.random.uniform(k4, (4 * H,), jnp.float32, -bound, bound)
        lstm_wih.append(w_ih.T)                       # (in_dim, 4H)
        lstm_whh.append(w_hh.T)                       # (H, 4H)
        lstm_b.append((b_ih + b_hh).reshape(1, 4 * H))

    def linear(k, fan_in, fan_out):
        k1, k2 = jax.random.split(k)
        lb = 1.0 / math.sqrt(fan_in)
        w = jax.random.uniform(k1, (fan_out, fan_in), jnp.float32, -lb, lb)
        bb = jax.random.uniform(k2, (fan_out,), jnp.float32, -lb, lb)
        return w.T, bb.reshape(1, fan_out)

    key, kq, kk, kv, kf = jax.random.split(key, 5)
    wq, bq = linear(kq, H, H)
    wk, bk = linear(kk, H, H)
    wv, bv = linear(kv, H, H)
    wfc, bfc = linear(kf, H, output_size)
    return dict(lstm_wih=lstm_wih, lstm_whh=lstm_whh, lstm_b=lstm_b,
                wq=wq, bq=bq, wk=wk, bk=bk, wv=wv, bv=bv, wfc=wfc, bfc=bfc)


# ---------------------------------------------------------------------------
# Pure-JAX reference for correctness check
# ---------------------------------------------------------------------------
def reference_forward(x, params):
    h_seq = x
    for wih_t, whh_t, b in zip(params["lstm_wih"], params["lstm_whh"], params["lstm_b"]):
        B, S, _ = h_seq.shape
        H = whh_t.shape[0]
        h = jnp.zeros((B, H), jnp.float32)
        c = jnp.zeros((B, H), jnp.float32)
        outs = []
        for t in range(S):
            gates = h_seq[:, t, :] @ wih_t + h @ whh_t + b
            i_g = jax.nn.sigmoid(gates[:, 0 * H:1 * H])
            f_g = jax.nn.sigmoid(gates[:, 1 * H:2 * H])
            g_g = jnp.tanh(gates[:, 2 * H:3 * H])
            o_g = jax.nn.sigmoid(gates[:, 3 * H:4 * H])
            c = f_g * c + i_g * g_g
            h = o_g * jnp.tanh(c)
            outs.append(h)
        h_seq = jnp.stack(outs, axis=1)               # (B, S, H)
    q = h_seq @ params["wq"] + params["bq"]
    k = h_seq @ params["wk"] + params["bk"]
    v = h_seq @ params["wv"] + params["bv"]
    scores = jnp.einsum("bqh,bkh->bqk", q, k) / math.sqrt(q.shape[-1])
    p = jax.nn.softmax(scores, axis=-1)
    attn = jnp.einsum("bqk,bkh->bqh", p, v)
    return jax.nn.sigmoid(attn @ params["wfc"] + params["bfc"])


if __name__ == "__main__":
    num_layers, input_size, hidden_size, output_size = 2, 16, 32, 8
    batch, seq = 2, 16

    key = jax.random.PRNGKey(0)
    pkey, xkey = jax.random.split(key)
    params = init_params(pkey, num_layers, input_size, hidden_size, output_size)
    x = jax.random.normal(xkey, (batch, seq, input_size), jnp.float32)

    # t_chunk=8 -> two time chunks per batch tile, exercising the streamed time
    # grid and the h/c scratch carry across grid steps.
    out = lstm_attention_forward(x, params, t_chunk=8)
    out = jax.block_until_ready(out)

    ref = reference_forward(x, params)
    assert out.shape == (batch, seq, output_size)
    max_err = float(jnp.max(jnp.abs(out - ref)))
    # Tolerance covers the EUP approximate reciprocal in the softmax denominator.
    assert jnp.allclose(out, ref, atol=2e-3, rtol=2e-3), max_err

    print("KERNEL_OK")
</pallas_src>

<mosaic_0001>
module attributes {stable_mosaic.version = 11 : i64} {
  func.func @lstm_layer_kernel(%arg0: i32, %arg1: i32, %arg2: memref<8x8x16xf32, #tpu.memory_space<vmem>>, %arg3: memref<16x512xf32, #tpu.memory_space<vmem>>, %arg4: memref<128x512xf32, #tpu.memory_space<vmem>>, %arg5: memref<1x512xf32, #tpu.memory_space<vmem>>, %arg6: memref<8x8x128xf32, #tpu.memory_space<vmem>>, %arg7: memref<8x128xf32, #tpu.memory_space<vmem>>, %arg8: memref<8x128xf32, #tpu.memory_space<vmem>>, %arg9: memref<64x512xf32, #tpu.memory_space<vmem>>) attributes {dimension_semantics = [#tpu.dimension_semantics<parallel>, #tpu.dimension_semantics<arbitrary>], iteration_bounds = array<i64: 1, 2>, scalar_prefetch = 0 : i64, scratch_operands = 3 : i64, tpu.core_type = #tpu.core_type<tc>, window_params = [{transform_indices = @transform_0, window_bounds = array<i64: 8, 8, 16>}, {pipeline_mode = #tpu.pipeline_mode<synchronous>, transform_indices = @transform_1, window_bounds = array<i64: 16, 512>}, {pipeline_mode = #tpu.pipeline_mode<synchronous>, transform_indices = @transform_2, window_bounds = array<i64: 128, 512>}, {pipeline_mode = #tpu.pipeline_mode<synchronous>, transform_indices = @transform_3, window_bounds = array<i64: 1, 512>}, {transform_indices = @transform_4, window_bounds = array<i64: 8, 8, 128>}]} {
    %c0_i32 = arith.constant 0 : i32
    %0 = arith.cmpi eq, %arg1, %c0_i32 : i32
    %1 = arith.extui %0 : i1 to i32
    %c0_i32_0 = arith.constant 0 : i32
    %2 = arith.cmpi ne, %1, %c0_i32_0 : i32
    scf.if %2 {
      %cst_68 = arith.constant 0.000000e+00 : f32
      %224 = vector.broadcast %cst_68 : f32 to vector<8x128xf32>
      %c0_69 = arith.constant 0 : index
      %c0_70 = arith.constant 0 : index
      %225 = vector.load %arg7[%c0_69, %c0_70] : memref<8x128xf32, #tpu.memory_space<vmem>>, vector<8x128xf32>
      tpu.vector_store %arg7[%c0_69, %c0_70], %224 {strides = array<i32>} : memref<8x128xf32, #tpu.memory_space<vmem>>, vector<8x128xf32>,
      %cst_71 = arith.constant 0.000000e+00 : f32
      %226 = vector.broadcast %cst_71 : f32 to vector<8x128xf32>
      %c0_72 = arith.constant 0 : index
      %c0_73 = arith.constant 0 : index
      %227 = vector.load %arg8[%c0_72, %c0_73] : memref<8x128xf32, #tpu.memory_space<vmem>>, vector<8x128xf32>
      tpu.vector_store %arg8[%c0_72, %c0_73], %226 {strides = array<i32>} : memref<8x128xf32, #tpu.memory_space<vmem>>, vector<8x128xf32>,
    } else {
    }
    %c0 = arith.constant 0 : index
    %c0_1 = arith.constant 0 : index
    %c0_2 = arith.constant 0 : index
    %3 = vector.load %arg2[%c0, %c0_1, %c0_2] : memref<8x8x16xf32, #tpu.memory_space<vmem>>, vector<8x8x16xf32>
    %4 = vector.shape_cast %3 : vector<8x8x16xf32> to vector<64x16xf32>
    %c0_3 = arith.constant 0 : index
    %c0_4 = arith.constant 0 : index
    %5 = vector.load %arg3[%c0_3, %c0_4] : memref<16x512xf32, #tpu.memory_space<vmem>>, vector<16x512xf32>
    %cst = arith.constant dense<0.000000e+00> : vector<64x512xf32>
    %6 = tpu.matmul %4, %5, %cst {dimension_numbers = #tpu.dot_dimension_numbers<[1], [0], [0], [1], [0, 0, 1, 1], [], []>} : vector<64x16xf32>, vector<16x512xf32>, vector<64x512xf32> -> vector<64x512xf32>
    %c0_5 = arith.constant 0 : index
    %c0_6 = arith.constant 0 : index
    %7 = vector.load %arg5[%c0_5, %c0_6] : memref<1x512xf32, #tpu.memory_space<vmem>>, vector<1x512xf32>
    %8 = vector.broadcast %7 : vector<1x512xf32> to vector<64x512xf32>
    %9 = arith.addf %6, %8 : vector<64x512xf32>
    %c0_7 = arith.constant 0 : index
    %c0_8 = arith.constant 0 : index
    %10 = vector.load %arg9[%c0_7, %c0_8] : memref<64x512xf32, #tpu.memory_space<vmem>>, vector<64x512xf32>
    tpu.vector_store %arg9[%c0_7, %c0_8], %9 {strides = array<i32>} : memref<64x512xf32, #tpu.memory_space<vmem>>, vector<64x512xf32>,
    %c0_9 = arith.constant 0 : index
    %c0_10 = arith.constant 0 : index
    %11 = vector.load %arg4[%c0_9, %c0_10] : memref<128x512xf32, #tpu.memory_space<vmem>>, vector<128x512xf32>
    %c0_11 = arith.constant 0 : index
    %c0_12 = arith.constant 0 : index
    %12 = vector.load %arg7[%c0_11, %c0_12] : memref<8x128xf32, #tpu.memory_space<vmem>>, vector<8x128xf32>
    %c0_13 = arith.constant 0 : index
    %c0_14 = arith.constant 0 : index
    %13 = vector.load %arg8[%c0_13, %c0_14] : memref<8x128xf32, #tpu.memory_space<vmem>>, vector<8x128xf32>
    %c0_i32_15 = arith.constant 0 : i32
    %c8_i32 = arith.constant 8 : i32
    %14 = arith.muli %c0_i32_15, %c8_i32 : i32
    %15 = tpu.assume_multiple %14, 8 : i32
    %16 = arith.index_cast %15 : i32 to index
    %c0_16 = arith.constant 0 : index
    %17 = vector.load %arg9[%16, %c0_16] : memref<64x512xf32, #tpu.memory_space<vmem>>, vector<8x512xf32>
    %cst_17 = arith.constant dense<0.000000e+00> : vector<8x512xf32>
    %18 = tpu.matmul %12, %11, %cst_17 {dimension_numbers = #tpu.dot_dimension_numbers<[1], [0], [0], [1], [0, 0, 1, 1], [], []>} : vector<8x128xf32>, vector<128x512xf32>, vector<8x512xf32> -> vector<8x512xf32>
    %19 = arith.addf %17, %18 : vector<8x512xf32>
    %20 = vector.extract_strided_slice %19 {offsets = [0, 0], sizes = [8, 384], strides = [1, 1]} : vector<8x512xf32> to vector<8x384xf32>
    %21 = arith.negf %20 : vector<8x384xf32>
    %22 = math.exp %21 : vector<8x384xf32>
    %cst_18 = arith.constant 1.000000e+00 : f32
    %23 = vector.broadcast %cst_18 : f32 to vector<8x384xf32>
    %24 = arith.addf %23, %22 : vector<8x384xf32>
    %25 = arith.divf %23, %24 : vector<8x384xf32>
    %26 = vector.extract_strided_slice %25 {offsets = [0, 0], sizes = [8, 128], strides = [1, 1]} : vector<8x384xf32> to vector<8x128xf32>
    %27 = vector.extract_strided_slice %25 {offsets = [0, 128], sizes = [8, 128], strides = [1, 1]} : vector<8x384xf32> to vector<8x128xf32>
    %28 = vector.extract_strided_slice %25 {offsets = [0, 256], sizes = [8, 128], strides = [1, 1]} : vector<8x384xf32> to vector<8x128xf32>
    %29 = vector.extract_strided_slice %19 {offsets = [0, 384], sizes = [8, 128], strides = [1, 1]} : vector<8x512xf32> to vector<8x128xf32>
    %30 = math.tanh %29 : vector<8x128xf32>
    %31 = arith.mulf %27, %13 : vector<8x128xf32>
    %32 = arith.mulf %26, %30 : vector<8x128xf32>
    %33 = arith.addf %31, %32 : vector<8x128xf32>
    %34 = math.tanh %33 : vector<8x128xf32>
    %35 = arith.mulf %28, %34 : vector<8x128xf32>
    %36 = arith.index_cast %c0_i32_15 : i32 to index
    %c0_19 = arith.constant 0 : index
    %c0_20 = arith.constant 0 : index
    %37 = vector.load %arg6[%36, %c0_19, %c0_20] : memref<8x8x128xf32, #tpu.memory_space<vmem>>, vector<1x8x128xf32>
    %38 = vector.shape_cast %37 : vector<1x8x128xf32> to vector<8x128xf32>
    %39 = vector.shape_cast %35 : vector<8x128xf32> to vector<1x8x128xf32>
    tpu.vector_store %arg6[%36, %c0_19, %c0_20], %39 {strides = array<i32>} : memref<8x8x128xf32, #tpu.memory_space<vmem>>, vector<1x8x128xf32>,
    %c1_i32 = arith.constant 1 : i32
    %c8_i32_21 = arith.constant 8 : i32
    %40 = arith.muli %c1_i32, %c8_i32_21 : i32
    %41 = tpu.assume_multiple %40, 8 : i32
    %42 = arith.index_cast %41 : i32 to index
    %c0_22 = arith.constant 0 : index
    %43 = vector.load %arg9[%42, %c0_22] : memref<64x512xf32, #tpu.memory_space<vmem>>, vector<8x512xf32>
    %cst_23 = arith.constant dense<0.000000e+00> : vector<8x512xf32>
    %44 = tpu.matmul %35, %11, %cst_23 {dimension_numbers = #tpu.dot_dimension_numbers<[1], [0], [0], [1], [0, 0, 1, 1], [], []>} : vector<8x128xf32>, vector<128x512xf32>, vector<8x512xf32> -> vector<8x512xf32>
    %45 = arith.addf %43, %44 : vector<8x512xf32>
    %46 = vector.extract_strided_slice %45 {offsets = [0, 0], sizes = [8, 384], strides = [1, 1]} : vector<8x512xf32> to vector<8x384xf32>
    %47 = arith.negf %46 : vector<8x384xf32>
    %48 = math.exp %47 : vector<8x384xf32>
    %cst_24 = arith.constant 1.000000e+00 : f32
    %49 = vector.broadcast %cst_24 : f32 to vector<8x384xf32>
    %50 = arith.addf %49, %48 : vector<8x384xf32>
    %51 = arith.divf %49, %50 : vector<8x384xf32>
    %52 = vector.extract_strided_slice %51 {offsets = [0, 0], sizes = [8, 128], strides = [1, 1]} : vector<8x384xf32> to vector<8x128xf32>
    %53 = vector.extract_strided_slice %51 {offsets = [0, 128], sizes = [8, 128], strides = [1, 1]} : vector<8x384xf32> to vector<8x128xf32>
    %54 = vector.extract_strided_slice %51 {offsets = [0, 256], sizes = [8, 128], strides = [1, 1]} : vector<8x384xf32> to vector<8x128xf32>
    %55 = vector.extract_strided_slice %45 {offsets = [0, 384], sizes = [8, 128], strides = [1, 1]} : vector<8x512xf32> to vector<8x128xf32>
    %56 = math.tanh %55 : vector<8x128xf32>
    %57 = arith.mulf %53, %33 : vector<8x128xf32>
    %58 = arith.mulf %52, %56 : vector<8x128xf32>
    %59 = arith.addf %57, %58 : vector<8x128xf32>
    %60 = math.tanh %59 : vector<8x128xf32>
    %61 = arith.mulf %54, %60 : vector<8x128xf32>
    %62 = arith.index_cast %c1_i32 : i32 to index
    %c0_25 = arith.constant 0 : index
    %c0_26 = arith.constant 0 : index
    %63 = vector.load %arg6[%62, %c0_25, %c0_26] : memref<8x8x128xf32, #tpu.memory_space<vmem>>, vector<1x8x128xf32>
    %64 = vector.shape_cast %63 : vector<1x8x128xf32> to vector<8x128xf32>
    %65 = vector.shape_cast %61 : vector<8x128xf32> to vector<1x8x128xf32>
    tpu.vector_store %arg6[%62, %c0_25, %c0_26], %65 {strides = array<i32>} : memref<8x8x128xf32, #tpu.memory_space<vmem>>, vector<1x8x128xf32>,
    %c2_i32 = arith.constant 2 : i32
    %c8_i32_27 = arith.constant 8 : i32
    %66 = arith.muli %c2_i32, %c8_i32_27 : i32
    %67 = tpu.assume_multiple %66, 8 : i32
    %68 = arith.index_cast %67 : i32 to index
    %c0_28 = arith.constant 0 : index
    %69 = vector.load %arg9[%68, %c0_28] : memref<64x512xf32, #tpu.memory_space<vmem>>, vector<8x512xf32>
    %cst_29 = arith.constant dense<0.000000e+00> : vector<8x512xf32>
    %70 = tpu.matmul %61, %11, %cst_29 {dimension_numbers = #tpu.dot_dimension_numbers<[1], [0], [0], [1], [0, 0, 1, 1], [], []>} : vector<8x128xf32>, vector<128x512xf32>, vector<8x512xf32> -> vector<8x512xf32>
    %71 = arith.addf %69, %70 : vector<8x512xf32>
    %72 = vector.extract_strided_slice %71 {offsets = [0, 0], sizes = [8, 384], strides = [1, 1]} : vector<8x512xf32> to vector<8x384xf32>
    %73 = arith.negf %72 : vector<8x384xf32>
    %74 = math.exp %73 : vector<8x384xf32>
    %cst_30 = arith.constant 1.000000e+00 : f32
    %75 = vector.broadcast %cst_30 : f32 to vector<8x384xf32>
    %76 = arith.addf %75, %74 : vector<8x384xf32>
    %77 = arith.divf %75, %76 : vector<8x384xf32>
    %78 = vector.extract_strided_slice %77 {offsets = [0, 0], sizes = [8, 128], strides = [1, 1]} : vector<8x384xf32> to vector<8x128xf32>
    %79 = vector.extract_strided_slice %77 {offsets = [0, 128], sizes = [8, 128], strides = [1, 1]} : vector<8x384xf32> to vector<8x128xf32>
    %80 = vector.extract_strided_slice %77 {offsets = [0, 256], sizes = [8, 128], strides = [1, 1]} : vector<8x384xf32> to vector<8x128xf32>
    %81 = vector.extract_strided_slice %71 {offsets = [0, 384], sizes = [8, 128], strides = [1, 1]} : vector<8x512xf32> to vector<8x128xf32>
    %82 = math.tanh %81 : vector<8x128xf32>
    %83 = arith.mulf %79, %59 : vector<8x128xf32>
    %84 = arith.mulf %78, %82 : vector<8x128xf32>
    %85 = arith.addf %83, %84 : vector<8x128xf32>
    %86 = math.tanh %85 : vector<8x128xf32>
    %87 = arith.mulf %80, %86 : vector<8x128xf32>
    %88 = arith.index_cast %c2_i32 : i32 to index
    %c0_31 = arith.constant 0 : index
    %c0_32 = arith.constant 0 : index
    %89 = vector.load %arg6[%88, %c0_31, %c0_32] : memref<8x8x128xf32, #tpu.memory_space<vmem>>, vector<1x8x128xf32>
    %90 = vector.shape_cast %89 : vector<1x8x128xf32> to vector<8x128xf32>
    %91 = vector.shape_cast %87 : vector<8x128xf32> to vector<1x8x128xf32>
    tpu.vector_store %arg6[%88, %c0_31, %c0_32], %91 {strides = array<i32>} : memref<8x8x128xf32, #tpu.memory_space<vmem>>, vector<1x8x128xf32>,
    %c3_i32 = arith.constant 3 : i32
    %c8_i32_33 = arith.constant 8 : i32
    %92 = arith.muli %c3_i32, %c8_i32_33 : i32
    %93 = tpu.assume_multiple %92, 8 : i32
    %94 = arith.index_cast %93 : i32 to index
    %c0_34 = arith.constant 0 : index
    %95 = vector.load %arg9[%94, %c0_34] : memref<64x512xf32, #tpu.memory_space<vmem>>, vector<8x512xf32>
    %cst_35 = arith.constant dense<0.000000e+00> : vector<8x512xf32>
    %96 = tpu.matmul %87, %11, %cst_35 {dimension_numbers = #tpu.dot_dimension_numbers<[1], [0], [0], [1], [0, 0, 1, 1], [], []>} : vector<8x128xf32>, vector<128x512xf32>, vector<8x512xf32> -> vector<8x512xf32>
    %97 = arith.addf %95, %96 : vector<8x512xf32>
    %98 = vector.extract_strided_slice %97 {offsets = [0, 0], sizes = [8, 384], strides = [1, 1]} : vector<8x512xf32> to vector<8x384xf32>
    %99 = arith.negf %98 : vector<8x384xf32>
    %100 = math.exp %99 : vector<8x384xf32>
    %cst_36 = arith.constant 1.000000e+00 : f32
    %101 = vector.broadcast %cst_36 : f32 to vector<8x384xf32>
    %102 = arith.addf %101, %100 : vector<8x384xf32>
    %103 = arith.divf %101, %102 : vector<8x384xf32>
    %104 = vector.extract_strided_slice %103 {offsets = [0, 0], sizes = [8, 128], strides = [1, 1]} : vector<8x384xf32> to vector<8x128xf32>
    %105 = vector.extract_strided_slice %103 {offsets = [0, 128], sizes = [8, 128], strides = [1, 1]} : vector<8x384xf32> to vector<8x128xf32>
    %106 = vector.extract_strided_slice %103 {offsets = [0, 256], sizes = [8, 128], strides = [1, 1]} : vector<8x384xf32> to vector<8x128xf32>
    %107 = vector.extract_strided_slice %97 {offsets = [0, 384], sizes = [8, 128], strides = [1, 1]} : vector<8x512xf32> to vector<8x128xf32>
    %108 = math.tanh %107 : vector<8x128xf32>
    %109 = arith.mulf %105, %85 : vector<8x128xf32>
    %110 = arith.mulf %104, %108 : vector<8x128xf32>
    %111 = arith.addf %109, %110 : vector<8x128xf32>
    %112 = math.tanh %111 : vector<8x128xf32>
    %113 = arith.mulf %106, %112 : vector<8x128xf32>
    %114 = arith.index_cast %c3_i32 : i32 to index
    %c0_37 = arith.constant 0 : index
    %c0_38 = arith.constant 0 : index
    %115 = vector.load %arg6[%114, %c0_37, %c0_38] : memref<8x8x128xf32, #tpu.memory_space<vmem>>, vector<1x8x128xf32>
    %116 = vector.shape_cast %115 : vector<1x8x128xf32> to vector<8x128xf32>
    %117 = vector.shape_cast %113 : vector<8x128xf32> to vector<1x8x128xf32>
    tpu.vector_store %arg6[%114, %c0_37, %c0_38], %117 {strides = array<i32>} : memref<8x8x128xf32, #tpu.memory_space<vmem>>, vector<1x8x128xf32>,
    %c4_i32 = arith.constant 4 : i32
    %c8_i32_39 = arith.constant 8 : i32
    %118 = arith.muli %c4_i32, %c8_i32_39 : i32
    %119 = tpu.assume_multiple %118, 8 : i32
    %120 = arith.index_cast %119 : i32 to index
    %c0_40 = arith.constant 0 : index
    %121 = vector.load %arg9[%120, %c0_40] : memref<64x512xf32, #tpu.memory_space<vmem>>, vector<8x512xf32>
    %cst_41 = arith.constant dense<0.000000e+00> : vector<8x512xf32>
    %122 = tpu.matmul %113, %11, %cst_41 {dimension_numbers = #tpu.dot_dimension_numbers<[1], [0], [0], [1], [0, 0, 1, 1], [], []>} : vector<8x128xf32>, vector<128x512xf32>, vector<8x512xf32> -> vector<8x512xf32>
    %123 = arith.addf %121, %122 : vector<8x512xf32>
    %124 = vector.extract_strided_slice %123 {offsets = [0, 0], sizes = [8, 384], strides = [1, 1]} : vector<8x512xf32> to vector<8x384xf32>
    %125 = arith.negf %124 : vector<8x384xf32>
    %126 = math.exp %125 : vector<8x384xf32>
    %cst_42 = arith.constant 1.000000e+00 : f32
    %127 = vector.broadcast %cst_42 : f32 to vector<8x384xf32>
    %128 = arith.addf %127, %126 : vector<8x384xf32>
    %129 = arith.divf %127, %128 : vector<8x384xf32>
    %130 = vector.extract_strided_slice %129 {offsets = [0, 0], sizes = [8, 128], strides = [1, 1]} : vector<8x384xf32> to vector<8x128xf32>
    %131 = vector.extract_strided_slice %129 {offsets = [0, 128], sizes = [8, 128], strides = [1, 1]} : vector<8x384xf32> to vector<8x128xf32>
    %132 = vector.extract_strided_slice %129 {offsets = [0, 256], sizes = [8, 128], strides = [1, 1]} : vector<8x384xf32> to vector<8x128xf32>
    %133 = vector.extract_strided_slice %123 {offsets = [0, 384], sizes = [8, 128], strides = [1, 1]} : vector<8x512xf32> to vector<8x128xf32>
    %134 = math.tanh %133 : vector<8x128xf32>
    %135 = arith.mulf %131, %111 : vector<8x128xf32>
    %136 = arith.mulf %130, %134 : vector<8x128xf32>
    %137 = arith.addf %135, %136 : vector<8x128xf32>
    %138 = math.tanh %137 : vector<8x128xf32>
    %139 = arith.mulf %132, %138 : vector<8x128xf32>
    %140 = arith.index_cast %c4_i32 : i32 to index
    %c0_43 = arith.constant 0 : index
    %c0_44 = arith.constant 0 : index
    %141 = vector.load %arg6[%140, %c0_43, %c0_44] : memref<8x8x128xf32, #tpu.memory_space<vmem>>, vector<1x8x128xf32>
    %142 = vector.shape_cast %141 : vector<1x8x128xf32> to vector<8x128xf32>
    %143 = vector.shape_cast %139 : vector<8x128xf32> to vector<1x8x128xf32>
    tpu.vector_store %arg6[%140, %c0_43, %c0_44], %143 {strides = array<i32>} : memref<8x8x128xf32, #tpu.memory_space<vmem>>, vector<1x8x128xf32>,
    %c5_i32 = arith.constant 5 : i32
    %c8_i32_45 = arith.constant 8 : i32
    %144 = arith.muli %c5_i32, %c8_i32_45 : i32
    %145 = tpu.assume_multiple %144, 8 : i32
    %146 = arith.index_cast %145 : i32 to index
    %c0_46 = arith.constant 0 : index
    %147 = vector.load %arg9[%146, %c0_46] : memref<64x512xf32, #tpu.memory_space<vmem>>, vector<8x512xf32>
    %cst_47 = arith.constant dense<0.000000e+00> : vector<8x512xf32>
    %148 = tpu.matmul %139, %11, %cst_47 {dimension_numbers = #tpu.dot_dimension_numbers<[1], [0], [0], [1], [0, 0, 1, 1], [], []>} : vector<8x128xf32>, vector<128x512xf32>, vector<8x512xf32> -> vector<8x512xf32>
    %149 = arith.addf %147, %148 : vector<8x512xf32>
    %150 = vector.extract_strided_slice %149 {offsets = [0, 0], sizes = [8, 384], strides = [1, 1]} : vector<8x512xf32> to vector<8x384xf32>
    %151 = arith.negf %150 : vector<8x384xf32>
    %152 = math.exp %151 : vector<8x384xf32>
    %cst_48 = arith.constant 1.000000e+00 : f32
    %153 = vector.broadcast %cst_48 : f32 to vector<8x384xf32>
    %154 = arith.addf %153, %152 : vector<8x384xf32>
    %155 = arith.divf %153, %154 : vector<8x384xf32>
    %156 = vector.extract_strided_slice %155 {offsets = [0, 0], sizes = [8, 128], strides = [1, 1]} : vector<8x384xf32> to vector<8x128xf32>
    %157 = vector.extract_strided_slice %155 {offsets = [0, 128], sizes = [8, 128], strides = [1, 1]} : vector<8x384xf32> to vector<8x128xf32>
    %158 = vector.extract_strided_slice %155 {offsets = [0, 256], sizes = [8, 128], strides = [1, 1]} : vector<8x384xf32> to vector<8x128xf32>
    %159 = vector.extract_strided_slice %149 {offsets = [0, 384], sizes = [8, 128], strides = [1, 1]} : vector<8x512xf32> to vector<8x128xf32>
    %160 = math.tanh %159 : vector<8x128xf32>
    %161 = arith.mulf %157, %137 : vector<8x128xf32>
    %162 = arith.mulf %156, %160 : vector<8x128xf32>
    %163 = arith.addf %161, %162 : vector<8x128xf32>
    %164 = math.tanh %163 : vector<8x128xf32>
    %165 = arith.mulf %158, %164 : vector<8x128xf32>
    %166 = arith.index_cast %c5_i32 : i32 to index
    %c0_49 = arith.constant 0 : index
    %c0_50 = arith.constant 0 : index
    %167 = vector.load %arg6[%166, %c0_49, %c0_50] : memref<8x8x128xf32, #tpu.memory_space<vmem>>, vector<1x8x128xf32>
    %168 = vector.shape_cast %167 : vector<1x8x128xf32> to vector<8x128xf32>
    %169 = vector.shape_cast %165 : vector<8x128xf32> to vector<1x8x128xf32>
    tpu.vector_store %arg6[%166, %c0_49, %c0_50], %169 {strides = array<i32>} : memref<8x8x128xf32, #tpu.memory_space<vmem>>, vector<1x8x128xf32>,
    %c6_i32 = arith.constant 6 : i32
    %c8_i32_51 = arith.constant 8 : i32
    %170 = arith.muli %c6_i32, %c8_i32_51 : i32
    %171 = tpu.assume_multiple %170, 8 : i32
    %172 = arith.index_cast %171 : i32 to index
    %c0_52 = arith.constant 0 : index
    %173 = vector.load %arg9[%172, %c0_52] : memref<64x512xf32, #tpu.memory_space<vmem>>, vector<8x512xf32>
    %cst_53 = arith.constant dense<0.000000e+00> : vector<8x512xf32>
    %174 = tpu.matmul %165, %11, %cst_53 {dimension_numbers = #tpu.dot_dimension_numbers<[1], [0], [0], [1], [0, 0, 1, 1], [], []>} : vector<8x128xf32>, vector<128x512xf32>, vector<8x512xf32> -> vector<8x512xf32>
    %175 = arith.addf %173, %174 : vector<8x512xf32>
    %176 = vector.extract_strided_slice %175 {offsets = [0, 0], sizes = [8, 384], strides = [1, 1]} : vector<8x512xf32> to vector<8x384xf32>
    %177 = arith.negf %176 : vector<8x384xf32>
    %178 = math.exp %177 : vector<8x384xf32>
    %cst_54 = arith.constant 1.000000e+00 : f32
    %179 = vector.broadcast %cst_54 : f32 to vector<8x384xf32>
    %180 = arith.addf %179, %178 : vector<8x384xf32>
    %181 = arith.divf %179, %180 : vector<8x384xf32>
    %182 = vector.extract_strided_slice %181 {offsets = [0, 0], sizes = [8, 128], strides = [1, 1]} : vector<8x384xf32> to vector<8x128xf32>
    %183 = vector.extract_strided_slice %181 {offsets = [0, 128], sizes = [8, 128], strides = [1, 1]} : vector<8x384xf32> to vector<8x128xf32>
    %184 = vector.extract_strided_slice %181 {offsets = [0, 256], sizes = [8, 128], strides = [1, 1]} : vector<8x384xf32> to vector<8x128xf32>
    %185 = vector.extract_strided_slice %175 {offsets = [0, 384], sizes = [8, 128], strides = [1, 1]} : vector<8x512xf32> to vector<8x128xf32>
    %186 = math.tanh %185 : vector<8x128xf32>
    %187 = arith.mulf %183, %163 : vector<8x128xf32>
    %188 = arith.mulf %182, %186 : vector<8x128xf32>
    %189 = arith.addf %187, %188 : vector<8x128xf32>
    %190 = math.tanh %189 : vector<8x128xf32>
    %191 = arith.mulf %184, %190 : vector<8x128xf32>
    %192 = arith.index_cast %c6_i32 : i32 to index
    %c0_55 = arith.constant 0 : index
    %c0_56 = arith.constant 0 : index
    %193 = vector.load %arg6[%192, %c0_55, %c0_56] : memref<8x8x128xf32, #tpu.memory_space<vmem>>, vector<1x8x128xf32>
    %194 = vector.shape_cast %193 : vector<1x8x128xf32> to vector<8x128xf32>
    %195 = vector.shape_cast %191 : vector<8x128xf32> to vector<1x8x128xf32>
    tpu.vector_store %arg6[%192, %c0_55, %c0_56], %195 {strides = array<i32>} : memref<8x8x128xf32, #tpu.memory_space<vmem>>, vector<1x8x128xf32>,
    %c7_i32 = arith.constant 7 : i32
    %c8_i32_57 = arith.constant 8 : i32
    %196 = arith.muli %c7_i32, %c8_i32_57 : i32
    %197 = tpu.assume_multiple %196, 8 : i32
    %198 = arith.index_cast %197 : i32 to index
    %c0_58 = arith.constant 0 : index
    %199 = vector.load %arg9[%198, %c0_58] : memref<64x512xf32, #tpu.memory_space<vmem>>, vector<8x512xf32>
    %cst_59 = arith.constant dense<0.000000e+00> : vector<8x512xf32>
    %200 = tpu.matmul %191, %11, %cst_59 {dimension_numbers = #tpu.dot_dimension_numbers<[1], [0], [0], [1], [0, 0, 1, 1], [], []>} : vector<8x128xf32>, vector<128x512xf32>, vector<8x512xf32> -> vector<8x512xf32>
    %201 = arith.addf %199, %200 : vector<8x512xf32>
    %202 = vector.extract_strided_slice %201 {offsets = [0, 0], sizes = [8, 384], strides = [1, 1]} : vector<8x512xf32> to vector<8x384xf32>
    %203 = arith.negf %202 : vector<8x384xf32>
    %204 = math.exp %203 : vector<8x384xf32>
    %cst_60 = arith.constant 1.000000e+00 : f32
    %205 = vector.broadcast %cst_60 : f32 to vector<8x384xf32>
    %206 = arith.addf %205, %204 : vector<8x384xf32>
    %207 = arith.divf %205, %206 : vector<8x384xf32>
    %208 = vector.extract_strided_slice %207 {offsets = [0, 0], sizes = [8, 128], strides = [1, 1]} : vector<8x384xf32> to vector<8x128xf32>
    %209 = vector.extract_strided_slice %207 {offsets = [0, 128], sizes = [8, 128], strides = [1, 1]} : vector<8x384xf32> to vector<8x128xf32>
    %210 = vector.extract_strided_slice %207 {offsets = [0, 256], sizes = [8, 128], strides = [1, 1]} : vector<8x384xf32> to vector<8x128xf32>
    %211 = vector.extract_strided_slice %201 {offsets = [0, 384], sizes = [8, 128], strides = [1, 1]} : vector<8x512xf32> to vector<8x128xf32>
    %212 = math.tanh %211 : vector<8x128xf32>
    %213 = arith.mulf %209, %189 : vector<8x128xf32>
    %214 = arith.mulf %208, %212 : vector<8x128xf32>
    %215 = arith.addf %213, %214 : vector<8x128xf32>
    %216 = math.tanh %215 : vector<8x128xf32>
    %217 = arith.mulf %210, %216 : vector<8x128xf32>
    %218 = arith.index_cast %c7_i32 : i32 to index
    %c0_61 = arith.constant 0 : index
    %c0_62 = arith.constant 0 : index
    %219 = vector.load %arg6[%218, %c0_61, %c0_62] : memref<8x8x128xf32, #tpu.memory_space<vmem>>, vector<1x8x128xf32>
    %220 = vector.shape_cast %219 : vector<1x8x128xf32> to vector<8x128xf32>
    %221 = vector.shape_cast %217 : vector<8x128xf32> to vector<1x8x128xf32>
    tpu.vector_store %arg6[%218, %c0_61, %c0_62], %221 {strides = array<i32>} : memref<8x8x128xf32, #tpu.memory_space<vmem>>, vector<1x8x128xf32>,
    %c8_i32_63 = arith.constant 8 : i32
    %c0_64 = arith.constant 0 : index
    %c0_65 = arith.constant 0 : index
    %222 = vector.load %arg7[%c0_64, %c0_65] : memref<8x128xf32, #tpu.memory_space<vmem>>, vector<8x128xf32>
    tpu.vector_store %arg7[%c0_64, %c0_65], %217 {strides = array<i32>} : memref<8x128xf32, #tpu.memory_space<vmem>>, vector<8x128xf32>,
    %c0_66 = arith.constant 0 : index
    %c0_67 = arith.constant 0 : index
    %223 = vector.load %arg8[%c0_66, %c0_67] : memref<8x128xf32, #tpu.memory_space<vmem>>, vector<8x128xf32>
    tpu.vector_store %arg8[%c0_66, %c0_67], %215 {strides = array<i32>} : memref<8x128xf32, #tpu.memory_space<vmem>>, vector<8x128xf32>,
    return
  }
  func.func @transform_0(%arg0: i32, %arg1: i32) -> (i32, i32, i32) {
    %c0_i32 = arith.constant 0 : i32
    %c0_i32_0 = arith.constant 0 : i32
    return %arg1, %arg0, %c0_i32 : i32, i32, i32
  }
  func.func @transform_1(%arg0: i32, %arg1: i32) -> (i32, i32) {
    %c0_i32 = arith.constant 0 : i32
    %c0_i32_0 = arith.constant 0 : i32
    %c0_i32_1 = arith.constant 0 : i32
    return %c0_i32, %c0_i32_0 : i32, i32
  }
  func.func @transform_2(%arg0: i32, %arg1: i32) -> (i32, i32) {
    %c0_i32 = arith.constant 0 : i32
    %c0_i32_0 = arith.constant 0 : i32
    %c0_i32_1 = arith.constant 0 : i32
    return %c0_i32, %c0_i32_0 : i32, i32
  }
  func.func @transform_3(%arg0: i32, %arg1: i32) -> (i32, i32) {
    %c0_i32 = arith.constant 0 : i32
    %c0_i32_0 = arith.constant 0 : i32
    %c0_i32_1 = arith.constant 0 : i32
    return %c0_i32, %c0_i32_0 : i32, i32
  }
  func.func @transform_4(%arg0: i32, %arg1: i32) -> (i32, i32, i32) {
    %c0_i32 = arith.constant 0 : i32
    %c0_i32_0 = arith.constant 0 : i32
    return %arg1, %arg0, %c0_i32 : i32, i32, i32
  }
}

module attributes {stable_mosaic.version = 11 : i64} {
  func.func @lstm_layer_kernel(%arg0: i32, %arg1: i32, %arg2: memref<8x8x128xf32, #tpu.memory_space<vmem>>, %arg3: memref<128x512xf32, #tpu.memory_space<vmem>>, %arg4: memref<128x512xf32, #tpu.memory_space<vmem>>, %arg5: memref<1x512xf32, #tpu.memory_space<vmem>>, %arg6: memref<8x8x128xf32, #tpu.memory_space<vmem>>, %arg7: memref<8x128xf32, #tpu.memory_space<vmem>>, %arg8: memref<8x128xf32, #tpu.memory_space<vmem>>, %arg9: memref<64x512xf32, #tpu.memory_space<vmem>>) attributes {dimension_semantics = [#tpu.dimension_semantics<parallel>, #tpu.dimension_semantics<arbitrary>], iteration_bounds = array<i64: 1, 2>, scalar_prefetch = 0 : i64, scratch_operands = 3 : i64, tpu.core_type = #tpu.core_type<tc>, window_params = [{transform_indices = @transform_0, window_bounds = array<i64: 8, 8, 128>}, {pipeline_mode = #tpu.pipeline_mode<synchronous>, transform_indices = @transform_1, window_bounds = array<i64: 128, 512>}, {pipeline_mode = #tpu.pipeline_mode<synchronous>, transform_indices = @transform_2, window_bounds = array<i64: 128, 512>}, {pipeline_mode = #tpu.pipeline_mode<synchronous>, transform_indices = @transform_3, window_bounds = array<i64: 1, 512>}, {transform_indices = @transform_4, window_bounds = array<i64: 8, 8, 128>}]} {
    %c0_i32 = arith.constant 0 : i32
    %0 = arith.cmpi eq, %arg1, %c0_i32 : i32
    %1 = arith.extui %0 : i1 to i32
    %c0_i32_0 = arith.constant 0 : i32
    %2 = arith.cmpi ne, %1, %c0_i32_0 : i32
    scf.if %2 {
      %cst_68 = arith.constant 0.000000e+00 : f32
      %224 = vector.broadcast %cst_68 : f32 to vector<8x128xf32>
      %c0_69 = arith.constant 0 : index
      %c0_70 = arith.constant 0 : index
      %225 = vector.load %arg7[%c0_69, %c0_70] : memref<8x128xf32, #tpu.memory_space<vmem>>, vector<8x128xf32>
      tpu.vector_store %arg7[%c0_69, %c0_70], %224 {strides = array<i32>} : memref<8x128xf32, #tpu.memory_space<vmem>>, vector<8x128xf32>,
      %cst_71 = arith.constant 0.000000e+00 : f32
      %226 = vector.broadcast %cst_71 : f32 to vector<8x128xf32>
      %c0_72 = arith.constant 0 : index
      %c0_73 = arith.constant 0 : index
      %227 = vector.load %arg8[%c0_72, %c0_73] : memref<8x128xf32, #tpu.memory_space<vmem>>, vector<8x128xf32>
      tpu.vector_store %arg8[%c0_72, %c0_73], %226 {strides = array<i32>} : memref<8x128xf32, #tpu.memory_space<vmem>>, vector<8x128xf32>,
    } else {
    }
    %c0 = arith.constant 0 : index
    %c0_1 = arith.constant 0 : index
    %c0_2 = arith.constant 0 : index
    %3 = vector.load %arg2[%c0, %c0_1, %c0_2] : memref<8x8x128xf32, #tpu.memory_space<vmem>>, vector<8x8x128xf32>
    %4 = vector.shape_cast %3 : vector<8x8x128xf32> to vector<64x128xf32>
    %c0_3 = arith.constant 0 : index
    %c0_4 = arith.constant 0 : index
    %5 = vector.load %arg3[%c0_3, %c0_4] : memref<128x512xf32, #tpu.memory_space<vmem>>, vector<128x512xf32>
    %cst = arith.constant dense<0.000000e+00> : vector<64x512xf32>
    %6 = tpu.matmul %4, %5, %cst {dimension_numbers = #tpu.dot_dimension_numbers<[1], [0], [0], [1], [0, 0, 1, 1], [], []>} : vector<64x128xf32>, vector<128x512xf32>, vector<64x512xf32> -> vector<64x512xf32>
    %c0_5 = arith.constant 0 : index
    %c0_6 = arith.constant 0 : index
    %7 = vector.load %arg5[%c0_5, %c0_6] : memref<1x512xf32, #tpu.memory_space<vmem>>, vector<1x512xf32>
    %8 = vector.broadcast %7 : vector<1x512xf32> to vector<64x512xf32>
    %9 = arith.addf %6, %8 : vector<64x512xf32>
    %c0_7 = arith.constant 0 : index
    %c0_8 = arith.constant 0 : index
    %10 = vector.load %arg9[%c0_7, %c0_8] : memref<64x512xf32, #tpu.memory_space<vmem>>, vector<64x512xf32>
    tpu.vector_store %arg9[%c0_7, %c0_8], %9 {strides = array<i32>} : memref<64x512xf32, #tpu.memory_space<vmem>>, vector<64x512xf32>,
    %c0_9 = arith.constant 0 : index
    %c0_10 = arith.constant 0 : index
    %11 = vector.load %arg4[%c0_9, %c0_10] : memref<128x512xf32, #tpu.memory_space<vmem>>, vector<128x512xf32>
    %c0_11 = arith.constant 0 : index
    %c0_12 = arith.constant 0 : index
    %12 = vector.load %arg7[%c0_11, %c0_12] : memref<8x128xf32, #tpu.memory_space<vmem>>, vector<8x128xf32>
    %c0_13 = arith.constant 0 : index
    %c0_14 = arith.constant 0 : index
    %13 = vector.load %arg8[%c0_13, %c0_14] : memref<8x128xf32, #tpu.memory_space<vmem>>, vector<8x128xf32>
    %c0_i32_15 = arith.constant 0 : i32
    %c8_i32 = arith.constant 8 : i32
    %14 = arith.muli %c0_i32_15, %c8_i32 : i32
    %15 = tpu.assume_multiple %14, 8 : i32
    %16 = arith.index_cast %15 : i32 to index
    %c0_16 = arith.constant 0 : index
    %17 = vector.load %arg9[%16, %c0_16] : memref<64x512xf32, #tpu.memory_space<vmem>>, vector<8x512xf32>
    %cst_17 = arith.constant dense<0.000000e+00> : vector<8x512xf32>
    %18 = tpu.matmul %12, %11, %cst_17 {dimension_numbers = #tpu.dot_dimension_numbers<[1], [0], [0], [1], [0, 0, 1, 1], [], []>} : vector<8x128xf32>, vector<128x512xf32>, vector<8x512xf32> -> vector<8x512xf32>
    %19 = arith.addf %17, %18 : vector<8x512xf32>
    %20 = vector.extract_strided_slice %19 {offsets = [0, 0], sizes = [8, 384], strides = [1, 1]} : vector<8x512xf32> to vector<8x384xf32>
    %21 = arith.negf %20 : vector<8x384xf32>
    %22 = math.exp %21 : vector<8x384xf32>
    %cst_18 = arith.constant 1.000000e+00 : f32
    %23 = vector.broadcast %cst_18 : f32 to vector<8x384xf32>
    %24 = arith.addf %23, %22 : vector<8x384xf32>
    %25 = arith.divf %23, %24 : vector<8x384xf32>
    %26 = vector.extract_strided_slice %25 {offsets = [0, 0], sizes = [8, 128], strides = [1, 1]} : vector<8x384xf32> to vector<8x128xf32>
    %27 = vector.extract_strided_slice %25 {offsets = [0, 128], sizes = [8, 128], strides = [1, 1]} : vector<8x384xf32> to vector<8x128xf32>
    %28 = vector.extract_strided_slice %25 {offsets = [0, 256], sizes = [8, 128], strides = [1, 1]} : vector<8x384xf32> to vector<8x128xf32>
    %29 = vector.extract_strided_slice %19 {offsets = [0, 384], sizes = [8, 128], strides = [1, 1]} : vector<8x512xf32> to vector<8x128xf32>
    %30 = math.tanh %29 : vector<8x128xf32>
    %31 = arith.mulf %27, %13 : vector<8x128xf32>
    %32 = arith.mulf %26, %30 : vector<8x128xf32>
    %33 = arith.addf %31, %32 : vector<8x128xf32>
    %34 = math.tanh %33 : vector<8x128xf32>
    %35 = arith.mulf %28, %34 : vector<8x128xf32>
    %36 = arith.index_cast %c0_i32_15 : i32 to index
    %c0_19 = arith.constant 0 : index
    %c0_20 = arith.constant 0 : index
    %37 = vector.load %arg6[%36, %c0_19, %c0_20] : memref<8x8x128xf32, #tpu.memory_space<vmem>>, vector<1x8x128xf32>
    %38 = vector.shape_cast %37 : vector<1x8x128xf32> to vector<8x128xf32>
    %39 = vector.shape_cast %35 : vector<8x128xf32> to vector<1x8x128xf32>
    tpu.vector_store %arg6[%36, %c0_19, %c0_20], %39 {strides = array<i32>} : memref<8x8x128xf32, #tpu.memory_space<vmem>>, vector<1x8x128xf32>,
    %c1_i32 = arith.constant 1 : i32
    %c8_i32_21 = arith.constant 8 : i32
    %40 = arith.muli %c1_i32, %c8_i32_21 : i32
    %41 = tpu.assume_multiple %40, 8 : i32
    %42 = arith.index_cast %41 : i32 to index
    %c0_22 = arith.constant 0 : index
    %43 = vector.load %arg9[%42, %c0_22] : memref<64x512xf32, #tpu.memory_space<vmem>>, vector<8x512xf32>
    %cst_23 = arith.constant dense<0.000000e+00> : vector<8x512xf32>
    %44 = tpu.matmul %35, %11, %cst_23 {dimension_numbers = #tpu.dot_dimension_numbers<[1], [0], [0], [1], [0, 0, 1, 1], [], []>} : vector<8x128xf32>, vector<128x512xf32>, vector<8x512xf32> -> vector<8x512xf32>
    %45 = arith.addf %43, %44 : vector<8x512xf32>
    %46 = vector.extract_strided_slice %45 {offsets = [0, 0], sizes = [8, 384], strides = [1, 1]} : vector<8x512xf32> to vector<8x384xf32>
    %47 = arith.negf %46 : vector<8x384xf32>
    %48 = math.exp %47 : vector<8x384xf32>
    %cst_24 = arith.constant 1.000000e+00 : f32
    %49 = vector.broadcast %cst_24 : f32 to vector<8x384xf32>
    %50 = arith.addf %49, %48 : vector<8x384xf32>
    %51 = arith.divf %49, %50 : vector<8x384xf32>
    %52 = vector.extract_strided_slice %51 {offsets = [0, 0], sizes = [8, 128], strides = [1, 1]} : vector<8x384xf32> to vector<8x128xf32>
    %53 = vector.extract_strided_slice %51 {offsets = [0, 128], sizes = [8, 128], strides = [1, 1]} : vector<8x384xf32> to vector<8x128xf32>
    %54 = vector.extract_strided_slice %51 {offsets = [0, 256], sizes = [8, 128], strides = [1, 1]} : vector<8x384xf32> to vector<8x128xf32>
    %55 = vector.extract_strided_slice %45 {offsets = [0, 384], sizes = [8, 128], strides = [1, 1]} : vector<8x512xf32> to vector<8x128xf32>
    %56 = math.tanh %55 : vector<8x128xf32>
    %57 = arith.mulf %53, %33 : vector<8x128xf32>
    %58 = arith.mulf %52, %56 : vector<8x128xf32>
    %59 = arith.addf %57, %58 : vector<8x128xf32>
    %60 = math.tanh %59 : vector<8x128xf32>
    %61 = arith.mulf %54, %60 : vector<8x128xf32>
    %62 = arith.index_cast %c1_i32 : i32 to index
    %c0_25 = arith.constant 0 : index
    %c0_26 = arith.constant 0 : index
    %63 = vector.load %arg6[%62, %c0_25, %c0_26] : memref<8x8x128xf32, #tpu.memory_space<vmem>>, vector<1x8x128xf32>
    %64 = vector.shape_cast %63 : vector<1x8x128xf32> to vector<8x128xf32>
    %65 = vector.shape_cast %61 : vector<8x128xf32> to vector<1x8x128xf32>
    tpu.vector_store %arg6[%62, %c0_25, %c0_26], %65 {strides = array<i32>} : memref<8x8x128xf32, #tpu.memory_space<vmem>>, vector<1x8x128xf32>,
    %c2_i32 = arith.constant 2 : i32
    %c8_i32_27 = arith.constant 8 : i32
    %66 = arith.muli %c2_i32, %c8_i32_27 : i32
    %67 = tpu.assume_multiple %66, 8 : i32
    %68 = arith.index_cast %67 : i32 to index
    %c0_28 = arith.constant 0 : index
    %69 = vector.load %arg9[%68, %c0_28] : memref<64x512xf32, #tpu.memory_space<vmem>>, vector<8x512xf32>
    %cst_29 = arith.constant dense<0.000000e+00> : vector<8x512xf32>
    %70 = tpu.matmul %61, %11, %cst_29 {dimension_numbers = #tpu.dot_dimension_numbers<[1], [0], [0], [1], [0, 0, 1, 1], [], []>} : vector<8x128xf32>, vector<128x512xf32>, vector<8x512xf32> -> vector<8x512xf32>
    %71 = arith.addf %69, %70 : vector<8x512xf32>
    %72 = vector.extract_strided_slice %71 {offsets = [0, 0], sizes = [8, 384], strides = [1, 1]} : vector<8x512xf32> to vector<8x384xf32>
    %73 = arith.negf %72 : vector<8x384xf32>
    %74 = math.exp %73 : vector<8x384xf32>
    %cst_30 = arith.constant 1.000000e+00 : f32
    %75 = vector.broadcast %cst_30 : f32 to vector<8x384xf32>
    %76 = arith.addf %75, %74 : vector<8x384xf32>
    %77 = arith.divf %75, %76 : vector<8x384xf32>
    %78 = vector.extract_strided_slice %77 {offsets = [0, 0], sizes = [8, 128], strides = [1, 1]} : vector<8x384xf32> to vector<8x128xf32>
    %79 = vector.extract_strided_slice %77 {offsets = [0, 128], sizes = [8, 128], strides = [1, 1]} : vector<8x384xf32> to vector<8x128xf32>
    %80 = vector.extract_strided_slice %77 {offsets = [0, 256], sizes = [8, 128], strides = [1, 1]} : vector<8x384xf32> to vector<8x128xf32>
    %81 = vector.extract_strided_slice %71 {offsets = [0, 384], sizes = [8, 128], strides = [1, 1]} : vector<8x512xf32> to vector<8x128xf32>
    %82 = math.tanh %81 : vector<8x128xf32>
    %83 = arith.mulf %79, %59 : vector<8x128xf32>
    %84 = arith.mulf %78, %82 : vector<8x128xf32>
    %85 = arith.addf %83, %84 : vector<8x128xf32>
    %86 = math.tanh %85 : vector<8x128xf32>
    %87 = arith.mulf %80, %86 : vector<8x128xf32>
    %88 = arith.index_cast %c2_i32 : i32 to index
    %c0_31 = arith.constant 0 : index
    %c0_32 = arith.constant 0 : index
    %89 = vector.load %arg6[%88, %c0_31, %c0_32] : memref<8x8x128xf32, #tpu.memory_space<vmem>>, vector<1x8x128xf32>
    %90 = vector.shape_cast %89 : vector<1x8x128xf32> to vector<8x128xf32>
    %91 = vector.shape_cast %87 : vector<8x128xf32> to vector<1x8x128xf32>
    tpu.vector_store %arg6[%88, %c0_31, %c0_32], %91 {strides = array<i32>} : memref<8x8x128xf32, #tpu.memory_space<vmem>>, vector<1x8x128xf32>,
    %c3_i32 = arith.constant 3 : i32
    %c8_i32_33 = arith.constant 8 : i32
    %92 = arith.muli %c3_i32, %c8_i32_33 : i32
    %93 = tpu.assume_multiple %92, 8 : i32
    %94 = arith.index_cast %93 : i32 to index
    %c0_34 = arith.constant 0 : index
    %95 = vector.load %arg9[%94, %c0_34] : memref<64x512xf32, #tpu.memory_space<vmem>>, vector<8x512xf32>
    %cst_35 = arith.constant dense<0.000000e+00> : vector<8x512xf32>
    %96 = tpu.matmul %87, %11, %cst_35 {dimension_numbers = #tpu.dot_dimension_numbers<[1], [0], [0], [1], [0, 0, 1, 1], [], []>} : vector<8x128xf32>, vector<128x512xf32>, vector<8x512xf32> -> vector<8x512xf32>
    %97 = arith.addf %95, %96 : vector<8x512xf32>
    %98 = vector.extract_strided_slice %97 {offsets = [0, 0], sizes = [8, 384], strides = [1, 1]} : vector<8x512xf32> to vector<8x384xf32>
    %99 = arith.negf %98 : vector<8x384xf32>
    %100 = math.exp %99 : vector<8x384xf32>
    %cst_36 = arith.constant 1.000000e+00 : f32
    %101 = vector.broadcast %cst_36 : f32 to vector<8x384xf32>
    %102 = arith.addf %101, %100 : vector<8x384xf32>
    %103 = arith.divf %101, %102 : vector<8x384xf32>
    %104 = vector.extract_strided_slice %103 {offsets = [0, 0], sizes = [8, 128], strides = [1, 1]} : vector<8x384xf32> to vector<8x128xf32>
    %105 = vector.extract_strided_slice %103 {offsets = [0, 128], sizes = [8, 128], strides = [1, 1]} : vector<8x384xf32> to vector<8x128xf32>
    %106 = vector.extract_strided_slice %103 {offsets = [0, 256], sizes = [8, 128], strides = [1, 1]} : vector<8x384xf32> to vector<8x128xf32>
    %107 = vector.extract_strided_slice %97 {offsets = [0, 384], sizes = [8, 128], strides = [1, 1]} : vector<8x512xf32> to vector<8x128xf32>
    %108 = math.tanh %107 : vector<8x128xf32>
    %109 = arith.mulf %105, %85 : vector<8x128xf32>
    %110 = arith.mulf %104, %108 : vector<8x128xf32>
    %111 = arith.addf %109, %110 : vector<8x128xf32>
    %112 = math.tanh %111 : vector<8x128xf32>
    %113 = arith.mulf %106, %112 : vector<8x128xf32>
    %114 = arith.index_cast %c3_i32 : i32 to index
    %c0_37 = arith.constant 0 : index
    %c0_38 = arith.constant 0 : index
    %115 = vector.load %arg6[%114, %c0_37, %c0_38] : memref<8x8x128xf32, #tpu.memory_space<vmem>>, vector<1x8x128xf32>
    %116 = vector.shape_cast %115 : vector<1x8x128xf32> to vector<8x128xf32>
    %117 = vector.shape_cast %113 : vector<8x128xf32> to vector<1x8x128xf32>
    tpu.vector_store %arg6[%114, %c0_37, %c0_38], %117 {strides = array<i32>} : memref<8x8x128xf32, #tpu.memory_space<vmem>>, vector<1x8x128xf32>,
    %c4_i32 = arith.constant 4 : i32
    %c8_i32_39 = arith.constant 8 : i32
    %118 = arith.muli %c4_i32, %c8_i32_39 : i32
    %119 = tpu.assume_multiple %118, 8 : i32
    %120 = arith.index_cast %119 : i32 to index
    %c0_40 = arith.constant 0 : index
    %121 = vector.load %arg9[%120, %c0_40] : memref<64x512xf32, #tpu.memory_space<vmem>>, vector<8x512xf32>
    %cst_41 = arith.constant dense<0.000000e+00> : vector<8x512xf32>
    %122 = tpu.matmul %113, %11, %cst_41 {dimension_numbers = #tpu.dot_dimension_numbers<[1], [0], [0], [1], [0, 0, 1, 1], [], []>} : vector<8x128xf32>, vector<128x512xf32>, vector<8x512xf32> -> vector<8x512xf32>
    %123 = arith.addf %121, %122 : vector<8x512xf32>
    %124 = vector.extract_strided_slice %123 {offsets = [0, 0], sizes = [8, 384], strides = [1, 1]} : vector<8x512xf32> to vector<8x384xf32>
    %125 = arith.negf %124 : vector<8x384xf32>
    %126 = math.exp %125 : vector<8x384xf32>
    %cst_42 = arith.constant 1.000000e+00 : f32
    %127 = vector.broadcast %cst_42 : f32 to vector<8x384xf32>
    %128 = arith.addf %127, %126 : vector<8x384xf32>
    %129 = arith.divf %127, %128 : vector<8x384xf32>
    %130 = vector.extract_strided_slice %129 {offsets = [0, 0], sizes = [8, 128], strides = [1, 1]} : vector<8x384xf32> to vector<8x128xf32>
    %131 = vector.extract_strided_slice %129 {offsets = [0, 128], sizes = [8, 128], strides = [1, 1]} : vector<8x384xf32> to vector<8x128xf32>
    %132 = vector.extract_strided_slice %129 {offsets = [0, 256], sizes = [8, 128], strides = [1, 1]} : vector<8x384xf32> to vector<8x128xf32>
    %133 = vector.extract_strided_slice %123 {offsets = [0, 384], sizes = [8, 128], strides = [1, 1]} : vector<8x512xf32> to vector<8x128xf32>
    %134 = math.tanh %133 : vector<8x128xf32>
    %135 = arith.mulf %131, %111 : vector<8x128xf32>
    %136 = arith.mulf %130, %134 : vector<8x128xf32>
    %137 = arith.addf %135, %136 : vector<8x128xf32>
    %138 = math.tanh %137 : vector<8x128xf32>
    %139 = arith.mulf %132, %138 : vector<8x128xf32>
    %140 = arith.index_cast %c4_i32 : i32 to index
    %c0_43 = arith.constant 0 : index
    %c0_44 = arith.constant 0 : index
    %141 = vector.load %arg6[%140, %c0_43, %c0_44] : memref<8x8x128xf32, #tpu.memory_space<vmem>>, vector<1x8x128xf32>
    %142 = vector.shape_cast %141 : vector<1x8x128xf32> to vector<8x128xf32>
    %143 = vector.shape_cast %139 : vector<8x128xf32> to vector<1x8x128xf32>
    tpu.vector_store %arg6[%140, %c0_43, %c0_44], %143 {strides = array<i32>} : memref<8x8x128xf32, #tpu.memory_space<vmem>>, vector<1x8x128xf32>,
    %c5_i32 = arith.constant 5 : i32
    %c8_i32_45 = arith.constant 8 : i32
    %144 = arith.muli %c5_i32, %c8_i32_45 : i32
    %145 = tpu.assume_multiple %144, 8 : i32
    %146 = arith.index_cast %145 : i32 to index
    %c0_46 = arith.constant 0 : index
    %147 = vector.load %arg9[%146, %c0_46] : memref<64x512xf32, #tpu.memory_space<vmem>>, vector<8x512xf32>
    %cst_47 = arith.constant dense<0.000000e+00> : vector<8x512xf32>
    %148 = tpu.matmul %139, %11, %cst_47 {dimension_numbers = #tpu.dot_dimension_numbers<[1], [0], [0], [1], [0, 0, 1, 1], [], []>} : vector<8x128xf32>, vector<128x512xf32>, vector<8x512xf32> -> vector<8x512xf32>
    %149 = arith.addf %147, %148 : vector<8x512xf32>
    %150 = vector.extract_strided_slice %149 {offsets = [0, 0], sizes = [8, 384], strides = [1, 1]} : vector<8x512xf32> to vector<8x384xf32>
    %151 = arith.negf %150 : vector<8x384xf32>
    %152 = math.exp %151 : vector<8x384xf32>
    %cst_48 = arith.constant 1.000000e+00 : f32
    %153 = vector.broadcast %cst_48 : f32 to vector<8x384xf32>
    %154 = arith.addf %153, %152 : vector<8x384xf32>
    %155 = arith.divf %153, %154 : vector<8x384xf32>
    %156 = vector.extract_strided_slice %155 {offsets = [0, 0], sizes = [8, 128], strides = [1, 1]} : vector<8x384xf32> to vector<8x128xf32>
    %157 = vector.extract_strided_slice %155 {offsets = [0, 128], sizes = [8, 128], strides = [1, 1]} : vector<8x384xf32> to vector<8x128xf32>
    %158 = vector.extract_strided_slice %155 {offsets = [0, 256], sizes = [8, 128], strides = [1, 1]} : vector<8x384xf32> to vector<8x128xf32>
    %159 = vector.extract_strided_slice %149 {offsets = [0, 384], sizes = [8, 128], strides = [1, 1]} : vector<8x512xf32> to vector<8x128xf32>
    %160 = math.tanh %159 : vector<8x128xf32>
    %161 = arith.mulf %157, %137 : vector<8x128xf32>
    %162 = arith.mulf %156, %160 : vector<8x128xf32>
    %163 = arith.addf %161, %162 : vector<8x128xf32>
    %164 = math.tanh %163 : vector<8x128xf32>
    %165 = arith.mulf %158, %164 : vector<8x128xf32>
    %166 = arith.index_cast %c5_i32 : i32 to index
    %c0_49 = arith.constant 0 : index
    %c0_50 = arith.constant 0 : index
    %167 = vector.load %arg6[%166, %c0_49, %c0_50] : memref<8x8x128xf32, #tpu.memory_space<vmem>>, vector<1x8x128xf32>
    %168 = vector.shape_cast %167 : vector<1x8x128xf32> to vector<8x128xf32>
    %169 = vector.shape_cast %165 : vector<8x128xf32> to vector<1x8x128xf32>
    tpu.vector_store %arg6[%166, %c0_49, %c0_50], %169 {strides = array<i32>} : memref<8x8x128xf32, #tpu.memory_space<vmem>>, vector<1x8x128xf32>,
    %c6_i32 = arith.constant 6 : i32
    %c8_i32_51 = arith.constant 8 : i32
    %170 = arith.muli %c6_i32, %c8_i32_51 : i32
    %171 = tpu.assume_multiple %170, 8 : i32
    %172 = arith.index_cast %171 : i32 to index
    %c0_52 = arith.constant 0 : index
    %173 = vector.load %arg9[%172, %c0_52] : memref<64x512xf32, #tpu.memory_space<vmem>>, vector<8x512xf32>
    %cst_53 = arith.constant dense<0.000000e+00> : vector<8x512xf32>
    %174 = tpu.matmul %165, %11, %cst_53 {dimension_numbers = #tpu.dot_dimension_numbers<[1], [0], [0], [1], [0, 0, 1, 1], [], []>} : vector<8x128xf32>, vector<128x512xf32>, vector<8x512xf32> -> vector<8x512xf32>
    %175 = arith.addf %173, %174 : vector<8x512xf32>
    %176 = vector.extract_strided_slice %175 {offsets = [0, 0], sizes = [8, 384], strides = [1, 1]} : vector<8x512xf32> to vector<8x384xf32>
    %177 = arith.negf %176 : vector<8x384xf32>
    %178 = math.exp %177 : vector<8x384xf32>
    %cst_54 = arith.constant 1.000000e+00 : f32
    %179 = vector.broadcast %cst_54 : f32 to vector<8x384xf32>
    %180 = arith.addf %179, %178 : vector<8x384xf32>
    %181 = arith.divf %179, %180 : vector<8x384xf32>
    %182 = vector.extract_strided_slice %181 {offsets = [0, 0], sizes = [8, 128], strides = [1, 1]} : vector<8x384xf32> to vector<8x128xf32>
    %183 = vector.extract_strided_slice %181 {offsets = [0, 128], sizes = [8, 128], strides = [1, 1]} : vector<8x384xf32> to vector<8x128xf32>
    %184 = vector.extract_strided_slice %181 {offsets = [0, 256], sizes = [8, 128], strides = [1, 1]} : vector<8x384xf32> to vector<8x128xf32>
    %185 = vector.extract_strided_slice %175 {offsets = [0, 384], sizes = [8, 128], strides = [1, 1]} : vector<8x512xf32> to vector<8x128xf32>
    %186 = math.tanh %185 : vector<8x128xf32>
    %187 = arith.mulf %183, %163 : vector<8x128xf32>
    %188 = arith.mulf %182, %186 : vector<8x128xf32>
    %189 = arith.addf %187, %188 : vector<8x128xf32>
    %190 = math.tanh %189 : vector<8x128xf32>
    %191 = arith.mulf %184, %190 : vector<8x128xf32>
    %192 = arith.index_cast %c6_i32 : i32 to index
    %c0_55 = arith.constant 0 : index
    %c0_56 = arith.constant 0 : index
    %193 = vector.load %arg6[%192, %c0_55, %c0_56] : memref<8x8x128xf32, #tpu.memory_space<vmem>>, vector<1x8x128xf32>
    %194 = vector.shape_cast %193 : vector<1x8x128xf32> to vector<8x128xf32>
    %195 = vector.shape_cast %191 : vector<8x128xf32> to vector<1x8x128xf32>
    tpu.vector_store %arg6[%192, %c0_55, %c0_56], %195 {strides = array<i32>} : memref<8x8x128xf32, #tpu.memory_space<vmem>>, vector<1x8x128xf32>,
    %c7_i32 = arith.constant 7 : i32
    %c8_i32_57 = arith.constant 8 : i32
    %196 = arith.muli %c7_i32, %c8_i32_57 : i32
    %197 = tpu.assume_multiple %196, 8 : i32
    %198 = arith.index_cast %197 : i32 to index
    %c0_58 = arith.constant 0 : index
    %199 = vector.load %arg9[%198, %c0_58] : memref<64x512xf32, #tpu.memory_space<vmem>>, vector<8x512xf32>
    %cst_59 = arith.constant dense<0.000000e+00> : vector<8x512xf32>
    %200 = tpu.matmul %191, %11, %cst_59 {dimension_numbers = #tpu.dot_dimension_numbers<[1], [0], [0], [1], [0, 0, 1, 1], [], []>} : vector<8x128xf32>, vector<128x512xf32>, vector<8x512xf32> -> vector<8x512xf32>
    %201 = arith.addf %199, %200 : vector<8x512xf32>
    %202 = vector.extract_strided_slice %201 {offsets = [0, 0], sizes = [8, 384], strides = [1, 1]} : vector<8x512xf32> to vector<8x384xf32>
    %203 = arith.negf %202 : vector<8x384xf32>
    %204 = math.exp %203 : vector<8x384xf32>
    %cst_60 = arith.constant 1.000000e+00 : f32
    %205 = vector.broadcast %cst_60 : f32 to vector<8x384xf32>
    %206 = arith.addf %205, %204 : vector<8x384xf32>
    %207 = arith.divf %205, %206 : vector<8x384xf32>
    %208 = vector.extract_strided_slice %207 {offsets = [0, 0], sizes = [8, 128], strides = [1, 1]} : vector<8x384xf32> to vector<8x128xf32>
    %209 = vector.extract_strided_slice %207 {offsets = [0, 128], sizes = [8, 128], strides = [1, 1]} : vector<8x384xf32> to vector<8x128xf32>
    %210 = vector.extract_strided_slice %207 {offsets = [0, 256], sizes = [8, 128], strides = [1, 1]} : vector<8x384xf32> to vector<8x128xf32>
    %211 = vector.extract_strided_slice %201 {offsets = [0, 384], sizes = [8, 128], strides = [1, 1]} : vector<8x512xf32> to vector<8x128xf32>
    %212 = math.tanh %211 : vector<8x128xf32>
    %213 = arith.mulf %209, %189 : vector<8x128xf32>
    %214 = arith.mulf %208, %212 : vector<8x128xf32>
    %215 = arith.addf %213, %214 : vector<8x128xf32>
    %216 = math.tanh %215 : vector<8x128xf32>
    %217 = arith.mulf %210, %216 : vector<8x128xf32>
    %218 = arith.index_cast %c7_i32 : i32 to index
    %c0_61 = arith.constant 0 : index
    %c0_62 = arith.constant 0 : index
    %219 = vector.load %arg6[%218, %c0_61, %c0_62] : memref<8x8x128xf32, #tpu.memory_space<vmem>>, vector<1x8x128xf32>
    %220 = vector.shape_cast %219 : vector<1x8x128xf32> to vector<8x128xf32>
    %221 = vector.shape_cast %217 : vector<8x128xf32> to vector<1x8x128xf32>
    tpu.vector_store %arg6[%218, %c0_61, %c0_62], %221 {strides = array<i32>} : memref<8x8x128xf32, #tpu.memory_space<vmem>>, vector<1x8x128xf32>,
    %c8_i32_63 = arith.constant 8 : i32
    %c0_64 = arith.constant 0 : index
    %c0_65 = arith.constant 0 : index
    %222 = vector.load %arg7[%c0_64, %c0_65] : memref<8x128xf32, #tpu.memory_space<vmem>>, vector<8x128xf32>
    tpu.vector_store %arg7[%c0_64, %c0_65], %217 {strides = array<i32>} : memref<8x128xf32, #tpu.memory_space<vmem>>, vector<8x128xf32>,
    %c0_66 = arith.constant 0 : index
    %c0_67 = arith.constant 0 : index
    %223 = vector.load %arg8[%c0_66, %c0_67] : memref<8x128xf32, #tpu.memory_space<vmem>>, vector<8x128xf32>
    tpu.vector_store %arg8[%c0_66, %c0_67], %215 {strides = array<i32>} : memref<8x128xf32, #tpu.memory_space<vmem>>, vector<8x128xf32>,
    return
  }
  func.func @transform_0(%arg0: i32, %arg1: i32) -> (i32, i32, i32) {
    %c0_i32 = arith.constant 0 : i32
    %c0_i32_0 = arith.constant 0 : i32
    return %arg1, %arg0, %c0_i32 : i32, i32, i32
  }
  func.func @transform_1(%arg0: i32, %arg1: i32) -> (i32, i32) {
    %c0_i32 = arith.constant 0 : i32
    %c0_i32_0 = arith.constant 0 : i32
    %c0_i32_1 = arith.constant 0 : i32
    return %c0_i32, %c0_i32_0 : i32, i32
  }
  func.func @transform_2(%arg0: i32, %arg1: i32) -> (i32, i32) {
    %c0_i32 = arith.constant 0 : i32
    %c0_i32_0 = arith.constant 0 : i32
    %c0_i32_1 = arith.constant 0 : i32
    return %c0_i32, %c0_i32_0 : i32, i32
  }
  func.func @transform_3(%arg0: i32, %arg1: i32) -> (i32, i32) {
    %c0_i32 = arith.constant 0 : i32
    %c0_i32_0 = arith.constant 0 : i32
    %c0_i32_1 = arith.constant 0 : i32
    return %c0_i32, %c0_i32_0 : i32, i32
  }
  func.func @transform_4(%arg0: i32, %arg1: i32) -> (i32, i32, i32) {
    %c0_i32 = arith.constant 0 : i32
    %c0_i32_0 = arith.constant 0 : i32
    return %arg1, %arg0, %c0_i32 : i32, i32, i32
  }
}

module attributes {stable_mosaic.version = 11 : i64} {
  func.func @attn_fc_kernel(%arg0: i32, %arg1: memref<1x16x128xf32, #tpu.memory_space<vmem>>, %arg2: memref<128x384xf32, #tpu.memory_space<vmem>>, %arg3: memref<1x384xf32, #tpu.memory_space<vmem>>, %arg4: memref<128x128xf32, #tpu.memory_space<vmem>>, %arg5: memref<1x128xf32, #tpu.memory_space<vmem>>, %arg6: memref<1x16x128xf32, #tpu.memory_space<vmem>>) attributes {dimension_semantics = [#tpu.dimension_semantics<parallel>], iteration_bounds = array<i64: 2>, scalar_prefetch = 0 : i64, scratch_operands = 0 : i64, tpu.core_type = #tpu.core_type<tc>, window_params = [{transform_indices = @transform_0, window_bounds = array<i64: 1, 16, 128>}, {pipeline_mode = #tpu.pipeline_mode<synchronous>, transform_indices = @transform_1, window_bounds = array<i64: 128, 384>}, {pipeline_mode = #tpu.pipeline_mode<synchronous>, transform_indices = @transform_2, window_bounds = array<i64: 1, 384>}, {pipeline_mode = #tpu.pipeline_mode<synchronous>, transform_indices = @transform_3, window_bounds = array<i64: 128, 128>}, {pipeline_mode = #tpu.pipeline_mode<synchronous>, transform_indices = @transform_4, window_bounds = array<i64: 1, 128>}, {transform_indices = @transform_5, window_bounds = array<i64: 1, 16, 128>}]} {
    %c0 = arith.constant 0 : index
    %c0_0 = arith.constant 0 : index
    %c0_1 = arith.constant 0 : index
    %0 = vector.load %arg1[%c0, %c0_0, %c0_1] : memref<1x16x128xf32, #tpu.memory_space<vmem>>, vector<1x16x128xf32>
    %1 = vector.shape_cast %0 : vector<1x16x128xf32> to vector<16x128xf32>
    %c0_2 = arith.constant 0 : index
    %c0_3 = arith.constant 0 : index
    %2 = vector.load %arg2[%c0_2, %c0_3] : memref<128x384xf32, #tpu.memory_space<vmem>>, vector<128x384xf32>
    %cst = arith.constant dense<0.000000e+00> : vector<16x384xf32>
    %3 = tpu.matmul %1, %2, %cst {dimension_numbers = #tpu.dot_dimension_numbers<[1], [0], [0], [1], [0, 0, 1, 1], [], []>} : vector<16x128xf32>, vector<128x384xf32>, vector<16x384xf32> -> vector<16x384xf32>
    %c0_4 = arith.constant 0 : index
    %c0_5 = arith.constant 0 : index
    %4 = vector.load %arg3[%c0_4, %c0_5] : memref<1x384xf32, #tpu.memory_space<vmem>>, vector<1x384xf32>
    %5 = vector.broadcast %4 : vector<1x384xf32> to vector<16x384xf32>
    %6 = arith.addf %3, %5 : vector<16x384xf32>
    %7 = vector.extract_strided_slice %6 {offsets = [0, 0], sizes = [16, 128], strides = [1, 1]} : vector<16x384xf32> to vector<16x128xf32>
    %8 = vector.extract_strided_slice %6 {offsets = [0, 128], sizes = [16, 128], strides = [1, 1]} : vector<16x384xf32> to vector<16x128xf32>
    %9 = vector.extract_strided_slice %6 {offsets = [0, 256], sizes = [16, 128], strides = [1, 1]} : vector<16x384xf32> to vector<16x128xf32>
    %cst_6 = arith.constant dense<0.000000e+00> : vector<16x16xf32>
    %10 = tpu.matmul %7, %8, %cst_6 {dimension_numbers = #tpu.dot_dimension_numbers<[1], [1], [0], [0], [0, 0, 1, 0], [], []>} : vector<16x128xf32>, vector<16x128xf32>, vector<16x16xf32> -> vector<16x16xf32>
    %cst_7 = arith.constant 0.176776692 : f32
    %11 = vector.broadcast %cst_7 : f32 to vector<16x16xf32>
    %12 = arith.mulf %10, %11 : vector<16x16xf32>
    %cst_8 = arith.constant dense<0xFF800000> : vector<16xf32>
    %13 = vector.multi_reduction <maximumf>, %12, %cst_8 [1] : vector<16x16xf32> to vector<16xf32>
    %14 = vector.shape_cast %13 : vector<16xf32> to vector<16x1xf32>
    %15 = vector.broadcast %14 : vector<16x1xf32> to vector<16x16xf32>
    %16 = arith.subf %12, %15 : vector<16x16xf32>
    %17 = math.exp %16 : vector<16x16xf32>
    %cst_9 = arith.constant dense<0.000000e+00> : vector<16xf32>
    %18 = vector.multi_reduction <add>, %17, %cst_9 [1] : vector<16x16xf32> to vector<16xf32>
    %19 = vector.shape_cast %18 : vector<16xf32> to vector<16x1xf32>
    %20 = tpu.reciprocal %19 {approx = true} : vector<16x1xf32> -> vector<16x1xf32>
    %21 = vector.broadcast %20 : vector<16x1xf32> to vector<16x16xf32>
    %22 = arith.mulf %17, %21 : vector<16x16xf32>
    %cst_10 = arith.constant dense<0.000000e+00> : vector<16x128xf32>
    %23 = tpu.matmul %22, %9, %cst_10 {dimension_numbers = #tpu.dot_dimension_numbers<[1], [0], [0], [1], [0, 0, 1, 1], [], []>} : vector<16x16xf32>, vector<16x128xf32>, vector<16x128xf32> -> vector<16x128xf32>
    %c0_11 = arith.constant 0 : index
    %c0_12 = arith.constant 0 : index
    %24 = vector.load %arg4[%c0_11, %c0_12] : memref<128x128xf32, #tpu.memory_space<vmem>>, vector<128x128xf32>
    %cst_13 = arith.constant dense<0.000000e+00> : vector<16x128xf32>
    %25 = tpu.matmul %23, %24, %cst_13 {dimension_numbers = #tpu.dot_dimension_numbers<[1], [0], [0], [1], [0, 0, 1, 1], [], []>} : vector<16x128xf32>, vector<128x128xf32>, vector<16x128xf32> -> vector<16x128xf32>
    %c0_14 = arith.constant 0 : index
    %c0_15 = arith.constant 0 : index
    %26 = vector.load %arg5[%c0_14, %c0_15] : memref<1x128xf32, #tpu.memory_space<vmem>>, vector<1x128xf32>
    %27 = vector.broadcast %26 : vector<1x128xf32> to vector<16x128xf32>
    %28 = arith.addf %25, %27 : vector<16x128xf32>
    %29 = arith.negf %28 : vector<16x128xf32>
    %30 = math.exp %29 : vector<16x128xf32>
    %cst_16 = arith.constant 1.000000e+00 : f32
    %31 = vector.broadcast %cst_16 : f32 to vector<16x128xf32>
    %32 = arith.addf %31, %30 : vector<16x128xf32>
    %33 = arith.divf %31, %32 : vector<16x128xf32>
    %c0_17 = arith.constant 0 : index
    %c0_18 = arith.constant 0 : index
    %c0_19 = arith.constant 0 : index
    %34 = vector.load %arg6[%c0_17, %c0_18, %c0_19] : memref<1x16x128xf32, #tpu.memory_space<vmem>>, vector<1x16x128xf32>
    %35 = vector.shape_cast %34 : vector<1x16x128xf32> to vector<16x128xf32>
    %36 = vector.shape_cast %33 : vector<16x128xf32> to vector<1x16x128xf32>
    tpu.vector_store %arg6[%c0_17, %c0_18, %c0_19], %36 {strides = array<i32>} : memref<1x16x128xf32, #tpu.memory_space<vmem>>, vector<1x16x128xf32>,
    return
  }
  func.func @transform_0(%arg0: i32) -> (i32, i32, i32) {
    %c0_i32 = arith.constant 0 : i32
    %c0_i32_0 = arith.constant 0 : i32
    %c0_i32_1 = arith.constant 0 : i32
    return %arg0, %c0_i32, %c0_i32_0 : i32, i32, i32
  }
  func.func @transform_1(%arg0: i32) -> (i32, i32) {
    %c0_i32 = arith.constant 0 : i32
    %c0_i32_0 = arith.constant 0 : i32
    %c0_i32_1 = arith.constant 0 : i32
    return %c0_i32, %c0_i32_0 : i32, i32
  }
  func.func @transform_2(%arg0: i32) -> (i32, i32) {
    %c0_i32 = arith.constant 0 : i32
    %c0_i32_0 = arith.constant 0 : i32
    %c0_i32_1 = arith.constant 0 : i32
    return %c0_i32, %c0_i32_0 : i32, i32
  }
  func.func @transform_3(%arg0: i32) -> (i32, i32) {
    %c0_i32 = arith.constant 0 : i32
    %c0_i32_0 = arith.constant 0 : i32
    %c0_i32_1 = arith.constant 0 : i32
    return %c0_i32, %c0_i32_0 : i32, i32
  }
  func.func @transform_4(%arg0: i32) -> (i32, i32) {
    %c0_i32 = arith.constant 0 : i32
    %c0_i32_0 = arith.constant 0 : i32
    %c0_i32_1 = arith.constant 0 : i32
    return %c0_i32, %c0_i32_0 : i32, i32
  }
  func.func @transform_5(%arg0: i32) -> (i32, i32, i32) {
    %c0_i32 = arith.constant 0 : i32
    %c0_i32_0 = arith.constant 0 : i32
    %c0_i32_1 = arith.constant 0 : i32
    return %arg0, %c0_i32, %c0_i32_0 : i32, i32, i32
  }
}

</mosaic_0001>

<llo_original>
// kernel: lstm_attention_forward.5
$region0: #{lstm_attention_forward.5}
  #allocation0 [shape = 'u32[]', space=smem, size = 0x4, offset = 0x4, fixed_abs, tag = 'smem constant byte address 0x4 - core index']
  #allocation1 [shape = 'u32[144,128]{1,0:T(1,128)}', space=vmem, size = 0x12000, scoped, tag = 'internal scratch']
  %s0 = inlined_call_operand.vmem [shape: f32[2,16,128], index: 0, kind: input, shape index: {}]
  %s1 = inlined_call_operand.vmem [shape: f32[128,384], index: 1, kind: input, shape index: {}]
  %s2 = inlined_call_operand.vmem [shape: f32[1,384], index: 2, kind: input, shape index: {}]
  %s3 = inlined_call_operand.vmem [shape: f32[128,128], index: 3, kind: input, shape index: {}]
  %s4 = inlined_call_operand.vmem [shape: f32[1,128], index: 4, kind: input, shape index: {}]
  %s5 = inlined_call_operand.vmem [shape: f32[2,16,128], index: 5, kind: output, shape index: {}]
  %s6 = sld [smem:[#allocation0]]
  $region53: #{lstm_attention_forward.5} parent=0
    _
  %s8 = ssub.s32 1, %s6
  %s9 = scalar_select 0, %s8, %s6
  loop: start=0, step=1, limit=4
  $region2: #{lstm_attention_forward.5} parent=0 // loop_pre_header
    _
  $region3: #{lstm_attention_forward.5} parent=0 // loop_header
    %s11 = sphi 0, %s15
    %p12 = scmp.ge.s32.totalorder %s11, 4
    %s21 = sphi 0, %s23
    %s24 = sphi 0, %s21
    %s25 = sphi 0, %s24
    %s41 = sphi 0, %s25
    %s45 = sphi 0, %s45
    %s47 = sphi 0, %s45
    %s48 = sphi 0, %s47
    %s62 = sphi 0, %s48
    %s66 = sphi 0, %s66
    %s68 = sphi 0, %s66
    %s69 = sphi 0, %s68
    %s83 = sphi 0, %s69
    %s87 = sphi 0, %s87
    %s89 = sphi 0, %s87
    %s90 = sphi 0, %s89
    %s104 = sphi 0, %s90
    %s108 = sphi 0, %s108
    %s110 = sphi 0, %s108
    %s111 = sphi 0, %s110
    %s125 = sphi 0, %s111
    %s131 = sphi 0, %s133
    %s134 = sphi 0, %s131
    %s135 = sphi 0, %s134
    %s151 = sphi 0, %s135
  $region4: #{lstm_attention_forward.5} parent=0 // loop_header_branch
    %14 = sbr.rel (%p12) target = $region8
  $region5: #{lstm_attention_forward.5} parent=0 // loop_body
    %s16 = ssub.s32 %s11, 1
    %s17 = ssub.s32 %s11, 2
    %s18 = sadd.s32 %s11, 1
    %s19 = ssub.s32 %s11, %s18
    %p20 = scmp.eq.s32.totalorder %s19, 0
    %s22 = sadd.s32 %s21, 1
    %s23 = scalar_select %p20, %s21, %s22
    %p26 = pneg %p20
    %p27 = scmp.eq.s32.totalorder %s11, 1
    %p28 = por %p26, %p27
    %p29 = scmp.ne.s32.totalorder %s21, %s24
    %p30 = scmp.eq.s32.totalorder %s11, 0
    %p31 = por %p29, %p30
    %p32 = scmp.ne.s32.totalorder %s21, %s24
    %p33 = scmp.eq.s32.totalorder %s16, 1
    %p34 = por %p32, %p33
    %p35 = scmp.ne.s32.totalorder %s24, %s25
    %p36 = scmp.eq.s32.totalorder %s16, 0
    %p37 = por %p35, %p36
    %p38 = scmp.ne.s32.totalorder %s24, %s25
    %p39 = scmp.eq.s32.totalorder %s17, 1
    %p40 = por %p38, %p39
    %p42 = scmp.ne.s32.totalorder %s25, %s41
    %p43 = scmp.eq.s32.totalorder %s17, 0
    %p44 = por %p42, %p43
    %s46 = sadd.s32 %s45, 1
    %p49 = scmp.eq.s32.totalorder %s11, 1
    %p50 = scmp.ne.s32.totalorder %s45, %s47
    %p51 = scmp.eq.s32.totalorder %s11, 0
    %p52 = por %p50, %p51
    %p53 = scmp.ne.s32.totalorder %s45, %s47
    %p54 = scmp.eq.s32.totalorder %s16, 1
    %p55 = por %p53, %p54
    %p56 = scmp.ne.s32.totalorder %s47, %s48
    %p57 = scmp.eq.s32.totalorder %s16, 0
    %p58 = por %p56, %p57
    %p59 = scmp.ne.s32.totalorder %s47, %s48
    %p60 = scmp.eq.s32.totalorder %s17, 1
    %p61 = por %p59, %p60
    %p63 = scmp.ne.s32.totalorder %s48, %s62
    %p64 = scmp.eq.s32.totalorder %s17, 0
    %p65 = por %p63, %p64
    %s67 = sadd.s32 %s66, 1
    %p70 = scmp.eq.s32.totalorder %s11, 1
    %p71 = scmp.ne.s32.totalorder %s66, %s68
    %p72 = scmp.eq.s32.totalorder %s11, 0
    %p73 = por %p71, %p72
    %p74 = scmp.ne.s32.totalorder %s66, %s68
    %p75 = scmp.eq.s32.totalorder %s16, 1
    %p76 = por %p74, %p75
    %p77 = scmp.ne.s32.totalorder %s68, %s69
    %p78 = scmp.eq.s32.totalorder %s16, 0
    %p79 = por %p77, %p78
    %p80 = scmp.ne.s32.totalorder %s68, %s69
    %p81 = scmp.eq.s32.totalorder %s17, 1
    %p82 = por %p80, %p81
    %p84 = scmp.ne.s32.totalorder %s69, %s83
    %p85 = scmp.eq.s32.totalorder %s17, 0
    %p86 = por %p84, %p85
    %s88 = sadd.s32 %s87, 1
    %p91 = scmp.eq.s32.totalorder %s11, 1
    %p92 = scmp.ne.s32.totalorder %s87, %s89
    %p93 = scmp.eq.s32.totalorder %s11, 0
    %p94 = por %p92, %p93
    %p95 = scmp.ne.s32.totalorder %s87, %s89
    %p96 = scmp.eq.s32.totalorder %s16, 1
    %p97 = por %p95, %p96
    %p98 = scmp.ne.s32.totalorder %s89, %s90
    %p99 = scmp.eq.s32.totalorder %s16, 0
    %p100 = por %p98, %p99
    %p101 = scmp.ne.s32.totalorder %s89, %s90
    %p102 = scmp.eq.s32.totalorder %s17, 1
    %p103 = por %p101, %p102
    %p105 = scmp.ne.s32.totalorder %s90, %s104
    %p106 = scmp.eq.s32.totalorder %s17, 0
    %p107 = por %p105, %p106
    %s109 = sadd.s32 %s108, 1
    %p112 = scmp.eq.s32.totalorder %s11, 1
    %p113 = scmp.ne.s32.totalorder %s108, %s110
    %p114 = scmp.eq.s32.totalorder %s11, 0
    %p115 = por %p113, %p114
    %p116 = scmp.ne.s32.totalorder %s108, %s110
    %p117 = scmp.eq.s32.totalorder %s16, 1
    %p118 = por %p116, %p117
    %p119 = scmp.ne.s32.totalorder %s110, %s111
    %p120 = scmp.eq.s32.totalorder %s16, 0
    %p121 = por %p119, %p120
    %p122 = scmp.ne.s32.totalorder %s110, %s111
    %p123 = scmp.eq.s32.totalorder %s17, 1
    %p124 = por %p122, %p123
    %p126 = scmp.ne.s32.totalorder %s111, %s125
    %p127 = scmp.eq.s32.totalorder %s17, 0
    %p128 = por %p126, %p127
    %s129 = ssub.s32 %s11, %s18
    %p130 = scmp.eq.s32.totalorder %s129, 0
    %s132 = sadd.s32 %s131, 1
    %s133 = scalar_select %p130, %s131, %s132
    %p136 = pneg %p130
    %p137 = scmp.eq.s32.totalorder %s11, 1
    %p138 = por %p136, %p137
    %p139 = scmp.ne.s32.totalorder %s131, %s134
    %p140 = scmp.eq.s32.totalorder %s11, 0
    %p141 = por %p139, %p140
    %p142 = scmp.ne.s32.totalorder %s131, %s134
    %p143 = scmp.eq.s32.totalorder %s16, 1
    %p144 = por %p142, %p143
    %p145 = scmp.ne.s32.totalorder %s134, %s135
    %p146 = scmp.eq.s32.totalorder %s16, 0
    %p147 = por %p145, %p146
    %p148 = scmp.ne.s32.totalorder %s134, %s135
    %p149 = scmp.eq.s32.totalorder %s17, 1
    %p150 = por %p148, %p149
    %p152 = scmp.ne.s32.totalorder %s135, %s151
    %p153 = scmp.eq.s32.totalorder %s17, 0
    %p154 = por %p152, %p153
    %p155 = scmp.le.s32.totalorder 1, %s11
    %p156 = scmp.lt.s32.totalorder %s11, 3
    %p157 = pnand %p155, %p156
    %p158 = pneg %p157
    // Predicated region
    $region9: #{lstm_attention_forward.5} parent=5 // pred_check
      _
    $region10: #{lstm_attention_forward.5} parent=5 // pred_check_branch
      %160 = sbr.rel (%p157) target = $region12
    $region11: #{lstm_attention_forward.5} parent=5 // pred_region
      %s161 = ssub.s32 %s11, 1
      // Predicated region
      $region13: #{lstm_attention_forward.5} parent=11 // pred_check
        %p162 = pneg %p58
      $region14: #{lstm_attention_forward.5} parent=11 // pred_check_branch
        %164 = sbr.rel (%p162) target = $region16
      $region15: #{lstm_attention_forward.5} parent=11 // pred_region
        _
      $region16: #{lstm_attention_forward.5} parent=11 // pred_fallthru
        _
      // Predicated region
      $region17: #{lstm_attention_forward.5} parent=11 // pred_check
        %p165 = pneg %p79
      $region18: #{lstm_attention_forward.5} parent=11 // pred_check_branch
        %167 = sbr.rel (%p165) target = $region20
      $region19: #{lstm_attention_forward.5} parent=11 // pred_region
        _
      $region20: #{lstm_attention_forward.5} parent=11 // pred_fallthru
        _
      // Predicated region
      $region21: #{lstm_attention_forward.5} parent=11 // pred_check
        %p168 = pneg %p100
      $region22: #{lstm_attention_forward.5} parent=11 // pred_check_branch
        %170 = sbr.rel (%p168) target = $region24
      $region23: #{lstm_attention_forward.5} parent=11 // pred_region
        _
      $region24: #{lstm_attention_forward.5} parent=11 // pred_fallthru
        _
      // Predicated region
      $region25: #{lstm_attention_forward.5} parent=11 // pred_check
        %p171 = pneg %p121
      $region26: #{lstm_attention_forward.5} parent=11 // pred_check_branch
        %173 = sbr.rel (%p171) target = $region28
      $region27: #{lstm_attention_forward.5} parent=11 // pred_region
        _
      $region28: #{lstm_attention_forward.5} parent=11 // pred_fallthru
        _
    $region12: #{lstm_attention_forward.5} parent=5 // pred_fallthru
      _
    %p174 = scmp.lt.s32.totalorder %s11, 2
    // Predicated region
    $region29: #{lstm_attention_forward.5} parent=5 // pred_check
      %p175 = pneg %p174
    $region30: #{lstm_attention_forward.5} parent=5 // pred_check_branch
      %177 = sbr.rel (%p175) target = $region32
    $region31: #{lstm_attention_forward.5} parent=5 // pred_region
      // Predicated region
      $region33: #{lstm_attention_forward.5} parent=31 // pred_check
        %p178 = pneg %p31
      $region34: #{lstm_attention_forward.5} parent=31 // pred_check_branch
        %180 = sbr.rel (%p178) target = $region36
      $region35: #{lstm_attention_forward.5} parent=31 // pred_region
        %p181 = scmp.lt.s32.totalorder %s11, 1
        %s182 = scalar_select %p181, %s11, 1
        %s183 = smul.addr %s182, 2
        %s184 = smul.addr %s183, 8
        %s185 = scalar_lea.vmem %s0, %s184
      $region36: #{lstm_attention_forward.5} parent=31 // pred_fallthru
        _
    $region32: #{lstm_attention_forward.5} parent=5 // pred_fallthru
      _
    %p186 = scmp.le.s32.totalorder 1, %s11
    %p187 = scmp.lt.s32.totalorder %s11, 3
    %p188 = pnand %p186, %p187
    %p189 = pneg %p188
    // Predicated region
    $region37: #{lstm_attention_forward.5} parent=5 // pred_check
      _
    $region38: #{lstm_attention_forward.5} parent=5 // pred_check_branch
      %191 = sbr.rel (%p188) target = $region40
    $region39: #{lstm_attention_forward.5} parent=5 // pred_region
      %s192 = ssub.s32 %s11, 1
      %p193 = scmp.lt.s32.totalorder %s16, 1
      %s194 = scalar_select %p193, %s16, 1
      %s195 = smul.addr %s194, 2
      %s196 = smul.addr %s195, 8
      %s197 = scalar_lea.vmem %s0, %s196
      %p198 = pneg %p37
      %p199 = pneg %p34
      %p200 = pneg %p58
      %p201 = pneg %p55
      %p202 = pneg %p79
      %p203 = pneg %p76
      %p204 = pneg %p100
      %p205 = pneg %p97
      %p206 = pneg %p121
      %p207 = pneg %p118
      %p208 = pneg %p147
      %p209 = pneg %p144
      %p210 = scmp.lt.s32.totalorder %s16, 1
      %s211 = scalar_select %p210, %s16, 1
      %s212 = smul.addr %s211, 2
      %s213 = smul.addr %s212, 8
      %s214 = scalar_lea.vmem %s5, %s213
      %p215 = scmp.lt.s32.totalorder %s16, 1
      %s216 = scalar_select %p215, %s16, 1
      %s217 = smul.addr %s216, 2
      %s218 = smul.addr %s217, 8
      %s219 = scalar_lea.vmem %s0, %s218
      %p220 = scmp.lt.s32.totalorder %s16, 1
      %s221 = scalar_select %p220, %s16, 1
      %s222 = smul.addr %s221, 2
      %s223 = smul.addr %s222, 8
      %s224 = scalar_lea.vmem %s5, %s223
      %v225 = vld [vmem:[%s219] sm:$0xff]
      %v226 = vld [vmem:[%s219 + $0x8] sm:$0xff]
      %v227 = vld [vmem:[%s1] sm:$0xff]
      %v228 = vld [vmem:[%s1 + $0x8] sm:$0xff]
      %v229 = vld [vmem:[%s1 + $0x10] sm:$0xff]
      %v230 = vld [vmem:[%s1 + $0x18] sm:$0xff]
      %v231 = vld [vmem:[%s1 + $0x20] sm:$0xff]
      %v232 = vld [vmem:[%s1 + $0x28] sm:$0xff]
      %v233 = vld [vmem:[%s1 + $0x30] sm:$0xff]
      %v234 = vld [vmem:[%s1 + $0x38] sm:$0xff]
      %v235 = vld [vmem:[%s1 + $0x40] sm:$0xff]
      %v236 = vld [vmem:[%s1 + $0x48] sm:$0xff]
      %v237 = vld [vmem:[%s1 + $0x50] sm:$0xff]
      %v238 = vld [vmem:[%s1 + $0x58] sm:$0xff]
      %v239 = vld [vmem:[%s1 + $0x60] sm:$0xff]
      %v240 = vld [vmem:[%s1 + $0x68] sm:$0xff]
      %v241 = vld [vmem:[%s1 + $0x70] sm:$0xff]
      %v242 = vld [vmem:[%s1 + $0x78] sm:$0xff]
      %v243 = vld [vmem:[%s1 + $0x80] sm:$0xff]
      %v244 = vld [vmem:[%s1 + $0x88] sm:$0xff]
      %v245 = vld [vmem:[%s1 + $0x90] sm:$0xff]
      %v246 = vld [vmem:[%s1 + $0x98] sm:$0xff]
      %v247 = vld [vmem:[%s1 + $0xa0] sm:$0xff]
      %v248 = vld [vmem:[%s1 + $0xa8] sm:$0xff]
      %v249 = vld [vmem:[%s1 + $0xb0] sm:$0xff]
      %v250 = vld [vmem:[%s1 + $0xb8] sm:$0xff]
      %v251 = vld [vmem:[%s1 + $0xc0] sm:$0xff]
      %v252 = vld [vmem:[%s1 + $0xc8] sm:$0xff]
      %v253 = vld [vmem:[%s1 + $0xd0] sm:$0xff]
      %v254 = vld [vmem:[%s1 + $0xd8] sm:$0xff]
      %v255 = vld [vmem:[%s1 + $0xe0] sm:$0xff]
      %v256 = vld [vmem:[%s1 + $0xe8] sm:$0xff]
      %v257 = vld [vmem:[%s1 + $0xf0] sm:$0xff]
      %v258 = vld [vmem:[%s1 + $0xf8] sm:$0xff]
      %v259 = vld [vmem:[%s1 + $0x100] sm:$0xff]
      %v260 = vld [vmem:[%s1 + $0x108] sm:$0xff]
      %v261 = vld [vmem:[%s1 + $0x110] sm:$0xff]
      %v262 = vld [vmem:[%s1 + $0x118] sm:$0xff]
      %v263 = vld [vmem:[%s1 + $0x120] sm:$0xff]
      %v264 = vld [vmem:[%s1 + $0x128] sm:$0xff]
      %v265 = vld [vmem:[%s1 + $0x130] sm:$0xff]
      %v266 = vld [vmem:[%s1 + $0x138] sm:$0xff]
      %v267 = vld [vmem:[%s1 + $0x140] sm:$0xff]
      %v268 = vld [vmem:[%s1 + $0x148] sm:$0xff]
      %v269 = vld [vmem:[%s1 + $0x150] sm:$0xff]
      %v270 = vld [vmem:[%s1 + $0x158] sm:$0xff]
      %v271 = vld [vmem:[%s1 + $0x160] sm:$0xff]
      %v272 = vld [vmem:[%s1 + $0x168] sm:$0xff]
      %v273 = vld [vmem:[%s1 + $0x170] sm:$0xff]
      %v274 = vld [vmem:[%s1 + $0x178] sm:$0xff]
      %v275 = vld [vmem:[%s2] sm:$0x7]
      %v277 = vlaneseq
      %v278 = vshrl.u32 %v277, 7
      %v279 = vsub.s32 0, %v278
      %v280 = vrot.slane %v275, %v279
      %v281 = vlaneseq
      %v282 = vshrl.u32 %v281, 7
      %v283 = vsub.s32 1, %v282
      %v284 = vrot.slane %v275, %v283
      %v285 = vlaneseq
      %v286 = vshrl.u32 %v285, 7
      %v287 = vsub.s32 2, %v286
      %v288 = vrot.slane %v275, %v287
      %292 = vmatprep.subr.mxu0 %v228
      %293 = vmatpush1.msra.mxu0 %v227
      %294 = vmatprep.subr.mxu0 %v231
      %295 = vmatpush1.msra.mxu0 %v230
      %296 = vmatprep.subr.mxu0 %v234
      %297 = vmatpush1.msra.mxu0 %v233
      %298 = vmatprep.subr.mxu0 %v237
      %299 = vmatpush1.msra.mxu0 %v236
      %300 = vmatprep.subr.mxu0 %v240
      %301 = vmatpush1.msra.mxu0 %v239
      %302 = vmatprep.subr.mxu0 %v243
      %303 = vmatpush1.msra.mxu0 %v242
      %304 = vmatprep.subr.mxu0 %v246
      %305 = vmatpush1.msra.mxu0 %v245
      %306 = vmatprep.subr.mxu0 %v249
      %307 = vmatpush1.msra.mxu0 %v248
      %308 = vmatprep.subr.mxu0 %v252
      %309 = vmatpush1.msra.mxu0 %v251
      %310 = vmatprep.subr.mxu0 %v255
      %311 = vmatpush1.msra.mxu0 %v254
      %312 = vmatprep.subr.mxu0 %v258
      %313 = vmatpush1.msra.mxu0 %v257
      %314 = vmatprep.subr.mxu0 %v261
      %315 = vmatpush1.msra.mxu0 %v260
      %316 = vmatprep.subr.mxu0 %v264
      %317 = vmatpush1.msra.mxu0 %v263
      %318 = vmatprep.subr.mxu0 %v267
      %319 = vmatpush1.msra.mxu0 %v266
      %320 = vmatprep.subr.mxu0 %v270
      %321 = vmatpush1.msra.mxu0 %v269
      %322 = vmatprep.subr.mxu0 %v273
      %323 = vmatpush1.msra.mxu0 %v272
      %324 = vmatprep.subr.mxu0 0.0
      %325 = vmatpush1.msra.mxu0 0.0
      %326 = vmatprep.subr.mxu0 0.0
      %327 = vmatpush1.msra.mxu0 0.0
      %328 = vmatprep.subr.mxu0 0.0
      %329 = vmatpush1.msra.mxu0 0.0
      %330 = vmatprep.subr.mxu0 0.0
      %331 = vmatpush1.msra.mxu0 0.0
      %332 = vmatprep.subr.mxu0 0.0
      %333 = vmatpush1.msra.mxu0 0.0
      %334 = vmatprep.subr.mxu0 0.0
      %335 = vmatpush1.msra.mxu0 0.0
      %336 = vmatprep.subr.mxu0 0.0
      %337 = vmatpush1.msra.mxu0 0.0
      %338 = vmatprep.subr.mxu0 0.0
      %339 = vmatpush1.msra.mxu0 0.0
      %340 = vmatprep.subr.mxu0 0.0
      %341 = vmatpush1.msra.mxu0 0.0
      %342 = vmatprep.subr.mxu0 0.0
      %343 = vmatpush1.msra.mxu0 0.0
      %344 = vmatprep.subr.mxu0 0.0
      %345 = vmatpush1.msra.mxu0 0.0
      %346 = vmatprep.subr.mxu0 0.0
      %347 = vmatpush1.msra.mxu0 0.0
      %348 = vmatprep.subr.mxu0 0.0
      %349 = vmatpush1.msra.mxu0 0.0
      %350 = vmatprep.subr.mxu0 0.0
      %351 = vmatpush1.msra.mxu0 0.0
      %352 = vmatprep.subr.mxu0 0.0
      %353 = vmatpush1.msra.mxu0 0.0
      %354 = vmatprep.subr.mxu0 0.0
      %355 = vmatpush1.msra.mxu0 0.0
      %356 = vmatprep.mubr.f32.mxu0 0.0
      %357 = vmatmul.mubr.f32.gmra.mrb[0].mxu0 %v225
      %v358 = vpop.f32.mrb[0].mxu0
      %v359 = vadd.f32 %v280, %v358
      %v360 = vpop.f32.mrb[0].mxu0
      %v361 = vadd.f32 %v284, %v360
      %362 = vmatprep.mubr.f32.mxu0 0.0
      %363 = vmatmul.mubr.f32.gmra.mrb[0].mxu0 %v226
      %v364 = vpop.f32.mrb[0].mxu0
      %v365 = vadd.f32 %v280, %v364
      %v366 = vpop.f32.mrb[0].mxu0
      %v367 = vadd.f32 %v284, %v366
      %368 = vdwg.mxu0
      %369 = vmatprep.subr.mxu0 0.0
      %370 = vmatpush1.msra.mxu0 %v229
      %371 = vmatprep.subr.mxu0 0.0
      %372 = vmatpush1.msra.mxu0 %v232
      %373 = vmatprep.subr.mxu0 0.0
      %374 = vmatpush1.msra.mxu0 %v235
      %375 = vmatprep.subr.mxu0 0.0
      %376 = vmatpush1.msra.mxu0 %v238
      %377 = vmatprep.subr.mxu0 0.0
      %378 = vmatpush1.msra.mxu0 %v241
      %379 = vmatprep.subr.mxu0 0.0
      %380 = vmatpush1.msra.mxu0 %v244
      %381 = vmatprep.subr.mxu0 0.0
      %382 = vmatpush1.msra.mxu0 %v247
      %383 = vmatprep.subr.mxu0 0.0
      %384 = vmatpush1.msra.mxu0 %v250
      %385 = vmatprep.subr.mxu0 0.0
      %386 = vmatpush1.msra.mxu0 %v253
      %387 = vmatprep.subr.mxu0 0.0
      %388 = vmatpush1.msra.mxu0 %v256
      %389 = vmatprep.subr.mxu0 0.0
      %390 = vmatpush1.msra.mxu0 %v259
      %391 = vmatprep.subr.mxu0 0.0
      %392 = vmatpush1.msra.mxu0 %v262
      %393 = vmatprep.subr.mxu0 0.0
      %394 = vmatpush1.msra.mxu0 %v265
      %395 = vmatprep.subr.mxu0 0.0
      %396 = vmatpush1.msra.mxu0 %v268
      %397 = vmatprep.subr.mxu0 0.0
      %398 = vmatpush1.msra.mxu0 %v271
      %399 = vmatprep.subr.mxu0 0.0
      %400 = vmatpush1.msra.mxu0 %v274
      %401 = vmatprep.subr.mxu0 0.0
      %402 = vmatpush1.msra.mxu0 0.0
      %403 = vmatprep.subr.mxu0 0.0
      %404 = vmatpush1.msra.mxu0 0.0
      %405 = vmatprep.subr.mxu0 0.0
      %406 = vmatpush1.msra.mxu0 0.0
      %407 = vmatprep.subr.mxu0 0.0
      %408 = vmatpush1.msra.mxu0 0.0
      %409 = vmatprep.subr.mxu0 0.0
      %410 = vmatpush1.msra.mxu0 0.0
      %411 = vmatprep.subr.mxu0 0.0
      %412 = vmatpush1.msra.mxu0 0.0
      %413 = vmatprep.subr.mxu0 0.0
      %414 = vmatpush1.msra.mxu0 0.0
      %415 = vmatprep.subr.mxu0 0.0
      %416 = vmatpush1.msra.mxu0 0.0
      %417 = vmatprep.subr.mxu0 0.0
      %418 = vmatpush1.msra.mxu0 0.0
      %419 = vmatprep.subr.mxu0 0.0
      %420 = vmatpush1.msra.mxu0 0.0
      %421 = vmatprep.subr.mxu0 0.0
      %422 = vmatpush1.msra.mxu0 0.0
      %423 = vmatprep.subr.mxu0 0.0
      %424 = vmatpush1.msra.mxu0 0.0
      %425 = vmatprep.subr.mxu0 0.0
      %426 = vmatpush1.msra.mxu0 0.0
      %427 = vmatprep.subr.mxu0 0.0
      %428 = vmatpush1.msra.mxu0 0.0
      %429 = vmatprep.subr.mxu0 0.0
      %430 = vmatpush1.msra.mxu0 0.0
      %431 = vmatprep.subr.mxu0 0.0
      %432 = vmatpush1.msra.mxu0 0.0
      %433 = vmatprep.mubr.f32.mxu0 0.0
      %434 = vmatmul.mubr.f32.gmra.mrb[0].mxu0 %v225
      %v435 = vpop.f32.mrb[0].mxu0
      %v436 = vadd.f32 %v288, %v435
      %v437 = vpop.f32.mrb[0].mxu0
      %438 = vmatprep.mubr.f32.mxu0 0.0
      %439 = vmatmul.mubr.f32.gmra.mrb[0].mxu0 %v226
      %v440 = vpop.f32.mrb[0].mxu0
      %v441 = vadd.f32 %v288, %v440
      %v442 = vpop.f32.mrb[0].mxu0
      %443 = vdwg.mxu0
      %444 = vmatprep.subr.mxu0 0.0
      %445 = vmatpush1.xpose.msra.mxu0 %v361
      %446 = vmatprep.subr.mxu0 0.0
      %447 = vmatpush1.xpose.msra.mxu0 %v367
      %448 = vmatprep.subr.mxu0 0.0
      %449 = vmatpush1.xpose.msra.mxu0 0.0
      %450 = vmatprep.subr.mxu0 0.0
      %451 = vmatpush1.xpose.msra.mxu0 0.0
      %452 = vmatprep.subr.mxu0 0.0
      %453 = vmatpush1.xpose.msra.mxu0 0.0
      %454 = vmatprep.subr.mxu0 0.0
      %455 = vmatpush1.xpose.msra.mxu0 0.0
      %456 = vmatprep.subr.mxu0 0.0
      %457 = vmatpush1.xpose.msra.mxu0 0.0
      %458 = vmatprep.subr.mxu0 0.0
      %459 = vmatpush1.xpose.msra.mxu0 0.0
      %460 = vmatprep.subr.mxu0 0.0
      %461 = vmatpush1.xpose.msra.mxu0 0.0
      %462 = vmatprep.subr.mxu0 0.0
      %463 = vmatpush1.xpose.msra.mxu0 0.0
      %464 = vmatprep.subr.mxu0 0.0
      %465 = vmatpush1.xpose.msra.mxu0 0.0
      %466 = vmatprep.subr.mxu0 0.0
      %467 = vmatpush1.xpose.msra.mxu0 0.0
      %468 = vmatprep.subr.mxu0 0.0
      %469 = vmatpush1.xpose.msra.mxu0 0.0
      %470 = vmatprep.subr.mxu0 0.0
      %471 = vmatpush1.xpose.msra.mxu0 0.0
      %472 = vmatprep.subr.mxu0 0.0
      %473 = vmatpush1.xpose.msra.mxu0 0.0
      %474 = vmatprep.subr.mxu0 0.0
      %475 = vmatpush1.xpose.msra.mxu0 0.0
      %476 = vmatprep.subr.mxu0 0.0
      %477 = vmatpush1.xpose.msra.mxu0 0.0
      %478 = vmatprep.subr.mxu0 0.0
      %479 = vmatpush1.xpose.msra.mxu0 0.0
      %480 = vmatprep.subr.mxu0 0.0
      %481 = vmatpush1.xpose.msra.mxu0 0.0
      %482 = vmatprep.subr.mxu0 0.0
      %483 = vmatpush1.xpose.msra.mxu0 0.0
      %484 = vmatprep.subr.mxu0 0.0
      %485 = vmatpush1.xpose.msra.mxu0 0.0
      %486 = vmatprep.subr.mxu0 0.0
      %487 = vmatpush1.xpose.msra.mxu0 0.0
      %488 = vmatprep.subr.mxu0 0.0
      %489 = vmatpush1.xpose.msra.mxu0 0.0
      %490 = vmatprep.subr.mxu0 0.0
      %491 = vmatpush1.xpose.msra.mxu0 0.0
      %492 = vmatprep.subr.mxu0 0.0
      %493 = vmatpush1.xpose.msra.mxu0 0.0
      %494 = vmatprep.subr.mxu0 0.0
      %495 = vmatpush1.xpose.msra.mxu0 0.0
      %496 = vmatprep.subr.mxu0 0.0
      %497 = vmatpush1.xpose.msra.mxu0 0.0
      %498 = vmatprep.subr.mxu0 0.0
      %499 = vmatpush1.xpose.msra.mxu0 0.0
      %500 = vmatprep.subr.mxu0 0.0
      %501 = vmatpush1.xpose.msra.mxu0 0.0
      %502 = vmatprep.subr.mxu0 0.0
      %503 = vmatpush1.xpose.msra.mxu0 0.0
      %504 = vmatprep.subr.mxu0 0.0
      %505 = vmatpush1.xpose.msra.mxu0 0.0
      %506 = vmatprep.subr.mxu0 0.0
      %507 = vmatpush1.xpose.msra.mxu0 0.0
      %508 = vmatprep.mubr.f32.mxu0 0.0
      %509 = vmatmul.mubr.f32.gmra.mrb[0].mxu0 %v359
      %v510 = vpop.f32.mrb[0].mxu0
      %v511 = vadd.f32 0.0, %v510
      %v512 = vpop.f32.mrb[0].mxu0
      %513 = vmatprep.mubr.f32.mxu0 0.0
      %514 = vmatmul.mubr.f32.gmra.mrb[0].mxu0 %v365
      %v515 = vpop.f32.mrb[0].mxu0
      %v516 = vadd.f32 0.0, %v515
      %v517 = vpop.f32.mrb[0].mxu0
      %518 = vdwg.mxu0
      %v519 = vmul.f32 %v511, 0.17677669
      %v520 = vmul.f32 %v516, 0.17677669
      %vm521 = vcmask 130048
      %v522 = vsel %vm521, %v519, -inf
      %523 = vmax.xlane.f32.xlu0 %v522
      %v524 = vpop.xlane.xlu0 %523
      %v525 = vsel %vm521, %v520, -inf
      %526 = vmax.xlane.f32.xlu0 %v525
      %v527 = vpop.xlane.xlu0 %526
      %v528 = vsub.f32 %v519, %v524
      %v529 = vsub.f32 %v520, %v527
      %v530 = vmul.f32 %v528, 1.442695
      %v531 = vpow.pop %v530
      %v532 = vmul.f32 %v529, 1.442695
      %v533 = vpow.pop %v532
      %v534 = vsel %vm521, %v531, 0.0
      %535 = vadd.xlane.f32.xlu0 %v534
      %v536 = vpop.xlane.xlu0 %535
      %v537 = vsel %vm521, %v533, 0.0
      %538 = vadd.xlane.f32.xlu0 %v537
      %v539 = vpop.xlane.xlu0 %538
      %v540 = vrcp.pop %v536
      %v541 = vrcp.pop %v539
      %v542 = vmul.f32 %v531, %v540
      %v543 = vmul.f32 %v533, %v541
      %v545 = vsel %vm521, %v542, 0
      %v548 = vsel %vm521, %v543, 0
      %550 = vmatprep.subr.mxu0 0.0
      %551 = vmatpush1.msra.mxu0 %v436
      %552 = vmatprep.subr.mxu0 0.0
      %553 = vmatpush1.msra.mxu0 %v441
      %554 = vmatprep.subr.mxu0 0.0
      %555 = vmatpush1.msra.mxu0 0.0
      %556 = vmatprep.subr.mxu0 0.0
      %557 = vmatpush1.msra.mxu0 0.0
      %558 = vmatprep.subr.mxu0 0.0
      %559 = vmatpush1.msra.mxu0 0.0
      %560 = vmatprep.subr.mxu0 0.0
      %561 = vmatpush1.msra.mxu0 0.0
      %562 = vmatprep.subr.mxu0 0.0
      %563 = vmatpush1.msra.mxu0 0.0
      %564 = vmatprep.subr.mxu0 0.0
      %565 = vmatpush1.msra.mxu0 0.0
      %566 = vmatprep.subr.mxu0 0.0
      %567 = vmatpush1.msra.mxu0 0.0
      %568 = vmatprep.subr.mxu0 0.0
      %569 = vmatpush1.msra.mxu0 0.0
      %570 = vmatprep.subr.mxu0 0.0
      %571 = vmatpush1.msra.mxu0 0.0
      %572 = vmatprep.subr.mxu0 0.0
      %573 = vmatpush1.msra.mxu0 0.0
      %574 = vmatprep.subr.mxu0 0.0
      %575 = vmatpush1.msra.mxu0 0.0
      %576 = vmatprep.subr.mxu0 0.0
      %577 = vmatpush1.msra.mxu0 0.0
      %578 = vmatprep.subr.mxu0 0.0
      %579 = vmatpush1.msra.mxu0 0.0
      %580 = vmatprep.subr.mxu0 0.0
      %581 = vmatpush1.msra.mxu0 0.0
      %582 = vmatprep.subr.mxu0 0.0
      %583 = vmatpush1.msra.mxu0 0.0
      %584 = vmatprep.subr.mxu0 0.0
      %585 = vmatpush1.msra.mxu0 0.0
      %586 = vmatprep.subr.mxu0 0.0
      %587 = vmatpush1.msra.mxu0 0.0
      %588 = vmatprep.subr.mxu0 0.0
      %589 = vmatpush1.msra.mxu0 0.0
      %590 = vmatprep.subr.mxu0 0.0
      %591 = vmatpush1.msra.mxu0 0.0
      %592 = vmatprep.subr.mxu0 0.0
      %593 = vmatpush1.msra.mxu0 0.0
      %594 = vmatprep.subr.mxu0 0.0
      %595 = vmatpush1.msra.mxu0 0.0
      %596 = vmatprep.subr.mxu0 0.0
      %597 = vmatpush1.msra.mxu0 0.0
      %598 = vmatprep.subr.mxu0 0.0
      %599 = vmatpush1.msra.mxu0 0.0
      %600 = vmatprep.subr.mxu0 0.0
      %601 = vmatpush1.msra.mxu0 0.0
      %602 = vmatprep.subr.mxu0 0.0
      %603 = vmatpush1.msra.mxu0 0.0
      %604 = vmatprep.subr.mxu0 0.0
      %605 = vmatpush1.msra.mxu0 0.0
      %606 = vmatprep.subr.mxu0 0.0
      %607 = vmatpush1.msra.mxu0 0.0
      %608 = vmatprep.subr.mxu0 0.0
      %609 = vmatpush1.msra.mxu0 0.0
      %610 = vmatprep.subr.mxu0 0.0
      %611 = vmatpush1.msra.mxu0 0.0
      %612 = vmatprep.subr.mxu0 0.0
      %613 = vmatpush1.msra.mxu0 0.0
      %614 = vmatprep.mubr.f32.mxu0 0.0
      %615 = vmatmul.mubr.f32.gmra.mrb[0].mxu0 %v545
      %v616 = vpop.f32.mrb[0].mxu0
      %v617 = vadd.f32 0.0, %v616
      %v618 = vpop.f32.mrb[0].mxu0
      %619 = vmatprep.mubr.f32.mxu0 0.0
      %620 = vmatmul.mubr.f32.gmra.mrb[0].mxu0 %v548
      %v621 = vpop.f32.mrb[0].mxu0
      %v622 = vadd.f32 0.0, %v621
      %v623 = vpop.f32.mrb[0].mxu0
      %624 = vdwg.mxu0
      %v625 = vld [vmem:[%s3] sm:$0xff]
      %v626 = vld [vmem:[%s3 + $0x8] sm:$0xff]
      %v627 = vld [vmem:[%s3 + $0x10] sm:$0xff]
      %v628 = vld [vmem:[%s3 + $0x18] sm:$0xff]
      %v629 = vld [vmem:[%s3 + $0x20] sm:$0xff]
      %v630 = vld [vmem:[%s3 + $0x28] sm:$0xff]
      %v631 = vld [vmem:[%s3 + $0x30] sm:$0xff]
      %v632 = vld [vmem:[%s3 + $0x38] sm:$0xff]
      %v633 = vld [vmem:[%s3 + $0x40] sm:$0xff]
      %v634 = vld [vmem:[%s3 + $0x48] sm:$0xff]
      %v635 = vld [vmem:[%s3 + $0x50] sm:$0xff]
      %v636 = vld [vmem:[%s3 + $0x58] sm:$0xff]
      %v637 = vld [vmem:[%s3 + $0x60] sm:$0xff]
      %v638 = vld [vmem:[%s3 + $0x68] sm:$0xff]
      %v639 = vld [vmem:[%s3 + $0x70] sm:$0xff]
      %v640 = vld [vmem:[%s3 + $0x78] sm:$0xff]
      %v641 = vld [vmem:[%s4] sm:$0x1]
      %v643 = vlaneseq
      %v644 = vshrl.u32 %v643, 7
      %v645 = vsub.s32 0, %v644
      %v646 = vrot.slane %v641, %v645
      %648 = vmatprep.subr.mxu0 0.0
      %649 = vmatpush1.msra.mxu0 %v625
      %650 = vmatprep.subr.mxu0 0.0
      %651 = vmatpush1.msra.mxu0 %v626
      %652 = vmatprep.subr.mxu0 0.0
      %653 = vmatpush1.msra.mxu0 %v627
      %654 = vmatprep.subr.mxu0 0.0
      %655 = vmatpush1.msra.mxu0 %v628
      %656 = vmatprep.subr.mxu0 0.0
      %657 = vmatpush1.msra.mxu0 %v629
      %658 = vmatprep.subr.mxu0 0.0
      %659 = vmatpush1.msra.mxu0 %v630
      %660 = vmatprep.subr.mxu0 0.0
      %661 = vmatpush1.msra.mxu0 %v631
      %662 = vmatprep.subr.mxu0 0.0
      %663 = vmatpush1.msra.mxu0 %v632
      %664 = vmatprep.subr.mxu0 0.0
      %665 = vmatpush1.msra.mxu0 %v633
      %666 = vmatprep.subr.mxu0 0.0
      %667 = vmatpush1.msra.mxu0 %v634
      %668 = vmatprep.subr.mxu0 0.0
      %669 = vmatpush1.msra.mxu0 %v635
      %670 = vmatprep.subr.mxu0 0.0
      %671 = vmatpush1.msra.mxu0 %v636
      %672 = vmatprep.subr.mxu0 0.0
      %673 = vmatpush1.msra.mxu0 %v637
      %674 = vmatprep.subr.mxu0 0.0
      %675 = vmatpush1.msra.mxu0 %v638
      %676 = vmatprep.subr.mxu0 0.0
      %677 = vmatpush1.msra.mxu0 %v639
      %678 = vmatprep.subr.mxu0 0.0
      %679 = vmatpush1.msra.mxu0 %v640
      %680 = vmatprep.subr.mxu0 0.0
      %681 = vmatpush1.msra.mxu0 0.0
      %682 = vmatprep.subr.mxu0 0.0
      %683 = vmatpush1.msra.mxu0 0.0
      %684 = vmatprep.subr.mxu0 0.0
      %685 = vmatpush1.msra.mxu0 0.0
      %686 = vmatprep.subr.mxu0 0.0
      %687 = vmatpush1.msra.mxu0 0.0
      %688 = vmatprep.subr.mxu0 0.0
      %689 = vmatpush1.msra.mxu0 0.0
      %690 = vmatprep.subr.mxu0 0.0
      %691 = vmatpush1.msra.mxu0 0.0
      %692 = vmatprep.subr.mxu0 0.0
      %693 = vmatpush1.msra.mxu0 0.0
      %694 = vmatprep.subr.mxu0 0.0
      %695 = vmatpush1.msra.mxu0 0.0
      %696 = vmatprep.subr.mxu0 0.0
      %697 = vmatpush1.msra.mxu0 0.0
      %698 = vmatprep.subr.mxu0 0.0
      %699 = vmatpush1.msra.mxu0 0.0
      %700 = vmatprep.subr.mxu0 0.0
      %701 = vmatpush1.msra.mxu0 0.0
      %702 = vmatprep.subr.mxu0 0.0
      %703 = vmatpush1.msra.mxu0 0.0
      %704 = vmatprep.subr.mxu0 0.0
      %705 = vmatpush1.msra.mxu0 0.0
      %706 = vmatprep.subr.mxu0 0.0
      %707 = vmatpush1.msra.mxu0 0.0
      %708 = vmatprep.subr.mxu0 0.0
      %709 = vmatpush1.msra.mxu0 0.0
      %710 = vmatprep.subr.mxu0 0.0
      %711 = vmatpush1.msra.mxu0 0.0
      %712 = vmatprep.mubr.f32.mxu0 0.0
      %713 = vmatmul.mubr.f32.gmra.mrb[0].mxu0 %v617
      %v714 = vpop.f32.mrb[0].mxu0
      %v715 = vadd.f32 %v646, %v714
      %v716 = vpop.f32.mrb[0].mxu0
      %717 = vmatprep.mubr.f32.mxu0 0.0
      %718 = vmatmul.mubr.f32.gmra.mrb[0].mxu0 %v622
      %v719 = vpop.f32.mrb[0].mxu0
      %v720 = vadd.f32 %v646, %v719
      %v721 = vpop.f32.mrb[0].mxu0
      %722 = vdwg.mxu0
      %v723 = vxor.u32 %v715, 2147483648
      %v724 = vxor.u32 %v720, 2147483648
      %v725 = vmul.f32 %v723, 1.442695
      %v726 = vpow.pop %v725
      %v727 = vmul.f32 %v724, 1.442695
      %v728 = vpow.pop %v727
      %v729 = vadd.f32 %v726, 1.0
      %v730 = vadd.f32 %v728, 1.0
      %v731 = vrcp.pop %v729
      %v732 = vmul.f32 1.0, %v731
      %v733 = vrcp.pop %v730
      %v734 = vmul.f32 1.0, %v733
      %735 = vst [vmem:[%s224] sm:$0xff] %v732
      %736 = vst [vmem:[%s224 + $0x8] sm:$0xff] %v734
      %p737 = scmp.lt.s32.totalorder %s16, 1
      %s738 = scalar_select %p737, %s16, 1
      %s739 = smul.addr %s738, 2
      %s740 = smul.addr %s739, 8
      %s741 = scalar_lea.vmem %s5, %s740
      // Predicated region
      $region41: #{lstm_attention_forward.5} parent=39 // pred_check
        %p742 = pneg %p144
      $region42: #{lstm_attention_forward.5} parent=39 // pred_check_branch
        %744 = sbr.rel (%p742) target = $region44
      $region43: #{lstm_attention_forward.5} parent=39 // pred_region
        _
      $region44: #{lstm_attention_forward.5} parent=39 // pred_fallthru
        _
    $region40: #{lstm_attention_forward.5} parent=5 // pred_fallthru
      _
    %p745 = scmp.le.s32.totalorder 2, %s11
    // Predicated region
    $region45: #{lstm_attention_forward.5} parent=5 // pred_check
      %p746 = pneg %p745
    $region46: #{lstm_attention_forward.5} parent=5 // pred_check_branch
      %748 = sbr.rel (%p746) target = $region48
    $region47: #{lstm_attention_forward.5} parent=5 // pred_region
      %s749 = ssub.s32 %s11, 2
      // Predicated region
      $region49: #{lstm_attention_forward.5} parent=47 // pred_check
        %p750 = pneg %p150
      $region50: #{lstm_attention_forward.5} parent=47 // pred_check_branch
        %752 = sbr.rel (%p750) target = $region52
      $region51: #{lstm_attention_forward.5} parent=47 // pred_region
        %p753 = scmp.lt.s32.totalorder %s17, 1
        %s754 = scalar_select %p753, %s17, 1
        %s755 = smul.addr %s754, 2
        %s756 = smul.addr %s755, 8
        %s757 = scalar_lea.vmem %s5, %s756
      $region52: #{lstm_attention_forward.5} parent=47 // pred_fallthru
        _
    $region48: #{lstm_attention_forward.5} parent=5 // pred_fallthru
      _
  $region6: #{lstm_attention_forward.5} parent=0 // loop_footer
    %s15 = sadd.s32 1, %s11
  $region7: #{lstm_attention_forward.5} parent=0 // loop_footer_branch
    %10 = sbr.rel target = $region3
  $region8: #{lstm_attention_forward.5} parent=0 // loop_exit
    _

// kernel: lstm_attention_forward.3
$region0: #{lstm_attention_forward.3}
  #allocation0 [shape = 'u32[]', space=smem, size = 0x4, offset = 0x4, fixed_abs, tag = 'smem constant byte address 0x4 - core index']
  #allocation1 [shape = 'u32[144,128]{1,0:T(1,128)}', space=vmem, size = 0x12000, scoped, tag = 'internal scratch']
  #allocation2 [shape = 'f32[8,128]{1,0:T(8,128)}', space=vmem, size = 0x1000, scoped, tag = 'scratch operand']
  #allocation3 [shape = 'f32[8,128]{1,0:T(8,128)}', space=vmem, size = 0x1000, scoped, tag = 'scratch operand']
  #allocation4 [shape = 'f32[64,512]{1,0:T(8,128)}', space=vmem, size = 0x20000, scoped, tag = 'scratch operand']
  %s0 = inlined_call_operand.vmem [shape: f32[16,8,16], index: 0, kind: input, shape index: {}]
  %s1 = inlined_call_operand.vmem [shape: f32[16,512], index: 1, kind: input, shape index: {}]
  %s2 = inlined_call_operand.vmem [shape: f32[128,512], index: 2, kind: input, shape index: {}]
  %s3 = inlined_call_operand.vmem [shape: f32[1,512], index: 3, kind: input, shape index: {}]
  %s4 = inlined_call_operand.vmem [shape: f32[16,8,128], index: 4, kind: output, shape index: {}]
  %s5 = sld [smem:[#allocation0]]
  $region53: #{lstm_attention_forward.3} parent=0
    _
  %s7 = ssub.s32 1, %s5
  %s8 = scalar_select 0, %s7, %s5
  loop: start=0, step=1, limit=4
  $region2: #{lstm_attention_forward.3} parent=0 // loop_pre_header
    _
  $region3: #{lstm_attention_forward.3} parent=0 // loop_header
    %s10 = sphi 0, %s14
    %p11 = scmp.ge.s32.totalorder %s10, 4
    %s17 = sphi 0, %s29
    %s18 = sphi 0, %s25
    %s19 = sphi 0, %s17
    %s20 = sphi 0, %s18
    %s21 = sphi 0, %s19
    %s22 = sphi 0, %s20
    %s34 = sphi 0, %s36
    %s37 = sphi 0, %s34
    %s38 = sphi 0, %s37
    %s54 = sphi 0, %s38
    %s58 = sphi 0, %s58
    %s60 = sphi 0, %s58
    %s61 = sphi 0, %s60
    %s75 = sphi 0, %s61
    %s79 = sphi 0, %s79
    %s81 = sphi 0, %s79
    %s82 = sphi 0, %s81
    %s96 = sphi 0, %s82
    %s100 = sphi 0, %s100
    %s102 = sphi 0, %s100
    %s103 = sphi 0, %s102
    %s117 = sphi 0, %s103
    %s125 = sphi 0, %s127
    %s128 = sphi 0, %s125
    %s129 = sphi 0, %s128
    %s145 = sphi 0, %s129
  $region4: #{lstm_attention_forward.3} parent=0 // loop_header_branch
    %13 = sbr.rel (%p11) target = $region8
  $region5: #{lstm_attention_forward.3} parent=0 // loop_body
    %s15 = ssub.s32 %s10, 1
    %s16 = ssub.s32 %s10, 2
    %s23 = sadd.s32 1, %s18
    %p24 = scmp.ge.s32.totalorder %s23, 2
    %s25 = scalar_select %p24, 0, %s23
    %s26 = sadd.s32 1, %s17
    %s27 = scalar_select %p24, %s26, %s17
    %p28 = scmp.ge.s32.totalorder %s27, 1
    %s29 = scalar_select %p28, 0, %s27
    %s30 = ssub.s32 %s18, %s25
    %s31 = ssub.s32 %s17, %s29
    %s32 = sor.u32 %s30, %s31
    %p33 = scmp.eq.s32.totalorder %s32, 0
    %s35 = sadd.s32 %s34, 1
    %s36 = scalar_select %p33, %s34, %s35
    %p39 = pneg %p33
    %p40 = scmp.eq.s32.totalorder %s10, 1
    %p41 = por %p39, %p40
    %p42 = scmp.ne.s32.totalorder %s34, %s37
    %p43 = scmp.eq.s32.totalorder %s10, 0
    %p44 = por %p42, %p43
    %p45 = scmp.ne.s32.totalorder %s34, %s37
    %p46 = scmp.eq.s32.totalorder %s15, 1
    %p47 = por %p45, %p46
    %p48 = scmp.ne.s32.totalorder %s37, %s38
    %p49 = scmp.eq.s32.totalorder %s15, 0
    %p50 = por %p48, %p49
    %p51 = scmp.ne.s32.totalorder %s37, %s38
    %p52 = scmp.eq.s32.totalorder %s16, 1
    %p53 = por %p51, %p52
    %p55 = scmp.ne.s32.totalorder %s38, %s54
    %p56 = scmp.eq.s32.totalorder %s16, 0
    %p57 = por %p55, %p56
    %s59 = sadd.s32 %s58, 1
    %p62 = scmp.eq.s32.totalorder %s10, 1
    %p63 = scmp.ne.s32.totalorder %s58, %s60
    %p64 = scmp.eq.s32.totalorder %s10, 0
    %p65 = por %p63, %p64
    %p66 = scmp.ne.s32.totalorder %s58, %s60
    %p67 = scmp.eq.s32.totalorder %s15, 1
    %p68 = por %p66, %p67
    %p69 = scmp.ne.s32.totalorder %s60, %s61
    %p70 = scmp.eq.s32.totalorder %s15, 0
    %p71 = por %p69, %p70
    %p72 = scmp.ne.s32.totalorder %s60, %s61
    %p73 = scmp.eq.s32.totalorder %s16, 1
    %p74 = por %p72, %p73
    %p76 = scmp.ne.s32.totalorder %s61, %s75
    %p77 = scmp.eq.s32.totalorder %s16, 0
    %p78 = por %p76, %p77
    %s80 = sadd.s32 %s79, 1
    %p83 = scmp.eq.s32.totalorder %s10, 1
    %p84 = scmp.ne.s32.totalorder %s79, %s81
    %p85 = scmp.eq.s32.totalorder %s10, 0
    %p86 = por %p84, %p85
    %p87 = scmp.ne.s32.totalorder %s79, %s81
    %p88 = scmp.eq.s32.totalorder %s15, 1
    %p89 = por %p87, %p88
    %p90 = scmp.ne.s32.totalorder %s81, %s82
    %p91 = scmp.eq.s32.totalorder %s15, 0
    %p92 = por %p90, %p91
    %p93 = scmp.ne.s32.totalorder %s81, %s82
    %p94 = scmp.eq.s32.totalorder %s16, 1
    %p95 = por %p93, %p94
    %p97 = scmp.ne.s32.totalorder %s82, %s96
    %p98 = scmp.eq.s32.totalorder %s16, 0
    %p99 = por %p97, %p98
    %s101 = sadd.s32 %s100, 1
    %p104 = scmp.eq.s32.totalorder %s10, 1
    %p105 = scmp.ne.s32.totalorder %s100, %s102
    %p106 = scmp.eq.s32.totalorder %s10, 0
    %p107 = por %p105, %p106
    %p108 = scmp.ne.s32.totalorder %s100, %s102
    %p109 = scmp.eq.s32.totalorder %s15, 1
    %p110 = por %p108, %p109
    %p111 = scmp.ne.s32.totalorder %s102, %s103
    %p112 = scmp.eq.s32.totalorder %s15, 0
    %p113 = por %p111, %p112
    %p114 = scmp.ne.s32.totalorder %s102, %s103
    %p115 = scmp.eq.s32.totalorder %s16, 1
    %p116 = por %p114, %p115
    %p118 = scmp.ne.s32.totalorder %s103, %s117
    %p119 = scmp.eq.s32.totalorder %s16, 0
    %p120 = por %p118, %p119
    %s121 = ssub.s32 %s18, %s25
    %s122 = ssub.s32 %s17, %s29
    %s123 = sor.u32 %s121, %s122
    %p124 = scmp.eq.s32.totalorder %s123, 0
    %s126 = sadd.s32 %s125, 1
    %s127 = scalar_select %p124, %s125, %s126
    %p130 = pneg %p124
    %p131 = scmp.eq.s32.totalorder %s10, 1
    %p132 = por %p130, %p131
    %p133 = scmp.ne.s32.totalorder %s125, %s128
    %p134 = scmp.eq.s32.totalorder %s10, 0
    %p135 = por %p133, %p134
    %p136 = scmp.ne.s32.totalorder %s125, %s128
    %p137 = scmp.eq.s32.totalorder %s15, 1
    %p138 = por %p136, %p137
    %p139 = scmp.ne.s32.totalorder %s128, %s129
    %p140 = scmp.eq.s32.totalorder %s15, 0
    %p141 = por %p139, %p140
    %p142 = scmp.ne.s32.totalorder %s128, %s129
    %p143 = scmp.eq.s32.totalorder %s16, 1
    %p144 = por %p142, %p143
    %p146 = scmp.ne.s32.totalorder %s129, %s145
    %p147 = scmp.eq.s32.totalorder %s16, 0
    %p148 = por %p146, %p147
    %p149 = scmp.le.s32.totalorder 1, %s10
    %p150 = scmp.lt.s32.totalorder %s10, 3
    %p151 = pnand %p149, %p150
    %p152 = pneg %p151
    // Predicated region
    $region9: #{lstm_attention_forward.3} parent=5 // pred_check
      _
    $region10: #{lstm_attention_forward.3} parent=5 // pred_check_branch
      %154 = sbr.rel (%p151) target = $region12
    $region11: #{lstm_attention_forward.3} parent=5 // pred_region
      %s155 = ssub.s32 %s10, 1
      // Predicated region
      $region13: #{lstm_attention_forward.3} parent=11 // pred_check
        %p156 = pneg %p71
      $region14: #{lstm_attention_forward.3} parent=11 // pred_check_branch
        %158 = sbr.rel (%p156) target = $region16
      $region15: #{lstm_attention_forward.3} parent=11 // pred_region
        _
      $region16: #{lstm_attention_forward.3} parent=11 // pred_fallthru
        _
      // Predicated region
      $region17: #{lstm_attention_forward.3} parent=11 // pred_check
        %p159 = pneg %p92
      $region18: #{lstm_attention_forward.3} parent=11 // pred_check_branch
        %161 = sbr.rel (%p159) target = $region20
      $region19: #{lstm_attention_forward.3} parent=11 // pred_region
        _
      $region20: #{lstm_attention_forward.3} parent=11 // pred_fallthru
        _
      // Predicated region
      $region21: #{lstm_attention_forward.3} parent=11 // pred_check
        %p162 = pneg %p113
      $region22: #{lstm_attention_forward.3} parent=11 // pred_check_branch
        %164 = sbr.rel (%p162) target = $region24
      $region23: #{lstm_attention_forward.3} parent=11 // pred_region
        _
      $region24: #{lstm_attention_forward.3} parent=11 // pred_fallthru
        _
    $region12: #{lstm_attention_forward.3} parent=5 // pred_fallthru
      _
    %p165 = scmp.lt.s32.totalorder %s10, 2
    // Predicated region
    $region25: #{lstm_attention_forward.3} parent=5 // pred_check
      %p166 = pneg %p165
    $region26: #{lstm_attention_forward.3} parent=5 // pred_check_branch
      %168 = sbr.rel (%p166) target = $region28
    $region27: #{lstm_attention_forward.3} parent=5 // pred_region
      // Predicated region
      $region29: #{lstm_attention_forward.3} parent=27 // pred_check
        %p169 = pneg %p44
      $region30: #{lstm_attention_forward.3} parent=27 // pred_check_branch
        %171 = sbr.rel (%p169) target = $region32
      $region31: #{lstm_attention_forward.3} parent=27 // pred_region
        %s172 = smul.u32 8, %s18
        %p173 = scmp.lt.s32.totalorder %s172, 15
        %s174 = scalar_select %p173, %s172, 15
        %p175 = scmp.lt.s32.totalorder %s17, 0
        %s176 = scalar_select %p175, %s17, 0
        %s177 = sadd.s32 %s176, %s174
        %s178 = smul.addr %s177, 8
        %s179 = scalar_lea.vmem %s0, %s178
        %s180 = smul.u32 8, %s18
      $region32: #{lstm_attention_forward.3} parent=27 // pred_fallthru
        _
    $region28: #{lstm_attention_forward.3} parent=5 // pred_fallthru
      _
    %p181 = scmp.le.s32.totalorder 1, %s10
    %p182 = scmp.lt.s32.totalorder %s10, 3
    %p183 = pnand %p181, %p182
    %p184 = pneg %p183
    // Predicated region
    $region33: #{lstm_attention_forward.3} parent=5 // pred_check
      _
    $region34: #{lstm_attention_forward.3} parent=5 // pred_check_branch
      %186 = sbr.rel (%p183) target = $region36
    $region35: #{lstm_attention_forward.3} parent=5 // pred_region
      %s187 = ssub.s32 %s10, 1
      %s188 = smul.u32 8, %s20
      %p189 = scmp.lt.s32.totalorder %s188, 15
      %s190 = scalar_select %p189, %s188, 15
      %p191 = scmp.lt.s32.totalorder %s19, 0
      %s192 = scalar_select %p191, %s19, 0
      %s193 = sadd.s32 %s192, %s190
      %s194 = smul.addr %s193, 8
      %s195 = scalar_lea.vmem %s0, %s194
      %p196 = pneg %p50
      %p197 = pneg %p47
      %p198 = pneg %p71
      %p199 = pneg %p68
      %p200 = pneg %p92
      %p201 = pneg %p89
      %p202 = pneg %p113
      %p203 = pneg %p110
      %p204 = pneg %p141
      %p205 = pneg %p138
      %s206 = smul.u32 8, %s20
      %p207 = scmp.lt.s32.totalorder %s206, 15
      %s208 = scalar_select %p207, %s206, 15
      %p209 = scmp.lt.s32.totalorder %s19, 0
      %s210 = scalar_select %p209, %s19, 0
      %s211 = sadd.s32 %s210, %s208
      %s212 = smul.addr %s211, 8
      %s213 = scalar_lea.vmem %s4, %s212
      %s214 = smul.u32 8, %s20
      %p215 = scmp.lt.s32.totalorder %s214, 15
      %s216 = scalar_select %p215, %s214, 15
      %p217 = scmp.lt.s32.totalorder %s19, 0
      %s218 = scalar_select %p217, %s19, 0
      %s219 = sadd.s32 %s218, %s216
      %s220 = smul.addr %s219, 8
      %s221 = scalar_lea.vmem %s0, %s220
      %s222 = smul.u32 8, %s20
      %s223 = smul.u32 8, %s20
      %p224 = scmp.lt.s32.totalorder %s223, 15
      %s225 = scalar_select %p224, %s223, 15
      %p226 = scmp.lt.s32.totalorder %s19, 0
      %s227 = scalar_select %p226, %s19, 0
      %s228 = sadd.s32 %s227, %s225
      %s229 = smul.addr %s228, 8
      %s230 = scalar_lea.vmem %s4, %s229
      %s231 = smul.u32 8, %s20
      %p232 = scmp.eq.s32.totalorder %s20, 0
      // Predicated region
      $region37: #{lstm_attention_forward.3} parent=35 // pred_check
        %p233 = pneg %p232
      $region38: #{lstm_attention_forward.3} parent=35 // pred_check_branch
        %235 = sbr.rel (%p233) target = $region40
      $region39: #{lstm_attention_forward.3} parent=35 // pred_region
        %236 = vst [vmem:[#allocation2] sm:$0xff] 0.0
        %237 = vst [vmem:[#allocation3] sm:$0xff] 0.0
      $region40: #{lstm_attention_forward.3} parent=35 // pred_fallthru
        _
      %v238 = vld [vmem:[%s221] sm:$0xff]
      %v239 = vld [vmem:[%s221 + $0x8] sm:$0xff]
      %v240 = vld [vmem:[%s221 + $0x10] sm:$0xff]
      %v241 = vld [vmem:[%s221 + $0x18] sm:$0xff]
      %v242 = vld [vmem:[%s221 + $0x20] sm:$0xff]
      %v243 = vld [vmem:[%s221 + $0x28] sm:$0xff]
      %v244 = vld [vmem:[%s221 + $0x30] sm:$0xff]
      %v245 = vld [vmem:[%s221 + $0x38] sm:$0xff]
      %v246 = vld [vmem:[%s1] sm:$0xff]
      %v247 = vld [vmem:[%s1 + $0x8] sm:$0xff]
      %v248 = vld [vmem:[%s1 + $0x10] sm:$0xff]
      %v249 = vld [vmem:[%s1 + $0x18] sm:$0xff]
      %v250 = vld [vmem:[%s1 + $0x20] sm:$0xff]
      %v251 = vld [vmem:[%s1 + $0x28] sm:$0xff]
      %v252 = vld [vmem:[%s1 + $0x30] sm:$0xff]
      %v253 = vld [vmem:[%s1 + $0x38] sm:$0xff]
      %v254 = vld [vmem:[%s3] sm:$0xf]
      %v256 = vlaneseq
      %v257 = vshrl.u32 %v256, 7
      %v258 = vsub.s32 0, %v257
      %v259 = vrot.slane %v254, %v258
      %v260 = vlaneseq
      %v261 = vshrl.u32 %v260, 7
      %v262 = vsub.s32 1, %v261
      %v263 = vrot.slane %v254, %v262
      %v264 = vlaneseq
      %v265 = vshrl.u32 %v264, 7
      %v266 = vsub.s32 2, %v265
      %v267 = vrot.slane %v254, %v266
      %v268 = vlaneseq
      %v269 = vshrl.u32 %v268, 7
      %v270 = vsub.s32 3, %v269
      %v271 = vrot.slane %v254, %v270
      %vm276 = vcmask 130048
      %v278 = vsel %vm276, %v238, 0
      %v281 = vsel %vm276, %v239, 0
      %v284 = vsel %vm276, %v240, 0
      %v287 = vsel %vm276, %v241, 0
      %v290 = vsel %vm276, %v242, 0
      %v293 = vsel %vm276, %v243, 0
      %v296 = vsel %vm276, %v244, 0
      %v299 = vsel %vm276, %v245, 0
      %301 = vmatprep.subr.mxu0 %v247
      %302 = vmatpush1.msra.mxu0 %v246
      %303 = vmatprep.subr.mxu0 %v251
      %304 = vmatpush1.msra.mxu0 %v250
      %305 = vmatprep.subr.mxu0 0.0
      %306 = vmatpush1.msra.mxu0 0.0
      %307 = vmatprep.subr.mxu0 0.0
      %308 = vmatpush1.msra.mxu0 0.0
      %309 = vmatprep.subr.mxu0 0.0
      %310 = vmatpush1.msra.mxu0 0.0
      %311 = vmatprep.subr.mxu0 0.0
      %312 = vmatpush1.msra.mxu0 0.0
      %313 = vmatprep.subr.mxu0 0.0
      %314 = vmatpush1.msra.mxu0 0.0
      %315 = vmatprep.subr.mxu0 0.0
      %316 = vmatpush1.msra.mxu0 0.0
      %317 = vmatprep.subr.mxu0 0.0
      %318 = vmatpush1.msra.mxu0 0.0
      %319 = vmatprep.subr.mxu0 0.0
      %320 = vmatpush1.msra.mxu0 0.0
      %321 = vmatprep.subr.mxu0 0.0
      %322 = vmatpush1.msra.mxu0 0.0
      %323 = vmatprep.subr.mxu0 0.0
      %324 = vmatpush1.msra.mxu0 0.0
      %325 = vmatprep.subr.mxu0 0.0
      %326 = vmatpush1.msra.mxu0 0.0
      %327 = vmatprep.subr.mxu0 0.0
      %328 = vmatpush1.msra.mxu0 0.0
      %329 = vmatprep.subr.mxu0 0.0
      %330 = vmatpush1.msra.mxu0 0.0
      %331 = vmatprep.subr.mxu0 0.0
      %332 = vmatpush1.msra.mxu0 0.0
      %333 = vmatprep.subr.mxu0 0.0
      %334 = vmatpush1.msra.mxu0 0.0
      %335 = vmatprep.subr.mxu0 0.0
      %336 = vmatpush1.msra.mxu0 0.0
      %337 = vmatprep.subr.mxu0 0.0
      %338 = vmatpush1.msra.mxu0 0.0
      %339 = vmatprep.subr.mxu0 0.0
      %340 = vmatpush1.msra.mxu0 0.0
      %341 = vmatprep.subr.mxu0 0.0
      %342 = vmatpush1.msra.mxu0 0.0
      %343 = vmatprep.subr.mxu0 0.0
      %344 = vmatpush1.msra.mxu0 0.0
      %345 = vmatprep.subr.mxu0 0.0
      %346 = vmatpush1.msra.mxu0 0.0
      %347 = vmatprep.subr.mxu0 0.0
      %348 = vmatpush1.msra.mxu0 0.0
      %349 = vmatprep.subr.mxu0 0.0
      %350 = vmatpush1.msra.mxu0 0.0
      %351 = vmatprep.subr.mxu0 0.0
      %352 = vmatpush1.msra.mxu0 0.0
      %353 = vmatprep.subr.mxu0 0.0
      %354 = vmatpush1.msra.mxu0 0.0
      %355 = vmatprep.subr.mxu0 0.0
      %356 = vmatpush1.msra.mxu0 0.0
      %357 = vmatprep.subr.mxu0 0.0
      %358 = vmatpush1.msra.mxu0 0.0
      %359 = vmatprep.subr.mxu0 0.0
      %360 = vmatpush1.msra.mxu0 0.0
      %361 = vmatprep.subr.mxu0 0.0
      %362 = vmatpush1.msra.mxu0 0.0
      %363 = vmatprep.subr.mxu0 0.0
      %364 = vmatpush1.msra.mxu0 0.0
      %365 = vmatprep.mubr.f32.mxu0 0.0
      %366 = vmatmul.mubr.f32.gmra.mrb[0].mxu0 %v278
      %v367 = vpop.f32.mrb[0].mxu0
      %v368 = vadd.f32 %v259, %v367
      %v369 = vpop.f32.mrb[0].mxu0
      %v370 = vadd.f32 %v263, %v369
      %371 = vmatprep.mubr.f32.mxu0 0.0
      %372 = vmatmul.mubr.f32.gmra.mrb[0].mxu0 %v281
      %v373 = vpop.f32.mrb[0].mxu0
      %v374 = vadd.f32 %v259, %v373
      %v375 = vpop.f32.mrb[0].mxu0
      %v376 = vadd.f32 %v263, %v375
      %377 = vmatprep.mubr.f32.mxu0 0.0
      %378 = vmatmul.mubr.f32.gmra.mrb[0].mxu0 %v284
      %v379 = vpop.f32.mrb[0].mxu0
      %v380 = vadd.f32 %v259, %v379
      %v381 = vpop.f32.mrb[0].mxu0
      %v382 = vadd.f32 %v263, %v381
      %383 = vmatprep.mubr.f32.mxu0 0.0
      %384 = vmatmul.mubr.f32.gmra.mrb[0].mxu0 %v287
      %v385 = vpop.f32.mrb[0].mxu0
      %v386 = vadd.f32 %v259, %v385
      %v387 = vpop.f32.mrb[0].mxu0
      %v388 = vadd.f32 %v263, %v387
      %389 = vmatprep.mubr.f32.mxu0 0.0
      %390 = vmatmul.mubr.f32.gmra.mrb[0].mxu0 %v290
      %v391 = vpop.f32.mrb[0].mxu0
      %v392 = vadd.f32 %v259, %v391
      %v393 = vpop.f32.mrb[0].mxu0
      %v394 = vadd.f32 %v263, %v393
      %395 = vmatprep.mubr.f32.mxu0 0.0
      %396 = vmatmul.mubr.f32.gmra.mrb[0].mxu0 %v293
      %v397 = vpop.f32.mrb[0].mxu0
      %v398 = vadd.f32 %v259, %v397
      %v399 = vpop.f32.mrb[0].mxu0
      %v400 = vadd.f32 %v263, %v399
      %401 = vmatprep.mubr.f32.mxu0 0.0
      %402 = vmatmul.mubr.f32.gmra.mrb[0].mxu0 %v296
      %v403 = vpop.f32.mrb[0].mxu0
      %v404 = vadd.f32 %v259, %v403
      %v405 = vpop.f32.mrb[0].mxu0
      %v406 = vadd.f32 %v263, %v405
      %407 = vmatprep.mubr.f32.mxu0 0.0
      %408 = vmatmul.mubr.f32.gmra.mrb[0].mxu0 %v299
      %v409 = vpop.f32.mrb[0].mxu0
      %v410 = vadd.f32 %v259, %v409
      %v411 = vpop.f32.mrb[0].mxu0
      %v412 = vadd.f32 %v263, %v411
      %413 = vdwg.mxu0
      %414 = vmatprep.subr.mxu0 %v249
      %415 = vmatpush1.msra.mxu0 %v248
      %416 = vmatprep.subr.mxu0 %v253
      %417 = vmatpush1.msra.mxu0 %v252
      %418 = vmatprep.subr.mxu0 0.0
      %419 = vmatpush1.msra.mxu0 0.0
      %420 = vmatprep.subr.mxu0 0.0
      %421 = vmatpush1.msra.mxu0 0.0
      %422 = vmatprep.subr.mxu0 0.0
      %423 = vmatpush1.msra.mxu0 0.0
      %424 = vmatprep.subr.mxu0 0.0
      %425 = vmatpush1.msra.mxu0 0.0
      %426 = vmatprep.subr.mxu0 0.0
      %427 = vmatpush1.msra.mxu0 0.0
      %428 = vmatprep.subr.mxu0 0.0
      %429 = vmatpush1.msra.mxu0 0.0
      %430 = vmatprep.subr.mxu0 0.0
      %431 = vmatpush1.msra.mxu0 0.0
      %432 = vmatprep.subr.mxu0 0.0
      %433 = vmatpush1.msra.mxu0 0.0
      %434 = vmatprep.subr.mxu0 0.0
      %435 = vmatpush1.msra.mxu0 0.0
      %436 = vmatprep.subr.mxu0 0.0
      %437 = vmatpush1.msra.mxu0 0.0
      %438 = vmatprep.subr.mxu0 0.0
      %439 = vmatpush1.msra.mxu0 0.0
      %440 = vmatprep.subr.mxu0 0.0
      %441 = vmatpush1.msra.mxu0 0.0
      %442 = vmatprep.subr.mxu0 0.0
      %443 = vmatpush1.msra.mxu0 0.0
      %444 = vmatprep.subr.mxu0 0.0
      %445 = vmatpush1.msra.mxu0 0.0
      %446 = vmatprep.subr.mxu0 0.0
      %447 = vmatpush1.msra.mxu0 0.0
      %448 = vmatprep.subr.mxu0 0.0
      %449 = vmatpush1.msra.mxu0 0.0
      %450 = vmatprep.subr.mxu0 0.0
      %451 = vmatpush1.msra.mxu0 0.0
      %452 = vmatprep.subr.mxu0 0.0
      %453 = vmatpush1.msra.mxu0 0.0
      %454 = vmatprep.subr.mxu0 0.0
      %455 = vmatpush1.msra.mxu0 0.0
      %456 = vmatprep.subr.mxu0 0.0
      %457 = vmatpush1.msra.mxu0 0.0
      %458 = vmatprep.subr.mxu0 0.0
      %459 = vmatpush1.msra.mxu0 0.0
      %460 = vmatprep.subr.mxu0 0.0
      %461 = vmatpush1.msra.mxu0 0.0
      %462 = vmatprep.subr.mxu0 0.0
      %463 = vmatpush1.msra.mxu0 0.0
      %464 = vmatprep.subr.mxu0 0.0
      %465 = vmatpush1.msra.mxu0 0.0
      %466 = vmatprep.subr.mxu0 0.0
      %467 = vmatpush1.msra.mxu0 0.0
      %468 = vmatprep.subr.mxu0 0.0
      %469 = vmatpush1.msra.mxu0 0.0
      %470 = vmatprep.subr.mxu0 0.0
      %471 = vmatpush1.msra.mxu0 0.0
      %472 = vmatprep.subr.mxu0 0.0
      %473 = vmatpush1.msra.mxu0 0.0
      %474 = vmatprep.subr.mxu0 0.0
      %475 = vmatpush1.msra.mxu0 0.0
      %476 = vmatprep.subr.mxu0 0.0
      %477 = vmatpush1.msra.mxu0 0.0
      %478 = vmatprep.mubr.f32.mxu0 0.0
      %479 = vmatmul.mubr.f32.gmra.mrb[0].mxu0 %v278
      %v480 = vpop.f32.mrb[0].mxu0
      %v481 = vadd.f32 %v267, %v480
      %v482 = vpop.f32.mrb[0].mxu0
      %v483 = vadd.f32 %v271, %v482
      %484 = vmatprep.mubr.f32.mxu0 0.0
      %485 = vmatmul.mubr.f32.gmra.mrb[0].mxu0 %v281
      %v486 = vpop.f32.mrb[0].mxu0
      %v487 = vadd.f32 %v267, %v486
      %v488 = vpop.f32.mrb[0].mxu0
      %v489 = vadd.f32 %v271, %v488
      %490 = vmatprep.mubr.f32.mxu0 0.0
      %491 = vmatmul.mubr.f32.gmra.mrb[0].mxu0 %v284
      %v492 = vpop.f32.mrb[0].mxu0
      %v493 = vadd.f32 %v267, %v492
      %v494 = vpop.f32.mrb[0].mxu0
      %v495 = vadd.f32 %v271, %v494
      %496 = vmatprep.mubr.f32.mxu0 0.0
      %497 = vmatmul.mubr.f32.gmra.mrb[0].mxu0 %v287
      %v498 = vpop.f32.mrb[0].mxu0
      %v499 = vadd.f32 %v267, %v498
      %v500 = vpop.f32.mrb[0].mxu0
      %v501 = vadd.f32 %v271, %v500
      %502 = vmatprep.mubr.f32.mxu0 0.0
      %503 = vmatmul.mubr.f32.gmra.mrb[0].mxu0 %v290
      %v504 = vpop.f32.mrb[0].mxu0
      %v505 = vadd.f32 %v267, %v504
      %v506 = vpop.f32.mrb[0].mxu0
      %v507 = vadd.f32 %v271, %v506
      %508 = vmatprep.mubr.f32.mxu0 0.0
      %509 = vmatmul.mubr.f32.gmra.mrb[0].mxu0 %v293
      %v510 = vpop.f32.mrb[0].mxu0
      %v511 = vadd.f32 %v267, %v510
      %v512 = vpop.f32.mrb[0].mxu0
      %v513 = vadd.f32 %v271, %v512
      %514 = vmatprep.mubr.f32.mxu0 0.0
      %515 = vmatmul.mubr.f32.gmra.mrb[0].mxu0 %v296
      %v516 = vpop.f32.mrb[0].mxu0
      %v517 = vadd.f32 %v267, %v516
      %v518 = vpop.f32.mrb[0].mxu0
      %v519 = vadd.f32 %v271, %v518
      %520 = vmatprep.mubr.f32.mxu0 0.0
      %521 = vmatmul.mubr.f32.gmra.mrb[0].mxu0 %v299
      %v522 = vpop.f32.mrb[0].mxu0
      %v523 = vadd.f32 %v267, %v522
      %v524 = vpop.f32.mrb[0].mxu0
      %v525 = vadd.f32 %v271, %v524
      %526 = vdwg.mxu0
      %527 = vst [vmem:[#allocation4] sm:$0xff] %v368
      %528 = vst [vmem:[#allocation4 + $0x8] sm:$0xff] %v370
      %529 = vst [vmem:[#allocation4 + $0x10] sm:$0xff] %v481
      %530 = vst [vmem:[#allocation4 + $0x18] sm:$0xff] %v483
      %531 = vst [vmem:[#allocation4 + $0x20] sm:$0xff] %v374
      %532 = vst [vmem:[#allocation4 + $0x28] sm:$0xff] %v376
      %533 = vst [vmem:[#allocation4 + $0x30] sm:$0xff] %v487
      %534 = vst [vmem:[#allocation4 + $0x38] sm:$0xff] %v489
      %535 = vst [vmem:[#allocation4 + $0x40] sm:$0xff] %v380
      %536 = vst [vmem:[#allocation4 + $0x48] sm:$0xff] %v382
      %537 = vst [vmem:[#allocation4 + $0x50] sm:$0xff] %v493
      %538 = vst [vmem:[#allocation4 + $0x58] sm:$0xff] %v495
      %539 = vst [vmem:[#allocation4 + $0x60] sm:$0xff] %v386
      %540 = vst [vmem:[#allocation4 + $0x68] sm:$0xff] %v388
      %541 = vst [vmem:[#allocation4 + $0x70] sm:$0xff] %v499
      %542 = vst [vmem:[#allocation4 + $0x78] sm:$0xff] %v501
      %543 = vst [vmem:[#allocation4 + $0x80] sm:$0xff] %v392
      %544 = vst [vmem:[#allocation4 + $0x88] sm:$0xff] %v394
      %545 = vst [vmem:[#allocation4 + $0x90] sm:$0xff] %v505
      %546 = vst [vmem:[#allocation4 + $0x98] sm:$0xff] %v507
      %547 = vst [vmem:[#allocation4 + $0xa0] sm:$0xff] %v398
      %548 = vst [vmem:[#allocation4 + $0xa8] sm:$0xff] %v400
      %549 = vst [vmem:[#allocation4 + $0xb0] sm:$0xff] %v511
      %550 = vst [vmem:[#allocation4 + $0xb8] sm:$0xff] %v513
      %551 = vst [vmem:[#allocation4 + $0xc0] sm:$0xff] %v404
      %552 = vst [vmem:[#allocation4 + $0xc8] sm:$0xff] %v406
      %553 = vst [vmem:[#allocation4 + $0xd0] sm:$0xff] %v517
      %554 = vst [vmem:[#allocation4 + $0xd8] sm:$0xff] %v519
      %555 = vst [vmem:[#allocation4 + $0xe0] sm:$0xff] %v410
      %556 = vst [vmem:[#allocation4 + $0xe8] sm:$0xff] %v412
      %557 = vst [vmem:[#allocation4 + $0xf0] sm:$0xff] %v523
      %558 = vst [vmem:[#allocation4 + $0xf8] sm:$0xff] %v525
      %v559 = vld [vmem:[%s2] sm:$0xff]
      %v560 = vld [vmem:[%s2 + $0x8] sm:$0xff]
      %v561 = vld [vmem:[%s2 + $0x10] sm:$0xff]
      %v562 = vld [vmem:[%s2 + $0x18] sm:$0xff]
      %v563 = vld [vmem:[%s2 + $0x20] sm:$0xff]
      %v564 = vld [vmem:[%s2 + $0x28] sm:$0xff]
      %v565 = vld [vmem:[%s2 + $0x30] sm:$0xff]
      %v566 = vld [vmem:[%s2 + $0x38] sm:$0xff]
      %v567 = vld [vmem:[%s2 + $0x40] sm:$0xff]
      %v568 = vld [vmem:[%s2 + $0x48] sm:$0xff]
      %v569 = vld [vmem:[%s2 + $0x50] sm:$0xff]
      %v570 = vld [vmem:[%s2 + $0x58] sm:$0xff]
      %v571 = vld [vmem:[%s2 + $0x60] sm:$0xff]
      %v572 = vld [vmem:[%s2 + $0x68] sm:$0xff]
      %v573 = vld [vmem:[%s2 + $0x70] sm:$0xff]
      %v574 = vld [vmem:[%s2 + $0x78] sm:$0xff]
      %v575 = vld [vmem:[%s2 + $0x80] sm:$0xff]
      %v576 = vld [vmem:[%s2 + $0x88] sm:$0xff]
      %v577 = vld [vmem:[%s2 + $0x90] sm:$0xff]
      %v578 = vld [vmem:[%s2 + $0x98] sm:$0xff]
      %v579 = vld [vmem:[%s2 + $0xa0] sm:$0xff]
      %v580 = vld [vmem:[%s2 + $0xa8] sm:$0xff]
      %v581 = vld [vmem:[%s2 + $0xb0] sm:$0xff]
      %v582 = vld [vmem:[%s2 + $0xb8] sm:$0xff]
      %v583 = vld [vmem:[%s2 + $0xc0] sm:$0xff]
      %v584 = vld [vmem:[%s2 + $0xc8] sm:$0xff]
      %v585 = vld [vmem:[%s2 + $0xd0] sm:$0xff]
      %v586 = vld [vmem:[%s2 + $0xd8] sm:$0xff]
      %v587 = vld [vmem:[%s2 + $0xe0] sm:$0xff]
      %v588 = vld [vmem:[%s2 + $0xe8] sm:$0xff]
      %v589 = vld [vmem:[%s2 + $0xf0] sm:$0xff]
      %v590 = vld [vmem:[%s2 + $0xf8] sm:$0xff]
      %v591 = vld [vmem:[%s2 + $0x100] sm:$0xff]
      %v592 = vld [vmem:[%s2 + $0x108] sm:$0xff]
      %v593 = vld [vmem:[%s2 + $0x110] sm:$0xff]
      %v594 = vld [vmem:[%s2 + $0x118] sm:$0xff]
      %v595 = vld [vmem:[%s2 + $0x120] sm:$0xff]
      %v596 = vld [vmem:[%s2 + $0x128] sm:$0xff]
      %v597 = vld [vmem:[%s2 + $0x130] sm:$0xff]
      %v598 = vld [vmem:[%s2 + $0x138] sm:$0xff]
      %v599 = vld [vmem:[%s2 + $0x140] sm:$0xff]
      %v600 = vld [vmem:[%s2 + $0x148] sm:$0xff]
      %v601 = vld [vmem:[%s2 + $0x150] sm:$0xff]
      %v602 = vld [vmem:[%s2 + $0x158] sm:$0xff]
      %v603 = vld [vmem:[%s2 + $0x160] sm:$0xff]
      %v604 = vld [vmem:[%s2 + $0x168] sm:$0xff]
      %v605 = vld [vmem:[%s2 + $0x170] sm:$0xff]
      %v606 = vld [vmem:[%s2 + $0x178] sm:$0xff]
      %v607 = vld [vmem:[%s2 + $0x180] sm:$0xff]
      %v608 = vld [vmem:[%s2 + $0x188] sm:$0xff]
      %v609 = vld [vmem:[%s2 + $0x190] sm:$0xff]
      %v610 = vld [vmem:[%s2 + $0x198] sm:$0xff]
      %v611 = vld [vmem:[%s2 + $0x1a0] sm:$0xff]
      %v612 = vld [vmem:[%s2 + $0x1a8] sm:$0xff]
      %v613 = vld [vmem:[%s2 + $0x1b0] sm:$0xff]
      %v614 = vld [vmem:[%s2 + $0x1b8] sm:$0xff]
      %v615 = vld [vmem:[%s2 + $0x1c0] sm:$0xff]
      %v616 = vld [vmem:[%s2 + $0x1c8] sm:$0xff]
      %v617 = vld [vmem:[%s2 + $0x1d0] sm:$0xff]
      %v618 = vld [vmem:[%s2 + $0x1d8] sm:$0xff]
      %v619 = vld [vmem:[%s2 + $0x1e0] sm:$0xff]
      %v620 = vld [vmem:[%s2 + $0x1e8] sm:$0xff]
      %v621 = vld [vmem:[%s2 + $0x1f0] sm:$0xff]
      %v622 = vld [vmem:[%s2 + $0x1f8] sm:$0xff]
      %v623 = vld [vmem:[#allocation2] sm:$0xff]
      %v624 = vld [vmem:[#allocation3] sm:$0xff]
      %s625 = smul.u32 0, 4
      %s626 = smul.addr %s625, 8
      %s627 = scalar_lea.vmem [#allocation4], %s626
      %v628 = vld [vmem:[%s627] sm:$0xff]
      %v629 = vld [vmem:[%s627 + $0x8] sm:$0xff]
      %v630 = vld [vmem:[%s627 + $0x10] sm:$0xff]
      %v631 = vld [vmem:[%s627 + $0x18] sm:$0xff]
      %632 = vmatprep.subr.mxu0 %v560
      %633 = vmatpush1.msra.mxu0 %v559
      %634 = vmatprep.subr.mxu0 %v564
      %635 = vmatpush1.msra.mxu0 %v563
      %636 = vmatprep.subr.mxu0 %v568
      %637 = vmatpush1.msra.mxu0 %v567
      %638 = vmatprep.subr.mxu0 %v572
      %639 = vmatpush1.msra.mxu0 %v571
      %640 = vmatprep.subr.mxu0 %v576
      %641 = vmatpush1.msra.mxu0 %v575
      %642 = vmatprep.subr.mxu0 %v580
      %643 = vmatpush1.msra.mxu0 %v579
      %644 = vmatprep.subr.mxu0 %v584
      %645 = vmatpush1.msra.mxu0 %v583
      %646 = vmatprep.subr.mxu0 %v588
      %647 = vmatpush1.msra.mxu0 %v587
      %648 = vmatprep.subr.mxu0 %v592
      %649 = vmatpush1.msra.mxu0 %v591
      %650 = vmatprep.subr.mxu0 %v596
      %651 = vmatpush1.msra.mxu0 %v595
      %652 = vmatprep.subr.mxu0 %v600
      %653 = vmatpush1.msra.mxu0 %v599
      %654 = vmatprep.subr.mxu0 %v604
      %655 = vmatpush1.msra.mxu0 %v603
      %656 = vmatprep.subr.mxu0 %v608
      %657 = vmatpush1.msra.mxu0 %v607
      %658 = vmatprep.subr.mxu0 %v612
      %659 = vmatpush1.msra.mxu0 %v611
      %660 = vmatprep.subr.mxu0 %v616
      %661 = vmatpush1.msra.mxu0 %v615
      %662 = vmatprep.subr.mxu0 %v620
      %663 = vmatpush1.msra.mxu0 %v619
      %664 = vmatprep.subr.mxu0 0.0
      %665 = vmatpush1.msra.mxu0 0.0
      %666 = vmatprep.subr.mxu0 0.0
      %667 = vmatpush1.msra.mxu0 0.0
      %668 = vmatprep.subr.mxu0 0.0
      %669 = vmatpush1.msra.mxu0 0.0
      %670 = vmatprep.subr.mxu0 0.0
      %671 = vmatpush1.msra.mxu0 0.0
      %672 = vmatprep.subr.mxu0 0.0
      %673 = vmatpush1.msra.mxu0 0.0
      %674 = vmatprep.subr.mxu0 0.0
      %675 = vmatpush1.msra.mxu0 0.0
      %676 = vmatprep.subr.mxu0 0.0
      %677 = vmatpush1.msra.mxu0 0.0
      %678 = vmatprep.subr.mxu0 0.0
      %679 = vmatpush1.msra.mxu0 0.0
      %680 = vmatprep.subr.mxu0 0.0
      %681 = vmatpush1.msra.mxu0 0.0
      %682 = vmatprep.subr.mxu0 0.0
      %683 = vmatpush1.msra.mxu0 0.0
      %684 = vmatprep.subr.mxu0 0.0
      %685 = vmatpush1.msra.mxu0 0.0
      %686 = vmatprep.subr.mxu0 0.0
      %687 = vmatpush1.msra.mxu0 0.0
      %688 = vmatprep.subr.mxu0 0.0
      %689 = vmatpush1.msra.mxu0 0.0
      %690 = vmatprep.subr.mxu0 0.0
      %691 = vmatpush1.msra.mxu0 0.0
      %692 = vmatprep.subr.mxu0 0.0
      %693 = vmatpush1.msra.mxu0 0.0
      %694 = vmatprep.subr.mxu0 0.0
      %695 = vmatpush1.msra.mxu0 0.0
      %696 = vmatprep.mubr.f32.mxu0 0.0
      %697 = vmatmul.mubr.f32.gmra.mrb[0].mxu0 %v623
      %v698 = vpop.f32.mrb[0].mxu0
      %v699 = vadd.f32 0.0, %v698
      %v700 = vpop.f32.mrb[0].mxu0
      %v701 = vadd.f32 0.0, %v700
      %702 = vdwg.mxu0
      %703 = vmatprep.subr.mxu0 %v562
      %704 = vmatpush1.msra.mxu0 %v561
      %705 = vmatprep.subr.mxu0 %v566
      %706 = vmatpush1.msra.mxu0 %v565
      %707 = vmatprep.subr.mxu0 %v570
      %708 = vmatpush1.msra.mxu0 %v569
      %709 = vmatprep.subr.mxu0 %v574
      %710 = vmatpush1.msra.mxu0 %v573
      %711 = vmatprep.subr.mxu0 %v578
      %712 = vmatpush1.msra.mxu0 %v577
      %713 = vmatprep.subr.mxu0 %v582
      %714 = vmatpush1.msra.mxu0 %v581
      %715 = vmatprep.subr.mxu0 %v586
      %716 = vmatpush1.msra.mxu0 %v585
      %717 = vmatprep.subr.mxu0 %v590
      %718 = vmatpush1.msra.mxu0 %v589
      %719 = vmatprep.subr.mxu0 %v594
      %720 = vmatpush1.msra.mxu0 %v593
      %721 = vmatprep.subr.mxu0 %v598
      %722 = vmatpush1.msra.mxu0 %v597
      %723 = vmatprep.subr.mxu0 %v602
      %724 = vmatpush1.msra.mxu0 %v601
      %725 = vmatprep.subr.mxu0 %v606
      %726 = vmatpush1.msra.mxu0 %v605
      %727 = vmatprep.subr.mxu0 %v610
      %728 = vmatpush1.msra.mxu0 %v609
      %729 = vmatprep.subr.mxu0 %v614
      %730 = vmatpush1.msra.mxu0 %v613
      %731 = vmatprep.subr.mxu0 %v618
      %732 = vmatpush1.msra.mxu0 %v617
      %733 = vmatprep.subr.mxu0 %v622
      %734 = vmatpush1.msra.mxu0 %v621
      %735 = vmatprep.subr.mxu0 0.0
      %736 = vmatpush1.msra.mxu0 0.0
      %737 = vmatprep.subr.mxu0 0.0
      %738 = vmatpush1.msra.mxu0 0.0
      %739 = vmatprep.subr.mxu0 0.0
      %740 = vmatpush1.msra.mxu0 0.0
      %741 = vmatprep.subr.mxu0 0.0
      %742 = vmatpush1.msra.mxu0 0.0
      %743 = vmatprep.subr.mxu0 0.0
      %744 = vmatpush1.msra.mxu0 0.0
      %745 = vmatprep.subr.mxu0 0.0
      %746 = vmatpush1.msra.mxu0 0.0
      %747 = vmatprep.subr.mxu0 0.0
      %748 = vmatpush1.msra.mxu0 0.0
      %749 = vmatprep.subr.mxu0 0.0
      %750 = vmatpush1.msra.mxu0 0.0
      %751 = vmatprep.subr.mxu0 0.0
      %752 = vmatpush1.msra.mxu0 0.0
      %753 = vmatprep.subr.mxu0 0.0
      %754 = vmatpush1.msra.mxu0 0.0
      %755 = vmatprep.subr.mxu0 0.0
      %756 = vmatpush1.msra.mxu0 0.0
      %757 = vmatprep.subr.mxu0 0.0
      %758 = vmatpush1.msra.mxu0 0.0
      %759 = vmatprep.subr.mxu0 0.0
      %760 = vmatpush1.msra.mxu0 0.0
      %761 = vmatprep.subr.mxu0 0.0
      %762 = vmatpush1.msra.mxu0 0.0
      %763 = vmatprep.subr.mxu0 0.0
      %764 = vmatpush1.msra.mxu0 0.0
      %765 = vmatprep.subr.mxu0 0.0
      %766 = vmatpush1.msra.mxu0 0.0
      %767 = vmatprep.mubr.f32.mxu0 0.0
      %768 = vmatmul.mubr.f32.gmra.mrb[0].mxu0 %v623
      %v769 = vpop.f32.mrb[0].mxu0
      %v770 = vadd.f32 0.0, %v769
      %v771 = vpop.f32.mrb[0].mxu0
      %v772 = vadd.f32 0.0, %v771
      %773 = vdwg.mxu0
      %v774 = vadd.f32 %v628, %v699
      %v775 = vadd.f32 %v629, %v701
      %v776 = vadd.f32 %v630, %v770
      %v777 = vadd.f32 %v631, %v772
      %v778 = vxor.u32 %v774, 2147483648
      %v779 = vxor.u32 %v775, 2147483648
      %v780 = vxor.u32 %v776, 2147483648
      %v781 = vmul.f32 %v778, 1.442695
      %v782 = vpow.pop %v781
      %v783 = vmul.f32 %v779, 1.442695
      %v784 = vpow.pop %v783
      %v785 = vmul.f32 %v780, 1.442695
      %v786 = vpow.pop %v785
      %v787 = vadd.f32 %v782, 1.0
      %v788 = vadd.f32 %v784, 1.0
      %v789 = vadd.f32 %v786, 1.0
      %v790 = vrcp.pop %v787
      %v791 = vmul.f32 1.0, %v790
      %v792 = vrcp.pop %v788
      %v793 = vmul.f32 1.0, %v792
      %v794 = vrcp.pop %v789
      %v795 = vmul.f32 1.0, %v794
      %v796 = vtanh.pop %v777
      %v797 = vmul.f32 %v793, %v624
      %v798 = vmul.f32 %v791, %v796
      %v799 = vadd.f32 %v797, %v798
      %v800 = vtanh.pop %v799
      %v801 = vmul.f32 %v795, %v800
      %802 = vst [vmem:[%s230] sm:$0xff] %v801
      %s803 = smul.u32 1, 4
      %s804 = smul.addr %s803, 8
      %s805 = scalar_lea.vmem [#allocation4], %s804
      %v806 = vld [vmem:[%s805] sm:$0xff]
      %v807 = vld [vmem:[%s805 + $0x8] sm:$0xff]
      %v808 = vld [vmem:[%s805 + $0x10] sm:$0xff]
      %v809 = vld [vmem:[%s805 + $0x18] sm:$0xff]
      %810 = vmatprep.subr.mxu0 %v560
      %811 = vmatpush1.msra.mxu0 %v559
      %812 = vmatprep.subr.mxu0 %v564
      %813 = vmatpush1.msra.mxu0 %v563
      %814 = vmatprep.subr.mxu0 %v568
      %815 = vmatpush1.msra.mxu0 %v567
      %816 = vmatprep.subr.mxu0 %v572
      %817 = vmatpush1.msra.mxu0 %v571
      %818 = vmatprep.subr.mxu0 %v576
      %819 = vmatpush1.msra.mxu0 %v575
      %820 = vmatprep.subr.mxu0 %v580
      %821 = vmatpush1.msra.mxu0 %v579
      %822 = vmatprep.subr.mxu0 %v584
      %823 = vmatpush1.msra.mxu0 %v583
      %824 = vmatprep.subr.mxu0 %v588
      %825 = vmatpush1.msra.mxu0 %v587
      %826 = vmatprep.subr.mxu0 %v592
      %827 = vmatpush1.msra.mxu0 %v591
      %828 = vmatprep.subr.mxu0 %v596
      %829 = vmatpush1.msra.mxu0 %v595
      %830 = vmatprep.subr.mxu0 %v600
      %831 = vmatpush1.msra.mxu0 %v599
      %832 = vmatprep.subr.mxu0 %v604
      %833 = vmatpush1.msra.mxu0 %v603
      %834 = vmatprep.subr.mxu0 %v608
      %835 = vmatpush1.msra.mxu0 %v607
      %836 = vmatprep.subr.mxu0 %v612
      %837 = vmatpush1.msra.mxu0 %v611
      %838 = vmatprep.subr.mxu0 %v616
      %839 = vmatpush1.msra.mxu0 %v615
      %840 = vmatprep.subr.mxu0 %v620
      %841 = vmatpush1.msra.mxu0 %v619
      %842 = vmatprep.subr.mxu0 0.0
      %843 = vmatpush1.msra.mxu0 0.0
      %844 = vmatprep.subr.mxu0 0.0
      %845 = vmatpush1.msra.mxu0 0.0
      %846 = vmatprep.subr.mxu0 0.0
      %847 = vmatpush1.msra.mxu0 0.0
      %848 = vmatprep.subr.mxu0 0.0
      %849 = vmatpush1.msra.mxu0 0.0
      %850 = vmatprep.subr.mxu0 0.0
      %851 = vmatpush1.msra.mxu0 0.0
      %852 = vmatprep.subr.mxu0 0.0
      %853 = vmatpush1.msra.mxu0 0.0
      %854 = vmatprep.subr.mxu0 0.0
      %855 = vmatpush1.msra.mxu0 0.0
      %856 = vmatprep.subr.mxu0 0.0
      %857 = vmatpush1.msra.mxu0 0.0
      %858 = vmatprep.subr.mxu0 0.0
      %859 = vmatpush1.msra.mxu0 0.0
      %860 = vmatprep.subr.mxu0 0.0
      %861 = vmatpush1.msra.mxu0 0.0
      %862 = vmatprep.subr.mxu0 0.0
      %863 = vmatpush1.msra.mxu0 0.0
      %864 = vmatprep.subr.mxu0 0.0
      %865 = vmatpush1.msra.mxu0 0.0
      %866 = vmatprep.subr.mxu0 0.0
      %867 = vmatpush1.msra.mxu0 0.0
      %868 = vmatprep.subr.mxu0 0.0
      %869 = vmatpush1.msra.mxu0 0.0
      %870 = vmatprep.subr.mxu0 0.0
      %871 = vmatpush1.msra.mxu0 0.0
      %872 = vmatprep.subr.mxu0 0.0
      %873 = vmatpush1.msra.mxu0 0.0
      %874 = vmatprep.mubr.f32.mxu0 0.0
      %875 = vmatmul.mubr.f32.gmra.mrb[0].mxu0 %v801
      %v876 = vpop.f32.mrb[0].mxu0
      %v877 = vadd.f32 0.0, %v876
      %v878 = vpop.f32.mrb[0].mxu0
      %v879 = vadd.f32 0.0, %v878
      %880 = vdwg.mxu0
      %881 = vmatprep.subr.mxu0 %v562
      %882 = vmatpush1.msra.mxu0 %v561
      %883 = vmatprep.subr.mxu0 %v566
      %884 = vmatpush1.msra.mxu0 %v565
      %885 = vmatprep.subr.mxu0 %v570
      %886 = vmatpush1.msra.mxu0 %v569
      %887 = vmatprep.subr.mxu0 %v574
      %888 = vmatpush1.msra.mxu0 %v573
      %889 = vmatprep.subr.mxu0 %v578
      %890 = vmatpush1.msra.mxu0 %v577
      %891 = vmatprep.subr.mxu0 %v582
      %892 = vmatpush1.msra.mxu0 %v581
      %893 = vmatprep.subr.mxu0 %v586
      %894 = vmatpush1.msra.mxu0 %v585
      %895 = vmatprep.subr.mxu0 %v590
      %896 = vmatpush1.msra.mxu0 %v589
      %897 = vmatprep.subr.mxu0 %v594
      %898 = vmatpush1.msra.mxu0 %v593
      %899 = vmatprep.subr.mxu0 %v598
      %900 = vmatpush1.msra.mxu0 %v597
      %901 = vmatprep.subr.mxu0 %v602
      %902 = vmatpush1.msra.mxu0 %v601
      %903 = vmatprep.subr.mxu0 %v606
      %904 = vmatpush1.msra.mxu0 %v605
      %905 = vmatprep.subr.mxu0 %v610
      %906 = vmatpush1.msra.mxu0 %v609
      %907 = vmatprep.subr.mxu0 %v614
      %908 = vmatpush1.msra.mxu0 %v613
      %909 = vmatprep.subr.mxu0 %v618
      %910 = vmatpush1.msra.mxu0 %v617
      %911 = vmatprep.subr.mxu0 %v622
      %912 = vmatpush1.msra.mxu0 %v621
      %913 = vmatprep.subr.mxu0 0.0
      %914 = vmatpush1.msra.mxu0 0.0
      %915 = vmatprep.subr.mxu0 0.0
      %916 = vmatpush1.msra.mxu0 0.0
      %917 = vmatprep.subr.mxu0 0.0
      %918 = vmatpush1.msra.mxu0 0.0
      %919 = vmatprep.subr.mxu0 0.0
      %920 = vmatpush1.msra.mxu0 0.0
      %921 = vmatprep.subr.mxu0 0.0
      %922 = vmatpush1.msra.mxu0 0.0
      %923 = vmatprep.subr.mxu0 0.0
      %924 = vmatpush1.msra.mxu0 0.0
      %925 = vmatprep.subr.mxu0 0.0
      %926 = vmatpush1.msra.mxu0 0.0
      %927 = vmatprep.subr.mxu0 0.0
      %928 = vmatpush1.msra.mxu0 0.0
      %929 = vmatprep.subr.mxu0 0.0
      %930 = vmatpush1.msra.mxu0 0.0
      %931 = vmatprep.subr.mxu0 0.0
      %932 = vmatpush1.msra.mxu0 0.0
      %933 = vmatprep.subr.mxu0 0.0
      %934 = vmatpush1.msra.mxu0 0.0
      %935 = vmatprep.subr.mxu0 0.0
      %936 = vmatpush1.msra.mxu0 0.0
      %937 = vmatprep.subr.mxu0 0.0
      %938 = vmatpush1.msra.mxu0 0.0
      %939 = vmatprep.subr.mxu0 0.0
      %940 = vmatpush1.msra.mxu0 0.0
      %941 = vmatprep.subr.mxu0 0.0
      %942 = vmatpush1.msra.mxu0 0.0
      %943 = vmatprep.subr.mxu0 0.0
      %944 = vmatpush1.msra.mxu0 0.0
      %945 = vmatprep.mubr.f32.mxu0 0.0
      %946 = vmatmul.mubr.f32.gmra.mrb[0].mxu0 %v801
      %v947 = vpop.f32.mrb[0].mxu0
      %v948 = vadd.f32 0.0, %v947
      %v949 = vpop.f32.mrb[0].mxu0
      %v950 = vadd.f32 0.0, %v949
      %951 = vdwg.mxu0
      %v952 = vadd.f32 %v806, %v877
      %v953 = vadd.f32 %v807, %v879
      %v954 = vadd.f32 %v808, %v948
      %v955 = vadd.f32 %v809, %v950
      %v956 = vxor.u32 %v952, 2147483648
      %v957 = vxor.u32 %v953, 2147483648
      %v958 = vxor.u32 %v954, 2147483648
      %v959 = vmul.f32 %v956, 1.442695
      %v960 = vpow.pop %v959
      %v961 = vmul.f32 %v957, 1.442695
      %v962 = vpow.pop %v961
      %v963 = vmul.f32 %v958, 1.442695
      %v964 = vpow.pop %v963
      %v965 = vadd.f32 %v960, 1.0
      %v966 = vadd.f32 %v962, 1.0
      %v967 = vadd.f32 %v964, 1.0
      %v968 = vrcp.pop %v965
      %v969 = vmul.f32 1.0, %v968
      %v970 = vrcp.pop %v966
      %v971 = vmul.f32 1.0, %v970
      %v972 = vrcp.pop %v967
      %v973 = vmul.f32 1.0, %v972
      %v974 = vtanh.pop %v955
      %v975 = vmul.f32 %v971, %v799
      %v976 = vmul.f32 %v969, %v974
      %v977 = vadd.f32 %v975, %v976
      %v978 = vtanh.pop %v977
      %v979 = vmul.f32 %v973, %v978
      %s980 = scalar_lea.vmem %s230, 8
      %981 = vst [vmem:[%s980] sm:$0xff] %v979
      %s982 = smul.u32 2, 4
      %s983 = smul.addr %s982, 8
      %s984 = scalar_lea.vmem [#allocation4], %s983
      %v985 = vld [vmem:[%s984] sm:$0xff]
      %v986 = vld [vmem:[%s984 + $0x8] sm:$0xff]
      %v987 = vld [vmem:[%s984 + $0x10] sm:$0xff]
      %v988 = vld [vmem:[%s984 + $0x18] sm:$0xff]
      %989 = vmatprep.subr.mxu0 %v560
      %990 = vmatpush1.msra.mxu0 %v559
      %991 = vmatprep.subr.mxu0 %v564
      %992 = vmatpush1.msra.mxu0 %v563
      %993 = vmatprep.subr.mxu0 %v568
      %994 = vmatpush1.msra.mxu0 %v567
      %995 = vmatprep.subr.mxu0 %v572
      %996 = vmatpush1.msra.mxu0 %v571
      %997 = vmatprep.subr.mxu0 %v576
      %998 = vmatpush1.msra.mxu0 %v575
      %999 = vmatprep.subr.mxu0 %v580
      %1000 = vmatpush1.msra.mxu0 %v579
      %1001 = vmatprep.subr.mxu0 %v584
      %1002 = vmatpush1.msra.mxu0 %v583
      %1003 = vmatprep.subr.mxu0 %v588
      %1004 = vmatpush1.msra.mxu0 %v587
      %1005 = vmatprep.subr.mxu0 %v592
      %1006 = vmatpush1.msra.mxu0 %v591
      %1007 = vmatprep.subr.mxu0 %v596
      %1008 = vmatpush1.msra.mxu0 %v595
      %1009 = vmatprep.subr.mxu0 %v600
      %1010 = vmatpush1.msra.mxu0 %v599
      %1011 = vmatprep.subr.mxu0 %v604
      %1012 = vmatpush1.msra.mxu0 %v603
      %1013 = vmatprep.subr.mxu0 %v608
      %1014 = vmatpush1.msra.mxu0 %v607
      %1015 = vmatprep.subr.mxu0 %v612
      %1016 = vmatpush1.msra.mxu0 %v611
      %1017 = vmatprep.subr.mxu0 %v616
      %1018 = vmatpush1.msra.mxu0 %v615
      %1019 = vmatprep.subr.mxu0 %v620
      %1020 = vmatpush1.msra.mxu0 %v619
      %1021 = vmatprep.subr.mxu0 0.0
      %1022 = vmatpush1.msra.mxu0 0.0
      %1023 = vmatprep.subr.mxu0 0.0
      %1024 = vmatpush1.msra.mxu0 0.0
      %1025 = vmatprep.subr.mxu0 0.0
      %1026 = vmatpush1.msra.mxu0 0.0
      %1027 = vmatprep.subr.mxu0 0.0
      %1028 = vmatpush1.msra.mxu0 0.0
      %1029 = vmatprep.subr.mxu0 0.0
      %1030 = vmatpush1.msra.mxu0 0.0
      %1031 = vmatprep.subr.mxu0 0.0
      %1032 = vmatpush1.msra.mxu0 0.0
      %1033 = vmatprep.subr.mxu0 0.0
      %1034 = vmatpush1.msra.mxu0 0.0
      %1035 = vmatprep.subr.mxu0 0.0
      %1036 = vmatpush1.msra.mxu0 0.0
      %1037 = vmatprep.subr.mxu0 0.0
      %1038 = vmatpush1.msra.mxu0 0.0
      %1039 = vmatprep.subr.mxu0 0.0
      %1040 = vmatpush1.msra.mxu0 0.0
      %1041 = vmatprep.subr.mxu0 0.0
      %1042 = vmatpush1.msra.mxu0 0.0
      %1043 = vmatprep.subr.mxu0 0.0
      %1044 = vmatpush1.msra.mxu0 0.0
      %1045 = vmatprep.subr.mxu0 0.0
      %1046 = vmatpush1.msra.mxu0 0.0
      %1047 = vmatprep.subr.mxu0 0.0
      %1048 = vmatpush1.msra.mxu0 0.0
      %1049 = vmatprep.subr.mxu0 0.0
      %1050 = vmatpush1.msra.mxu0 0.0
      %1051 = vmatprep.subr.mxu0 0.0
      %1052 = vmatpush1.msra.mxu0 0.0
      %1053 = vmatprep.mubr.f32.mxu0 0.0
      %1054 = vmatmul.mubr.f32.gmra.mrb[0].mxu0 %v979
      %v1055 = vpop.f32.mrb[0].mxu0
      %v1056 = vadd.f32 0.0, %v1055
      %v1057 = vpop.f32.mrb[0].mxu0
      %v1058 = vadd.f32 0.0, %v1057
      %1059 = vdwg.mxu0
      %1060 = vmatprep.subr.mxu0 %v562
      %1061 = vmatpush1.msra.mxu0 %v561
      %1062 = vmatprep.subr.mxu0 %v566
      %1063 = vmatpush1.msra.mxu0 %v565
      %1064 = vmatprep.subr.mxu0 %v570
      %1065 = vmatpush1.msra.mxu0 %v569
      %1066 = vmatprep.subr.mxu0 %v574
      %1067 = vmatpush1.msra.mxu0 %v573
      %1068 = vmatprep.subr.mxu0 %v578
      %1069 = vmatpush1.msra.mxu0 %v577
      %1070 = vmatprep.subr.mxu0 %v582
      %1071 = vmatpush1.msra.mxu0 %v581
      %1072 = vmatprep.subr.mxu0 %v586
      %1073 = vmatpush1.msra.mxu0 %v585
      %1074 = vmatprep.subr.mxu0 %v590
      %1075 = vmatpush1.msra.mxu0 %v589
      %1076 = vmatprep.subr.mxu0 %v594
      %1077 = vmatpush1.msra.mxu0 %v593
      %1078 = vmatprep.subr.mxu0 %v598
      %1079 = vmatpush1.msra.mxu0 %v597
      %1080 = vmatprep.subr.mxu0 %v602
      %1081 = vmatpush1.msra.mxu0 %v601
      %1082 = vmatprep.subr.mxu0 %v606
      %1083 = vmatpush1.msra.mxu0 %v605
      %1084 = vmatprep.subr.mxu0 %v610
      %1085 = vmatpush1.msra.mxu0 %v609
      %1086 = vmatprep.subr.mxu0 %v614
      %1087 = vmatpush1.msra.mxu0 %v613
      %1088 = vmatprep.subr.mxu0 %v618
      %1089 = vmatpush1.msra.mxu0 %v617
      %1090 = vmatprep.subr.mxu0 %v622
      %1091 = vmatpush1.msra.mxu0 %v621
      %1092 = vmatprep.subr.mxu0 0.0
      %1093 = vmatpush1.msra.mxu0 0.0
      %1094 = vmatprep.subr.mxu0 0.0
      %1095 = vmatpush1.msra.mxu0 0.0
      %1096 = vmatprep.subr.mxu0 0.0
      %1097 = vmatpush1.msra.mxu0 0.0
      %1098 = vmatprep.subr.mxu0 0.0
      %1099 = vmatpush1.msra.mxu0 0.0
      %1100 = vmatprep.subr.mxu0 0.0
      %1101 = vmatpush1.msra.mxu0 0.0
      %1102 = vmatprep.subr.mxu0 0.0
      %1103 = vmatpush1.msra.mxu0 0.0
      %1104 = vmatprep.subr.mxu0 0.0
      %1105 = vmatpush1.msra.mxu0 0.0
      %1106 = vmatprep.subr.mxu0 0.0
      %1107 = vmatpush1.msra.mxu0 0.0
      %1108 = vmatprep.subr.mxu0 0.0
      %1109 = vmatpush1.msra.mxu0 0.0
      %1110 = vmatprep.subr.mxu0 0.0
      %1111 = vmatpush1.msra.mxu0 0.0
      %1112 = vmatprep.subr.mxu0 0.0
      %1113 = vmatpush1.msra.mxu0 0.0
      %1114 = vmatprep.subr.mxu0 0.0
      %1115 = vmatpush1.msra.mxu0 0.0
      %1116 = vmatprep.subr.mxu0 0.0
      %1117 = vmatpush1.msra.mxu0 0.0
      %1118 = vmatprep.subr.mxu0 0.0
      %1119 = vmatpush1.msra.mxu0 0.0
      %1120 = vmatprep.subr.mxu0 0.0
      %1121 = vmatpush1.msra.mxu0 0.0
      %1122 = vmatprep.subr.mxu0 0.0
      %1123 = vmatpush1.msra.mxu0 0.0
      %1124 = vmatprep.mubr.f32.mxu0 0.0
      %1125 = vmatmul.mubr.f32.gmra.mrb[0].mxu0 %v979
      %v1126 = vpop.f32.mrb[0].mxu0
      %v1127 = vadd.f32 0.0, %v1126
      %v1128 = vpop.f32.mrb[0].mxu0
      %v1129 = vadd.f32 0.0, %v1128
      %1130 = vdwg.mxu0
      %v1131 = vadd.f32 %v985, %v1056
      %v1132 = vadd.f32 %v986, %v1058
      %v1133 = vadd.f32 %v987, %v1127
      %v1134 = vadd.f32 %v988, %v1129
      %v1135 = vxor.u32 %v1131, 2147483648
      %v1136 = vxor.u32 %v1132, 2147483648
      %v1137 = vxor.u32 %v1133, 2147483648
      %v1138 = vmul.f32 %v1135, 1.442695
      %v1139 = vpow.pop %v1138
      %v1140 = vmul.f32 %v1136, 1.442695
      %v1141 = vpow.pop %v1140
      %v1142 = vmul.f32 %v1137, 1.442695
      %v1143 = vpow.pop %v1142
      %v1144 = vadd.f32 %v1139, 1.0
      %v1145 = vadd.f32 %v1141, 1.0
      %v1146 = vadd.f32 %v1143, 1.0
      %v1147 = vrcp.pop %v1144
      %v1148 = vmul.f32 1.0, %v1147
      %v1149 = vrcp.pop %v1145
      %v1150 = vmul.f32 1.0, %v1149
      %v1151 = vrcp.pop %v1146
      %v1152 = vmul.f32 1.0, %v1151
      %v1153 = vtanh.pop %v1134
      %v1154 = vmul.f32 %v1150, %v977
      %v1155 = vmul.f32 %v1148, %v1153
      %v1156 = vadd.f32 %v1154, %v1155
      %v1157 = vtanh.pop %v1156
      %v1158 = vmul.f32 %v1152, %v1157
      %s1159 = scalar_lea.vmem %s230, 16
      %1160 = vst [vmem:[%s1159] sm:$0xff] %v1158
      %s1161 = smul.u32 3, 4
      %s1162 = smul.addr %s1161, 8
      %s1163 = scalar_lea.vmem [#allocation4], %s1162
      %v1164 = vld [vmem:[%s1163] sm:$0xff]
      %v1165 = vld [vmem:[%s1163 + $0x8] sm:$0xff]
      %v1166 = vld [vmem:[%s1163 + $0x10] sm:$0xff]
      %v1167 = vld [vmem:[%s1163 + $0x18] sm:$0xff]
      %1168 = vmatprep.subr.mxu0 %v560
      %1169 = vmatpush1.msra.mxu0 %v559
      %1170 = vmatprep.subr.mxu0 %v564
      %1171 = vmatpush1.msra.mxu0 %v563
      %1172 = vmatprep.subr.mxu0 %v568
      %1173 = vmatpush1.msra.mxu0 %v567
      %1174 = vmatprep.subr.mxu0 %v572
      %1175 = vmatpush1.msra.mxu0 %v571
      %1176 = vmatprep.subr.mxu0 %v576
      %1177 = vmatpush1.msra.mxu0 %v575
      %1178 = vmatprep.subr.mxu0 %v580
      %1179 = vmatpush1.msra.mxu0 %v579
      %1180 = vmatprep.subr.mxu0 %v584
      %1181 = vmatpush1.msra.mxu0 %v583
      %1182 = vmatprep.subr.mxu0 %v588
      %1183 = vmatpush1.msra.mxu0 %v587
      %1184 = vmatprep.subr.mxu0 %v592
      %1185 = vmatpush1.msra.mxu0 %v591
      %1186 = vmatprep.subr.mxu0 %v596
      %1187 = vmatpush1.msra.mxu0 %v595
      %1188 = vmatprep.subr.mxu0 %v600
      %1189 = vmatpush1.msra.mxu0 %v599
      %1190 = vmatprep.subr.mxu0 %v604
      %1191 = vmatpush1.msra.mxu0 %v603
      %1192 = vmatprep.subr.mxu0 %v608
      %1193 = vmatpush1.msra.mxu0 %v607
      %1194 = vmatprep.subr.mxu0 %v612
      %1195 = vmatpush1.msra.mxu0 %v611
      %1196 = vmatprep.subr.mxu0 %v616
      %1197 = vmatpush1.msra.mxu0 %v615
      %1198 = vmatprep.subr.mxu0 %v620
      %1199 = vmatpush1.msra.mxu0 %v619
      %1200 = vmatprep.subr.mxu0 0.0
      %1201 = vmatpush1.msra.mxu0 0.0
      %1202 = vmatprep.subr.mxu0 0.0
      %1203 = vmatpush1.msra.mxu0 0.0
      %1204 = vmatprep.subr.mxu0 0.0
      %1205 = vmatpush1.msra.mxu0 0.0
      %1206 = vmatprep.subr.mxu0 0.0
      %1207 = vmatpush1.msra.mxu0 0.0
      %1208 = vmatprep.subr.mxu0 0.0
      %1209 = vmatpush1.msra.mxu0 0.0
      %1210 = vmatprep.subr.mxu0 0.0
      %1211 = vmatpush1.msra.mxu0 0.0
      %1212 = vmatprep.subr.mxu0 0.0
      %1213 = vmatpush1.msra.mxu0 0.0
      %1214 = vmatprep.subr.mxu0 0.0
      %1215 = vmatpush1.msra.mxu0 0.0
      %1216 = vmatprep.subr.mxu0 0.0
      %1217 = vmatpush1.msra.mxu0 0.0
      %1218 = vmatprep.subr.mxu0 0.0
      %1219 = vmatpush1.msra.mxu0 0.0
      %1220 = vmatprep.subr.mxu0 0.0
      %1221 = vmatpush1.msra.mxu0 0.0
      %1222 = vmatprep.subr.mxu0 0.0
      %1223 = vmatpush1.msra.mxu0 0.0
      %1224 = vmatprep.subr.mxu0 0.0
      %1225 = vmatpush1.msra.mxu0 0.0
      %1226 = vmatprep.subr.mxu0 0.0
      %1227 = vmatpush1.msra.mxu0 0.0
      %1228 = vmatprep.subr.mxu0 0.0
      %1229 = vmatpush1.msra.mxu0 0.0
      %1230 = vmatprep.subr.mxu0 0.0
      %1231 = vmatpush1.msra.mxu0 0.0
      %1232 = vmatprep.mubr.f32.mxu0 0.0
      %1233 = vmatmul.mubr.f32.gmra.mrb[0].mxu0 %v1158
      %v1234 = vpop.f32.mrb[0].mxu0
      %v1235 = vadd.f32 0.0, %v1234
      %v1236 = vpop.f32.mrb[0].mxu0
      %v1237 = vadd.f32 0.0, %v1236
      %1238 = vdwg.mxu0
      %1239 = vmatprep.subr.mxu0 %v562
      %1240 = vmatpush1.msra.mxu0 %v561
      %1241 = vmatprep.subr.mxu0 %v566
      %1242 = vmatpush1.msra.mxu0 %v565
      %1243 = vmatprep.subr.mxu0 %v570
      %1244 = vmatpush1.msra.mxu0 %v569
      %1245 = vmatprep.subr.mxu0 %v574
      %1246 = vmatpush1.msra.mxu0 %v573
      %1247 = vmatprep.subr.mxu0 %v578
      %1248 = vmatpush1.msra.mxu0 %v577
      %1249 = vmatprep.subr.mxu0 %v582
      %1250 = vmatpush1.msra.mxu0 %v581
      %1251 = vmatprep.subr.mxu0 %v586
      %1252 = vmatpush1.msra.mxu0 %v585
      %1253 = vmatprep.subr.mxu0 %v590
      %1254 = vmatpush1.msra.mxu0 %v589
      %1255 = vmatprep.subr.mxu0 %v594
      %1256 = vmatpush1.msra.mxu0 %v593
      %1257 = vmatprep.subr.mxu0 %v598
      %1258 = vmatpush1.msra.mxu0 %v597
      %1259 = vmatprep.subr.mxu0 %v602
      %1260 = vmatpush1.msra.mxu0 %v601
      %1261 = vmatprep.subr.mxu0 %v606
      %1262 = vmatpush1.msra.mxu0 %v605
      %1263 = vmatprep.subr.mxu0 %v610
      %1264 = vmatpush1.msra.mxu0 %v609
      %1265 = vmatprep.subr.mxu0 %v614
      %1266 = vmatpush1.msra.mxu0 %v613
      %1267 = vmatprep.subr.mxu0 %v618
      %1268 = vmatpush1.msra.mxu0 %v617
      %1269 = vmatprep.subr.mxu0 %v622
      %1270 = vmatpush1.msra.mxu0 %v621
      %1271 = vmatprep.subr.mxu0 0.0
      %1272 = vmatpush1.msra.mxu0 0.0
      %1273 = vmatprep.subr.mxu0 0.0
      %1274 = vmatpush1.msra.mxu0 0.0
      %1275 = vmatprep.subr.mxu0 0.0
      %1276 = vmatpush1.msra.mxu0 0.0
      %1277 = vmatprep.subr.mxu0 0.0
      %1278 = vmatpush1.msra.mxu0 0.0
      %1279 = vmatprep.subr.mxu0 0.0
      %1280 = vmatpush1.msra.mxu0 0.0
      %1281 = vmatprep.subr.mxu0 0.0
      %1282 = vmatpush1.msra.mxu0 0.0
      %1283 = vmatprep.subr.mxu0 0.0
      %1284 = vmatpush1.msra.mxu0 0.0
      %1285 = vmatprep.subr.mxu0 0.0
      %1286 = vmatpush1.msra.mxu0 0.0
      %1287 = vmatprep.subr.mxu0 0.0
      %1288 = vmatpush1.msra.mxu0 0.0
      %1289 = vmatprep.subr.mxu0 0.0
      %1290 = vmatpush1.msra.mxu0 0.0
      %1291 = vmatprep.subr.mxu0 0.0
      %1292 = vmatpush1.msra.mxu0 0.0
      %1293 = vmatprep.subr.mxu0 0.0
      %1294 = vmatpush1.msra.mxu0 0.0
      %1295 = vmatprep.subr.mxu0 0.0
      %1296 = vmatpush1.msra.mxu0 0.0
      %1297 = vmatprep.subr.mxu0 0.0
      %1298 = vmatpush1.msra.mxu0 0.0
      %1299 = vmatprep.subr.mxu0 0.0
      %1300 = vmatpush1.msra.mxu0 0.0
      %1301 = vmatprep.subr.mxu0 0.0
      %1302 = vmatpush1.msra.mxu0 0.0
      %1303 = vmatprep.mubr.f32.mxu0 0.0
      %1304 = vmatmul.mubr.f32.gmra.mrb[0].mxu0 %v1158
      %v1305 = vpop.f32.mrb[0].mxu0
      %v1306 = vadd.f32 0.0, %v1305
      %v1307 = vpop.f32.mrb[0].mxu0
      %v1308 = vadd.f32 0.0, %v1307
      %1309 = vdwg.mxu0
      %v1310 = vadd.f32 %v1164, %v1235
      %v1311 = vadd.f32 %v1165, %v1237
      %v1312 = vadd.f32 %v1166, %v1306
      %v1313 = vadd.f32 %v1167, %v1308
      %v1314 = vxor.u32 %v1310, 2147483648
      %v1315 = vxor.u32 %v1311, 2147483648
      %v1316 = vxor.u32 %v1312, 2147483648
      %v1317 = vmul.f32 %v1314, 1.442695
      %v1318 = vpow.pop %v1317
      %v1319 = vmul.f32 %v1315, 1.442695
      %v1320 = vpow.pop %v1319
      %v1321 = vmul.f32 %v1316, 1.442695
      %v1322 = vpow.pop %v1321
      %v1323 = vadd.f32 %v1318, 1.0
      %v1324 = vadd.f32 %v1320, 1.0
      %v1325 = vadd.f32 %v1322, 1.0
      %v1326 = vrcp.pop %v1323
      %v1327 = vmul.f32 1.0, %v1326
      %v1328 = vrcp.pop %v1324
      %v1329 = vmul.f32 1.0, %v1328
      %v1330 = vrcp.pop %v1325
      %v1331 = vmul.f32 1.0, %v1330
      %v1332 = vtanh.pop %v1313
      %v1333 = vmul.f32 %v1329, %v1156
      %v1334 = vmul.f32 %v1327, %v1332
      %v1335 = vadd.f32 %v1333, %v1334
      %v1336 = vtanh.pop %v1335
      %v1337 = vmul.f32 %v1331, %v1336
      %s1338 = scalar_lea.vmem %s230, 24
      %1339 = vst [vmem:[%s1338] sm:$0xff] %v1337
      %s1340 = smul.u32 4, 4
      %s1341 = smul.addr %s1340, 8
      %s1342 = scalar_lea.vmem [#allocation4], %s1341
      %v1343 = vld [vmem:[%s1342] sm:$0xff]
      %v1344 = vld [vmem:[%s1342 + $0x8] sm:$0xff]
      %v1345 = vld [vmem:[%s1342 + $0x10] sm:$0xff]
      %v1346 = vld [vmem:[%s1342 + $0x18] sm:$0xff]
      %1347 = vmatprep.subr.mxu0 %v560
      %1348 = vmatpush1.msra.mxu0 %v559
      %1349 = vmatprep.subr.mxu0 %v564
      %1350 = vmatpush1.msra.mxu0 %v563
      %1351 = vmatprep.subr.mxu0 %v568
      %1352 = vmatpush1.msra.mxu0 %v567
      %1353 = vmatprep.subr.mxu0 %v572
      %1354 = vmatpush1.msra.mxu0 %v571
      %1355 = vmatprep.subr.mxu0 %v576
      %1356 = vmatpush1.msra.mxu0 %v575
      %1357 = vmatprep.subr.mxu0 %v580
      %1358 = vmatpush1.msra.mxu0 %v579
      %1359 = vmatprep.subr.mxu0 %v584
      %1360 = vmatpush1.msra.mxu0 %v583
      %1361 = vmatprep.subr.mxu0 %v588
      %1362 = vmatpush1.msra.mxu0 %v587
      %1363 = vmatprep.subr.mxu0 %v592
      %1364 = vmatpush1.msra.mxu0 %v591
      %1365 = vmatprep.subr.mxu0 %v596
      %1366 = vmatpush1.msra.mxu0 %v595
      %1367 = vmatprep.subr.mxu0 %v600
      %1368 = vmatpush1.msra.mxu0 %v599
      %1369 = vmatprep.subr.mxu0 %v604
      %1370 = vmatpush1.msra.mxu0 %v603
      %1371 = vmatprep.subr.mxu0 %v608
      %1372 = vmatpush1.msra.mxu0 %v607
      %1373 = vmatprep.subr.mxu0 %v612
      %1374 = vmatpush1.msra.mxu0 %v611
      %1375 = vmatprep.subr.mxu0 %v616
      %1376 = vmatpush1.msra.mxu0 %v615
      %1377 = vmatprep.subr.mxu0 %v620
      %1378 = vmatpush1.msra.mxu0 %v619
      %1379 = vmatprep.subr.mxu0 0.0
      %1380 = vmatpush1.msra.mxu0 0.0
      %1381 = vmatprep.subr.mxu0 0.0
      %1382 = vmatpush1.msra.mxu0 0.0
      %1383 = vmatprep.subr.mxu0 0.0
      %1384 = vmatpush1.msra.mxu0 0.0
      %1385 = vmatprep.subr.mxu0 0.0
      %1386 = vmatpush1.msra.mxu0 0.0
      %1387 = vmatprep.subr.mxu0 0.0
      %1388 = vmatpush1.msra.mxu0 0.0
      %1389 = vmatprep.subr.mxu0 0.0
      %1390 = vmatpush1.msra.mxu0 0.0
      %1391 = vmatprep.subr.mxu0 0.0
      %1392 = vmatpush1.msra.mxu0 0.0
      %1393 = vmatprep.subr.mxu0 0.0
      %1394 = vmatpush1.msra.mxu0 0.0
      %1395 = vmatprep.subr.mxu0 0.0
      %1396 = vmatpush1.msra.mxu0 0.0
      %1397 = vmatprep.subr.mxu0 0.0
      %1398 = vmatpush1.msra.mxu0 0.0
      %1399 = vmatprep.subr.mxu0 0.0
      %1400 = vmatpush1.msra.mxu0 0.0
      %1401 = vmatprep.subr.mxu0 0.0
      %1402 = vmatpush1.msra.mxu0 0.0
      %1403 = vmatprep.subr.mxu0 0.0
      %1404 = vmatpush1.msra.mxu0 0.0
      %1405 = vmatprep.subr.mxu0 0.0
      %1406 = vmatpush1.msra.mxu0 0.0
      %1407 = vmatprep.subr.mxu0 0.0
      %1408 = vmatpush1.msra.mxu0 0.0
      %1409 = vmatprep.subr.mxu0 0.0
      %1410 = vmatpush1.msra.mxu0 0.0
      %1411 = vmatprep.mubr.f32.mxu0 0.0
      %1412 = vmatmul.mubr.f32.gmra.mrb[0].mxu0 %v1337
      %v1413 = vpop.f32.mrb[0].mxu0
      %v1414 = vadd.f32 0.0, %v1413
      %v1415 = vpop.f32.mrb[0].mxu0
      %v1416 = vadd.f32 0.0, %v1415
      %1417 = vdwg.mxu0
      %1418 = vmatprep.subr.mxu0 %v562
      %1419 = vmatpush1.msra.mxu0 %v561
      %1420 = vmatprep.subr.mxu0 %v566
      %1421 = vmatpush1.msra.mxu0 %v565
      %1422 = vmatprep.subr.mxu0 %v570
      %1423 = vmatpush1.msra.mxu0 %v569
      %1424 = vmatprep.subr.mxu0 %v574
      %1425 = vmatpush1.msra.mxu0 %v573
      %1426 = vmatprep.subr.mxu0 %v578
      %1427 = vmatpush1.msra.mxu0 %v577
      %1428 = vmatprep.subr.mxu0 %v582
      %1429 = vmatpush1.msra.mxu0 %v581
      %1430 = vmatprep.subr.mxu0 %v586
      %1431 = vmatpush1.msra.mxu0 %v585
      %1432 = vmatprep.subr.mxu0 %v590
      %1433 = vmatpush1.msra.mxu0 %v589
      %1434 = vmatprep.subr.mxu0 %v594
      %1435 = vmatpush1.msra.mxu0 %v593
      %1436 = vmatprep.subr.mxu0 %v598
      %1437 = vmatpush1.msra.mxu0 %v597
      %1438 = vmatprep.subr.mxu0 %v602
      %1439 = vmatpush1.msra.mxu0 %v601
      %1440 = vmatprep.subr.mxu0 %v606
      %1441 = vmatpush1.msra.mxu0 %v605
      %1442 = vmatprep.subr.mxu0 %v610
      %1443 = vmatpush1.msra.mxu0 %v609
      %1444 = vmatprep.subr.mxu0 %v614
      %1445 = vmatpush1.msra.mxu0 %v613
      %1446 = vmatprep.subr.mxu0 %v618
      %1447 = vmatpush1.msra.mxu0 %v617
      %1448 = vmatprep.subr.mxu0 %v622
      %1449 = vmatpush1.msra.mxu0 %v621
      %1450 = vmatprep.subr.mxu0 0.0
      %1451 = vmatpush1.msra.mxu0 0.0
      %1452 = vmatprep.subr.mxu0 0.0
      %1453 = vmatpush1.msra.mxu0 0.0
      %1454 = vmatprep.subr.mxu0 0.0
      %1455 = vmatpush1.msra.mxu0 0.0
      %1456 = vmatprep.subr.mxu0 0.0
      %1457 = vmatpush1.msra.mxu0 0.0
      %1458 = vmatprep.subr.mxu0 0.0
      %1459 = vmatpush1.msra.mxu0 0.0
      %1460 = vmatprep.subr.mxu0 0.0
      %1461 = vmatpush1.msra.mxu0 0.0
      %1462 = vmatprep.subr.mxu0 0.0
      %1463 = vmatpush1.msra.mxu0 0.0
      %1464 = vmatprep.subr.mxu0 0.0
      %1465 = vmatpush1.msra.mxu0 0.0
      %1466 = vmatprep.subr.mxu0 0.0
      %1467 = vmatpush1.msra.mxu0 0.0
      %1468 = vmatprep.subr.mxu0 0.0
      %1469 = vmatpush1.msra.mxu0 0.0
      %1470 = vmatprep.subr.mxu0 0.0
      %1471 = vmatpush1.msra.mxu0 0.0
      %1472 = vmatprep.subr.mxu0 0.0
      %1473 = vmatpush1.msra.mxu0 0.0
      %1474 = vmatprep.subr.mxu0 0.0
      %1475 = vmatpush1.msra.mxu0 0.0
      %1476 = vmatprep.subr.mxu0 0.0
      %1477 = vmatpush1.msra.mxu0 0.0
      %1478 = vmatprep.subr.mxu0 0.0
      %1479 = vmatpush1.msra.mxu0 0.0
      %1480 = vmatprep.subr.mxu0 0.0
      %1481 = vmatpush1.msra.mxu0 0.0
      %1482 = vmatprep.mubr.f32.mxu0 0.0
      %1483 = vmatmul.mubr.f32.gmra.mrb[0].mxu0 %v1337
      %v1484 = vpop.f32.mrb[0].mxu0
      %v1485 = vadd.f32 0.0, %v1484
      %v1486 = vpop.f32.mrb[0].mxu0
      %v1487 = vadd.f32 0.0, %v1486
      %1488 = vdwg.mxu0
      %v1489 = vadd.f32 %v1343, %v1414
      %v1490 = vadd.f32 %v1344, %v1416
      %v1491 = vadd.f32 %v1345, %v1485
      %v1492 = vadd.f32 %v1346, %v1487
      %v1493 = vxor.u32 %v1489, 2147483648
      %v1494 = vxor.u32 %v1490, 2147483648
      %v1495 = vxor.u32 %v1491, 2147483648
      %v1496 = vmul.f32 %v1493, 1.442695
      %v1497 = vpow.pop %v1496
      %v1498 = vmul.f32 %v1494, 1.442695
      %v1499 = vpow.pop %v1498
      %v1500 = vmul.f32 %v1495, 1.442695
      %v1501 = vpow.pop %v1500
      %v1502 = vadd.f32 %v1497, 1.0
      %v1503 = vadd.f32 %v1499, 1.0
      %v1504 = vadd.f32 %v1501, 1.0
      %v1505 = vrcp.pop %v1502
      %v1506 = vmul.f32 1.0, %v1505
      %v1507 = vrcp.pop %v1503
      %v1508 = vmul.f32 1.0, %v1507
      %v1509 = vrcp.pop %v1504
      %v1510 = vmul.f32 1.0, %v1509
      %v1511 = vtanh.pop %v1492
      %v1512 = vmul.f32 %v1508, %v1335
      %v1513 = vmul.f32 %v1506, %v1511
      %v1514 = vadd.f32 %v1512, %v1513
      %v1515 = vtanh.pop %v1514
      %v1516 = vmul.f32 %v1510, %v1515
      %s1517 = scalar_lea.vmem %s230, 32
      %1518 = vst [vmem:[%s1517] sm:$0xff] %v1516
      %s1519 = smul.u32 5, 4
      %s1520 = smul.addr %s1519, 8
      %s1521 = scalar_lea.vmem [#allocation4], %s1520
      %v1522 = vld [vmem:[%s1521] sm:$0xff]
      %v1523 = vld [vmem:[%s1521 + $0x8] sm:$0xff]
      %v1524 = vld [vmem:[%s1521 + $0x10] sm:$0xff]
      %v1525 = vld [vmem:[%s1521 + $0x18] sm:$0xff]
      %1526 = vmatprep.subr.mxu0 %v560
      %1527 = vmatpush1.msra.mxu0 %v559
      %1528 = vmatprep.subr.mxu0 %v564
      %1529 = vmatpush1.msra.mxu0 %v563
      %1530 = vmatprep.subr.mxu0 %v568
      %1531 = vmatpush1.msra.mxu0 %v567
      %1532 = vmatprep.subr.mxu0 %v572
      %1533 = vmatpush1.msra.mxu0 %v571
      %1534 = vmatprep.subr.mxu0 %v576
      %1535 = vmatpush1.msra.mxu0 %v575
      %1536 = vmatprep.subr.mxu0 %v580
      %1537 = vmatpush1.msra.mxu0 %v579
      %1538 = vmatprep.subr.mxu0 %v584
      %1539 = vmatpush1.msra.mxu0 %v583
      %1540 = vmatprep.subr.mxu0 %v588
      %1541 = vmatpush1.msra.mxu0 %v587
      %1542 = vmatprep.subr.mxu0 %v592
      %1543 = vmatpush1.msra.mxu0 %v591
      %1544 = vmatprep.subr.mxu0 %v596
      %1545 = vmatpush1.msra.mxu0 %v595
      %1546 = vmatprep.subr.mxu0 %v600
      %1547 = vmatpush1.msra.mxu0 %v599
      %1548 = vmatprep.subr.mxu0 %v604
      %1549 = vmatpush1.msra.mxu0 %v603
      %1550 = vmatprep.subr.mxu0 %v608
      %1551 = vmatpush1.msra.mxu0 %v607
      %1552 = vmatprep.subr.mxu0 %v612
      %1553 = vmatpush1.msra.mxu0 %v611
      %1554 = vmatprep.subr.mxu0 %v616
      %1555 = vmatpush1.msra.mxu0 %v615
      %1556 = vmatprep.subr.mxu0 %v620
      %1557 = vmatpush1.msra.mxu0 %v619
      %1558 = vmatprep.subr.mxu0 0.0
      %1559 = vmatpush1.msra.mxu0 0.0
      %1560 = vmatprep.subr.mxu0 0.0
      %1561 = vmatpush1.msra.mxu0 0.0
      %1562 = vmatprep.subr.mxu0 0.0
      %1563 = vmatpush1.msra.mxu0 0.0
      %1564 = vmatprep.subr.mxu0 0.0
      %1565 = vmatpush1.msra.mxu0 0.0
      %1566 = vmatprep.subr.mxu0 0.0
      %1567 = vmatpush1.msra.mxu0 0.0
      %1568 = vmatprep.subr.mxu0 0.0
      %1569 = vmatpush1.msra.mxu0 0.0
      %1570 = vmatprep.subr.mxu0 0.0
      %1571 = vmatpush1.msra.mxu0 0.0
      %1572 = vmatprep.subr.mxu0 0.0
      %1573 = vmatpush1.msra.mxu0 0.0
      %1574 = vmatprep.subr.mxu0 0.0
      %1575 = vmatpush1.msra.mxu0 0.0
      %1576 = vmatprep.subr.mxu0 0.0
      %1577 = vmatpush1.msra.mxu0 0.0
      %1578 = vmatprep.subr.mxu0 0.0
      %1579 = vmatpush1.msra.mxu0 0.0
      %1580 = vmatprep.subr.mxu0 0.0
      %1581 = vmatpush1.msra.mxu0 0.0
      %1582 = vmatprep.subr.mxu0 0.0
      %1583 = vmatpush1.msra.mxu0 0.0
      %1584 = vmatprep.subr.mxu0 0.0
      %1585 = vmatpush1.msra.mxu0 0.0
      %1586 = vmatprep.subr.mxu0 0.0
      %1587 = vmatpush1.msra.mxu0 0.0
      %1588 = vmatprep.subr.mxu0 0.0
      %1589 = vmatpush1.msra.mxu0 0.0
      %1590 = vmatprep.mubr.f32.mxu0 0.0
      %1591 = vmatmul.mubr.f32.gmra.mrb[0].mxu0 %v1516
      %v1592 = vpop.f32.mrb[0].mxu0
      %v1593 = vadd.f32 0.0, %v1592
      %v1594 = vpop.f32.mrb[0].mxu0
      %v1595 = vadd.f32 0.0, %v1594
      %1596 = vdwg.mxu0
      %1597 = vmatprep.subr.mxu0 %v562
      %1598 = vmatpush1.msra.mxu0 %v561
      %1599 = vmatprep.subr.mxu0 %v566
      %1600 = vmatpush1.msra.mxu0 %v565
      %1601 = vmatprep.subr.mxu0 %v570
      %1602 = vmatpush1.msra.mxu0 %v569
      %1603 = vmatprep.subr.mxu0 %v574
      %1604 = vmatpush1.msra.mxu0 %v573
      %1605 = vmatprep.subr.mxu0 %v578
      %1606 = vmatpush1.msra.mxu0 %v577
      %1607 = vmatprep.subr.mxu0 %v582
      %1608 = vmatpush1.msra.mxu0 %v581
      %1609 = vmatprep.subr.mxu0 %v586
      %1610 = vmatpush1.msra.mxu0 %v585
      %1611 = vmatprep.subr.mxu0 %v590
      %1612 = vmatpush1.msra.mxu0 %v589
      %1613 = vmatprep.subr.mxu0 %v594
      %1614 = vmatpush1.msra.mxu0 %v593
      %1615 = vmatprep.subr.mxu0 %v598
      %1616 = vmatpush1.msra.mxu0 %v597
      %1617 = vmatprep.subr.mxu0 %v602
      %1618 = vmatpush1.msra.mxu0 %v601
      %1619 = vmatprep.subr.mxu0 %v606
      %1620 = vmatpush1.msra.mxu0 %v605
      %1621 = vmatprep.subr.mxu0 %v610
      %1622 = vmatpush1.msra.mxu0 %v609
      %1623 = vmatprep.subr.mxu0 %v614
      %1624 = vmatpush1.msra.mxu0 %v613
      %1625 = vmatprep.subr.mxu0 %v618
      %1626 = vmatpush1.msra.mxu0 %v617
      %1627 = vmatprep.subr.mxu0 %v622
      %1628 = vmatpush1.msra.mxu0 %v621
      %1629 = vmatprep.subr.mxu0 0.0
      %1630 = vmatpush1.msra.mxu0 0.0
      %1631 = vmatprep.subr.mxu0 0.0
      %1632 = vmatpush1.msra.mxu0 0.0
      %1633 = vmatprep.subr.mxu0 0.0
      %1634 = vmatpush1.msra.mxu0 0.0
      %1635 = vmatprep.subr.mxu0 0.0
      %1636 = vmatpush1.msra.mxu0 0.0
      %1637 = vmatprep.subr.mxu0 0.0
      %1638 = vmatpush1.msra.mxu0 0.0
      %1639 = vmatprep.subr.mxu0 0.0
      %1640 = vmatpush1.msra.mxu0 0.0
      %1641 = vmatprep.subr.mxu0 0.0
      %1642 = vmatpush1.msra.mxu0 0.0
      %1643 = vmatprep.subr.mxu0 0.0
      %1644 = vmatpush1.msra.mxu0 0.0
      %1645 = vmatprep.subr.mxu0 0.0
      %1646 = vmatpush1.msra.mxu0 0.0
      %1647 = vmatprep.subr.mxu0 0.0
      %1648 = vmatpush1.msra.mxu0 0.0
      %1649 = vmatprep.subr.mxu0 0.0
      %1650 = vmatpush1.msra.mxu0 0.0
      %1651 = vmatprep.subr.mxu0 0.0
      %1652 = vmatpush1.msra.mxu0 0.0
      %1653 = vmatprep.subr.mxu0 0.0
      %1654 = vmatpush1.msra.mxu0 0.0
      %1655 = vmatprep.subr.mxu0 0.0
      %1656 = vmatpush1.msra.mxu0 0.0
      %1657 = vmatprep.subr.mxu0 0.0
      %1658 = vmatpush1.msra.mxu0 0.0
      %1659 = vmatprep.subr.mxu0 0.0
      %1660 = vmatpush1.msra.mxu0 0.0
      %1661 = vmatprep.mubr.f32.mxu0 0.0
      %1662 = vmatmul.mubr.f32.gmra.mrb[0].mxu0 %v1516
      %v1663 = vpop.f32.mrb[0].mxu0
      %v1664 = vadd.f32 0.0, %v1663
      %v1665 = vpop.f32.mrb[0].mxu0
      %v1666 = vadd.f32 0.0, %v1665
      %1667 = vdwg.mxu0
      %v1668 = vadd.f32 %v1522, %v1593
      %v1669 = vadd.f32 %v1523, %v1595
      %v1670 = vadd.f32 %v1524, %v1664
      %v1671 = vadd.f32 %v1525, %v1666
      %v1672 = vxor.u32 %v1668, 2147483648
      %v1673 = vxor.u32 %v1669, 2147483648
      %v1674 = vxor.u32 %v1670, 2147483648
      %v1675 = vmul.f32 %v1672, 1.442695
      %v1676 = vpow.pop %v1675
      %v1677 = vmul.f32 %v1673, 1.442695
      %v1678 = vpow.pop %v1677
      %v1679 = vmul.f32 %v1674, 1.442695
      %v1680 = vpow.pop %v1679
      %v1681 = vadd.f32 %v1676, 1.0
      %v1682 = vadd.f32 %v1678, 1.0
      %v1683 = vadd.f32 %v1680, 1.0
      %v1684 = vrcp.pop %v1681
      %v1685 = vmul.f32 1.0, %v1684
      %v1686 = vrcp.pop %v1682
      %v1687 = vmul.f32 1.0, %v1686
      %v1688 = vrcp.pop %v1683
      %v1689 = vmul.f32 1.0, %v1688
      %v1690 = vtanh.pop %v1671
      %v1691 = vmul.f32 %v1687, %v1514
      %v1692 = vmul.f32 %v1685, %v1690
      %v1693 = vadd.f32 %v1691, %v1692
      %v1694 = vtanh.pop %v1693
      %v1695 = vmul.f32 %v1689, %v1694
      %s1696 = scalar_lea.vmem %s230, 40
      %1697 = vst [vmem:[%s1696] sm:$0xff] %v1695
      %s1698 = smul.u32 6, 4
      %s1699 = smul.addr %s1698, 8
      %s1700 = scalar_lea.vmem [#allocation4], %s1699
      %v1701 = vld [vmem:[%s1700] sm:$0xff]
      %v1702 = vld [vmem:[%s1700 + $0x8] sm:$0xff]
      %v1703 = vld [vmem:[%s1700 + $0x10] sm:$0xff]
      %v1704 = vld [vmem:[%s1700 + $0x18] sm:$0xff]
      %1705 = vmatprep.subr.mxu0 %v560
      %1706 = vmatpush1.msra.mxu0 %v559
      %1707 = vmatprep.subr.mxu0 %v564
      %1708 = vmatpush1.msra.mxu0 %v563
      %1709 = vmatprep.subr.mxu0 %v568
      %1710 = vmatpush1.msra.mxu0 %v567
      %1711 = vmatprep.subr.mxu0 %v572
      %1712 = vmatpush1.msra.mxu0 %v571
      %1713 = vmatprep.subr.mxu0 %v576
      %1714 = vmatpush1.msra.mxu0 %v575
      %1715 = vmatprep.subr.mxu0 %v580
      %1716 = vmatpush1.msra.mxu0 %v579
      %1717 = vmatprep.subr.mxu0 %v584
      %1718 = vmatpush1.msra.mxu0 %v583
      %1719 = vmatprep.subr.mxu0 %v588
      %1720 = vmatpush1.msra.mxu0 %v587
      %1721 = vmatprep.subr.mxu0 %v592
      %1722 = vmatpush1.msra.mxu0 %v591
      %1723 = vmatprep.subr.mxu0 %v596
      %1724 = vmatpush1.msra.mxu0 %v595
      %1725 = vmatprep.subr.mxu0 %v600
      %1726 = vmatpush1.msra.mxu0 %v599
      %1727 = vmatprep.subr.mxu0 %v604
      %1728 = vmatpush1.msra.mxu0 %v603
      %1729 = vmatprep.subr.mxu0 %v608
      %1730 = vmatpush1.msra.mxu0 %v607
      %1731 = vmatprep.subr.mxu0 %v612
      %1732 = vmatpush1.msra.mxu0 %v611
      %1733 = vmatprep.subr.mxu0 %v616
      %1734 = vmatpush1.msra.mxu0 %v615
      %1735 = vmatprep.subr.mxu0 %v620
      %1736 = vmatpush1.msra.mxu0 %v619
      %1737 = vmatprep.subr.mxu0 0.0
      %1738 = vmatpush1.msra.mxu0 0.0
      %1739 = vmatprep.subr.mxu0 0.0
      %1740 = vmatpush1.msra.mxu0 0.0
      %1741 = vmatprep.subr.mxu0 0.0
      %1742 = vmatpush1.msra.mxu0 0.0
      %1743 = vmatprep.subr.mxu0 0.0
      %1744 = vmatpush1.msra.mxu0 0.0
      %1745 = vmatprep.subr.mxu0 0.0
      %1746 = vmatpush1.msra.mxu0 0.0
      %1747 = vmatprep.subr.mxu0 0.0
      %1748 = vmatpush1.msra.mxu0 0.0
      %1749 = vmatprep.subr.mxu0 0.0
      %1750 = vmatpush1.msra.mxu0 0.0
      %1751 = vmatprep.subr.mxu0 0.0
      %1752 = vmatpush1.msra.mxu0 0.0
      %1753 = vmatprep.subr.mxu0 0.0
      %1754 = vmatpush1.msra.mxu0 0.0
      %1755 = vmatprep.subr.mxu0 0.0
      %1756 = vmatpush1.msra.mxu0 0.0
      %1757 = vmatprep.subr.mxu0 0.0
      %1758 = vmatpush1.msra.mxu0 0.0
      %1759 = vmatprep.subr.mxu0 0.0
      %1760 = vmatpush1.msra.mxu0 0.0
      %1761 = vmatprep.subr.mxu0 0.0
      %1762 = vmatpush1.msra.mxu0 0.0
      %1763 = vmatprep.subr.mxu0 0.0
      %1764 = vmatpush1.msra.mxu0 0.0
      %1765 = vmatprep.subr.mxu0 0.0
      %1766 = vmatpush1.msra.mxu0 0.0
      %1767 = vmatprep.subr.mxu0 0.0
      %1768 = vmatpush1.msra.mxu0 0.0
      %1769 = vmatprep.mubr.f32.mxu0 0.0
      %1770 = vmatmul.mubr.f32.gmra.mrb[0].mxu0 %v1695
      %v1771 = vpop.f32.mrb[0].mxu0
      %v1772 = vadd.f32 0.0, %v1771
      %v1773 = vpop.f32.mrb[0].mxu0
      %v1774 = vadd.f32 0.0, %v1773
      %1775 = vdwg.mxu0
      %1776 = vmatprep.subr.mxu0 %v562
      %1777 = vmatpush1.msra.mxu0 %v561
      %1778 = vmatprep.subr.mxu0 %v566
      %1779 = vmatpush1.msra.mxu0 %v565
      %1780 = vmatprep.subr.mxu0 %v570
      %1781 = vmatpush1.msra.mxu0 %v569
      %1782 = vmatprep.subr.mxu0 %v574
      %1783 = vmatpush1.msra.mxu0 %v573
      %1784 = vmatprep.subr.mxu0 %v578
      %1785 = vmatpush1.msra.mxu0 %v577
      %1786 = vmatprep.subr.mxu0 %v582
      %1787 = vmatpush1.msra.mxu0 %v581
      %1788 = vmatprep.subr.mxu0 %v586
      %1789 = vmatpush1.msra.mxu0 %v585
      %1790 = vmatprep.subr.mxu0 %v590
      %1791 = vmatpush1.msra.mxu0 %v589
      %1792 = vmatprep.subr.mxu0 %v594
      %1793 = vmatpush1.msra.mxu0 %v593
      %1794 = vmatprep.subr.mxu0 %v598
      %1795 = vmatpush1.msra.mxu0 %v597
      %1796 = vmatprep.subr.mxu0 %v602
      %1797 = vmatpush1.msra.mxu0 %v601
      %1798 = vmatprep.subr.mxu0 %v606
      %1799 = vmatpush1.msra.mxu0 %v605
      %1800 = vmatprep.subr.mxu0 %v610
      %1801 = vmatpush1.msra.mxu0 %v609
      %1802 = vmatprep.subr.mxu0 %v614
      %1803 = vmatpush1.msra.mxu0 %v613
      %1804 = vmatprep.subr.mxu0 %v618
      %1805 = vmatpush1.msra.mxu0 %v617
      %1806 = vmatprep.subr.mxu0 %v622
      %1807 = vmatpush1.msra.mxu0 %v621
      %1808 = vmatprep.subr.mxu0 0.0
      %1809 = vmatpush1.msra.mxu0 0.0
      %1810 = vmatprep.subr.mxu0 0.0
      %1811 = vmatpush1.msra.mxu0 0.0
      %1812 = vmatprep.subr.mxu0 0.0
      %1813 = vmatpush1.msra.mxu0 0.0
      %1814 = vmatprep.subr.mxu0 0.0
      %1815 = vmatpush1.msra.mxu0 0.0
      %1816 = vmatprep.subr.mxu0 0.0
      %1817 = vmatpush1.msra.mxu0 0.0
      %1818 = vmatprep.subr.mxu0 0.0
      %1819 = vmatpush1.msra.mxu0 0.0
      %1820 = vmatprep.subr.mxu0 0.0
      %1821 = vmatpush1.msra.mxu0 0.0
      %1822 = vmatprep.subr.mxu0 0.0
      %1823 = vmatpush1.msra.mxu0 0.0
      %1824 = vmatprep.subr.mxu0 0.0
      %1825 = vmatpush1.msra.mxu0 0.0
      %1826 = vmatprep.subr.mxu0 0.0
      %1827 = vmatpush1.msra.mxu0 0.0
      %1828 = vmatprep.subr.mxu0 0.0
      %1829 = vmatpush1.msra.mxu0 0.0
      %1830 = vmatprep.subr.mxu0 0.0
      %1831 = vmatpush1.msra.mxu0 0.0
      %1832 = vmatprep.subr.mxu0 0.0
      %1833 = vmatpush1.msra.mxu0 0.0
      %1834 = vmatprep.subr.mxu0 0.0
      %1835 = vmatpush1.msra.mxu0 0.0
      %1836 = vmatprep.subr.mxu0 0.0
      %1837 = vmatpush1.msra.mxu0 0.0
      %1838 = vmatprep.subr.mxu0 0.0
      %1839 = vmatpush1.msra.mxu0 0.0
      %1840 = vmatprep.mubr.f32.mxu0 0.0
      %1841 = vmatmul.mubr.f32.gmra.mrb[0].mxu0 %v1695
      %v1842 = vpop.f32.mrb[0].mxu0
      %v1843 = vadd.f32 0.0, %v1842
      %v1844 = vpop.f32.mrb[0].mxu0
      %v1845 = vadd.f32 0.0, %v1844
      %1846 = vdwg.mxu0
      %v1847 = vadd.f32 %v1701, %v1772
      %v1848 = vadd.f32 %v1702, %v1774
      %v1849 = vadd.f32 %v1703, %v1843
      %v1850 = vadd.f32 %v1704, %v1845
      %v1851 = vxor.u32 %v1847, 2147483648
      %v1852 = vxor.u32 %v1848, 2147483648
      %v1853 = vxor.u32 %v1849, 2147483648
      %v1854 = vmul.f32 %v1851, 1.442695
      %v1855 = vpow.pop %v1854
      %v1856 = vmul.f32 %v1852, 1.442695
      %v1857 = vpow.pop %v1856
      %v1858 = vmul.f32 %v1853, 1.442695
      %v1859 = vpow.pop %v1858
      %v1860 = vadd.f32 %v1855, 1.0
      %v1861 = vadd.f32 %v1857, 1.0
      %v1862 = vadd.f32 %v1859, 1.0
      %v1863 = vrcp.pop %v1860
      %v1864 = vmul.f32 1.0, %v1863
      %v1865 = vrcp.pop %v1861
      %v1866 = vmul.f32 1.0, %v1865
      %v1867 = vrcp.pop %v1862
      %v1868 = vmul.f32 1.0, %v1867
      %v1869 = vtanh.pop %v1850
      %v1870 = vmul.f32 %v1866, %v1693
      %v1871 = vmul.f32 %v1864, %v1869
      %v1872 = vadd.f32 %v1870, %v1871
      %v1873 = vtanh.pop %v1872
      %v1874 = vmul.f32 %v1868, %v1873
      %s1875 = scalar_lea.vmem %s230, 48
      %1876 = vst [vmem:[%s1875] sm:$0xff] %v1874
      %s1877 = smul.u32 7, 4
      %s1878 = smul.addr %s1877, 8
      %s1879 = scalar_lea.vmem [#allocation4], %s1878
      %v1880 = vld [vmem:[%s1879] sm:$0xff]
      %v1881 = vld [vmem:[%s1879 + $0x8] sm:$0xff]
      %v1882 = vld [vmem:[%s1879 + $0x10] sm:$0xff]
      %v1883 = vld [vmem:[%s1879 + $0x18] sm:$0xff]
      %1884 = vmatprep.subr.mxu0 %v560
      %1885 = vmatpush1.msra.mxu0 %v559
      %1886 = vmatprep.subr.mxu0 %v564
      %1887 = vmatpush1.msra.mxu0 %v563
      %1888 = vmatprep.subr.mxu0 %v568
      %1889 = vmatpush1.msra.mxu0 %v567
      %1890 = vmatprep.subr.mxu0 %v572
      %1891 = vmatpush1.msra.mxu0 %v571
      %1892 = vmatprep.subr.mxu0 %v576
      %1893 = vmatpush1.msra.mxu0 %v575
      %1894 = vmatprep.subr.mxu0 %v580
      %1895 = vmatpush1.msra.mxu0 %v579
      %1896 = vmatprep.subr.mxu0 %v584
      %1897 = vmatpush1.msra.mxu0 %v583
      %1898 = vmatprep.subr.mxu0 %v588
      %1899 = vmatpush1.msra.mxu0 %v587
      %1900 = vmatprep.subr.mxu0 %v592
      %1901 = vmatpush1.msra.mxu0 %v591
      %1902 = vmatprep.subr.mxu0 %v596
      %1903 = vmatpush1.msra.mxu0 %v595
      %1904 = vmatprep.subr.mxu0 %v600
      %1905 = vmatpush1.msra.mxu0 %v599
      %1906 = vmatprep.subr.mxu0 %v604
      %1907 = vmatpush1.msra.mxu0 %v603
      %1908 = vmatprep.subr.mxu0 %v608
      %1909 = vmatpush1.msra.mxu0 %v607
      %1910 = vmatprep.subr.mxu0 %v612
      %1911 = vmatpush1.msra.mxu0 %v611
      %1912 = vmatprep.subr.mxu0 %v616
      %1913 = vmatpush1.msra.mxu0 %v615
      %1914 = vmatprep.subr.mxu0 %v620
      %1915 = vmatpush1.msra.mxu0 %v619
      %1916 = vmatprep.subr.mxu0 0.0
      %1917 = vmatpush1.msra.mxu0 0.0
      %1918 = vmatprep.subr.mxu0 0.0
      %1919 = vmatpush1.msra.mxu0 0.0
      %1920 = vmatprep.subr.mxu0 0.0
      %1921 = vmatpush1.msra.mxu0 0.0
      %1922 = vmatprep.subr.mxu0 0.0
      %1923 = vmatpush1.msra.mxu0 0.0
      %1924 = vmatprep.subr.mxu0 0.0
      %1925 = vmatpush1.msra.mxu0 0.0
      %1926 = vmatprep.subr.mxu0 0.0
      %1927 = vmatpush1.msra.mxu0 0.0
      %1928 = vmatprep.subr.mxu0 0.0
      %1929 = vmatpush1.msra.mxu0 0.0
      %1930 = vmatprep.subr.mxu0 0.0
      %1931 = vmatpush1.msra.mxu0 0.0
      %1932 = vmatprep.subr.mxu0 0.0
      %1933 = vmatpush1.msra.mxu0 0.0
      %1934 = vmatprep.subr.mxu0 0.0
      %1935 = vmatpush1.msra.mxu0 0.0
      %1936 = vmatprep.subr.mxu0 0.0
      %1937 = vmatpush1.msra.mxu0 0.0
      %1938 = vmatprep.subr.mxu0 0.0
      %1939 = vmatpush1.msra.mxu0 0.0
      %1940 = vmatprep.subr.mxu0 0.0
      %1941 = vmatpush1.msra.mxu0 0.0
      %1942 = vmatprep.subr.mxu0 0.0
      %1943 = vmatpush1.msra.mxu0 0.0
      %1944 = vmatprep.subr.mxu0 0.0
      %1945 = vmatpush1.msra.mxu0 0.0
      %1946 = vmatprep.subr.mxu0 0.0
      %1947 = vmatpush1.msra.mxu0 0.0
      %1948 = vmatprep.mubr.f32.mxu0 0.0
      %1949 = vmatmul.mubr.f32.gmra.mrb[0].mxu0 %v1874
      %v1950 = vpop.f32.mrb[0].mxu0
      %v1951 = vadd.f32 0.0, %v1950
      %v1952 = vpop.f32.mrb[0].mxu0
      %v1953 = vadd.f32 0.0, %v1952
      %1954 = vdwg.mxu0
      %1955 = vmatprep.subr.mxu0 %v562
      %1956 = vmatpush1.msra.mxu0 %v561
      %1957 = vmatprep.subr.mxu0 %v566
      %1958 = vmatpush1.msra.mxu0 %v565
      %1959 = vmatprep.subr.mxu0 %v570
      %1960 = vmatpush1.msra.mxu0 %v569
      %1961 = vmatprep.subr.mxu0 %v574
      %1962 = vmatpush1.msra.mxu0 %v573
      %1963 = vmatprep.subr.mxu0 %v578
      %1964 = vmatpush1.msra.mxu0 %v577
      %1965 = vmatprep.subr.mxu0 %v582
      %1966 = vmatpush1.msra.mxu0 %v581
      %1967 = vmatprep.subr.mxu0 %v586
      %1968 = vmatpush1.msra.mxu0 %v585
      %1969 = vmatprep.subr.mxu0 %v590
      %1970 = vmatpush1.msra.mxu0 %v589
      %1971 = vmatprep.subr.mxu0 %v594
      %1972 = vmatpush1.msra.mxu0 %v593
      %1973 = vmatprep.subr.mxu0 %v598
      %1974 = vmatpush1.msra.mxu0 %v597
      %1975 = vmatprep.subr.mxu0 %v602
      %1976 = vmatpush1.msra.mxu0 %v601
      %1977 = vmatprep.subr.mxu0 %v606
      %1978 = vmatpush1.msra.mxu0 %v605
      %1979 = vmatprep.subr.mxu0 %v610
      %1980 = vmatpush1.msra.mxu0 %v609
      %1981 = vmatprep.subr.mxu0 %v614
      %1982 = vmatpush1.msra.mxu0 %v613
      %1983 = vmatprep.subr.mxu0 %v618
      %1984 = vmatpush1.msra.mxu0 %v617
      %1985 = vmatprep.subr.mxu0 %v622
      %1986 = vmatpush1.msra.mxu0 %v621
      %1987 = vmatprep.subr.mxu0 0.0
      %1988 = vmatpush1.msra.mxu0 0.0
      %1989 = vmatprep.subr.mxu0 0.0
      %1990 = vmatpush1.msra.mxu0 0.0
      %1991 = vmatprep.subr.mxu0 0.0
      %1992 = vmatpush1.msra.mxu0 0.0
      %1993 = vmatprep.subr.mxu0 0.0
      %1994 = vmatpush1.msra.mxu0 0.0
      %1995 = vmatprep.subr.mxu0 0.0
      %1996 = vmatpush1.msra.mxu0 0.0
      %1997 = vmatprep.subr.mxu0 0.0
      %1998 = vmatpush1.msra.mxu0 0.0
      %1999 = vmatprep.subr.mxu0 0.0
      %2000 = vmatpush1.msra.mxu0 0.0
      %2001 = vmatprep.subr.mxu0 0.0
      %2002 = vmatpush1.msra.mxu0 0.0
      %2003 = vmatprep.subr.mxu0 0.0
      %2004 = vmatpush1.msra.mxu0 0.0
      %2005 = vmatprep.subr.mxu0 0.0
      %2006 = vmatpush1.msra.mxu0 0.0
      %2007 = vmatprep.subr.mxu0 0.0
      %2008 = vmatpush1.msra.mxu0 0.0
      %2009 = vmatprep.subr.mxu0 0.0
      %2010 = vmatpush1.msra.mxu0 0.0
      %2011 = vmatprep.subr.mxu0 0.0
      %2012 = vmatpush1.msra.mxu0 0.0
      %2013 = vmatprep.subr.mxu0 0.0
      %2014 = vmatpush1.msra.mxu0 0.0
      %2015 = vmatprep.subr.mxu0 0.0
      %2016 = vmatpush1.msra.mxu0 0.0
      %2017 = vmatprep.subr.mxu0 0.0
      %2018 = vmatpush1.msra.mxu0 0.0
      %2019 = vmatprep.mubr.f32.mxu0 0.0
      %2020 = vmatmul.mubr.f32.gmra.mrb[0].mxu0 %v1874
      %v2021 = vpop.f32.mrb[0].mxu0
      %v2022 = vadd.f32 0.0, %v2021
      %v2023 = vpop.f32.mrb[0].mxu0
      %v2024 = vadd.f32 0.0, %v2023
      %2025 = vdwg.mxu0
      %v2026 = vadd.f32 %v1880, %v1951
      %v2027 = vadd.f32 %v1881, %v1953
      %v2028 = vadd.f32 %v1882, %v2022
      %v2029 = vadd.f32 %v1883, %v2024
      %v2030 = vxor.u32 %v2026, 2147483648
      %v2031 = vxor.u32 %v2027, 2147483648
      %v2032 = vxor.u32 %v2028, 2147483648
      %v2033 = vmul.f32 %v2030, 1.442695
      %v2034 = vpow.pop %v2033
      %v2035 = vmul.f32 %v2031, 1.442695
      %v2036 = vpow.pop %v2035
      %v2037 = vmul.f32 %v2032, 1.442695
      %v2038 = vpow.pop %v2037
      %v2039 = vadd.f32 %v2034, 1.0
      %v2040 = vadd.f32 %v2036, 1.0
      %v2041 = vadd.f32 %v2038, 1.0
      %v2042 = vrcp.pop %v2039
      %v2043 = vmul.f32 1.0, %v2042
      %v2044 = vrcp.pop %v2040
      %v2045 = vmul.f32 1.0, %v2044
      %v2046 = vrcp.pop %v2041
      %v2047 = vmul.f32 1.0, %v2046
      %v2048 = vtanh.pop %v2029
      %v2049 = vmul.f32 %v2045, %v1872
      %v2050 = vmul.f32 %v2043, %v2048
      %v2051 = vadd.f32 %v2049, %v2050
      %v2052 = vtanh.pop %v2051
      %v2053 = vmul.f32 %v2047, %v2052
      %s2054 = scalar_lea.vmem %s230, 56
      %2055 = vst [vmem:[%s2054] sm:$0xff] %v2053
      %2056 = vst [vmem:[#allocation2] sm:$0xff] %v2053
      %2057 = vst [vmem:[#allocation3] sm:$0xff] %v2051
      %s2058 = smul.u32 8, %s20
      %p2059 = scmp.lt.s32.totalorder %s2058, 15
      %s2060 = scalar_select %p2059, %s2058, 15
      %p2061 = scmp.lt.s32.totalorder %s19, 0
      %s2062 = scalar_select %p2061, %s19, 0
      %s2063 = sadd.s32 %s2062, %s2060
      %s2064 = smul.addr %s2063, 8
      %s2065 = scalar_lea.vmem %s4, %s2064
      // Predicated region
      $region41: #{lstm_attention_forward.3} parent=35 // pred_check
        %p2066 = pneg %p138
      $region42: #{lstm_attention_forward.3} parent=35 // pred_check_branch
        %2068 = sbr.rel (%p2066) target = $region44
      $region43: #{lstm_attention_forward.3} parent=35 // pred_region
        %s2069 = smul.u32 8, %s20
      $region44: #{lstm_attention_forward.3} parent=35 // pred_fallthru
        _
    $region36: #{lstm_attention_forward.3} parent=5 // pred_fallthru
      _
    %p2070 = scmp.le.s32.totalorder 2, %s10
    // Predicated region
    $region45: #{lstm_attention_forward.3} parent=5 // pred_check
      %p2071 = pneg %p2070
    $region46: #{lstm_attention_forward.3} parent=5 // pred_check_branch
      %2073 = sbr.rel (%p2071) target = $region48
    $region47: #{lstm_attention_forward.3} parent=5 // pred_region
      %s2074 = ssub.s32 %s10, 2
      // Predicated region
      $region49: #{lstm_attention_forward.3} parent=47 // pred_check
        %p2075 = pneg %p144
      $region50: #{lstm_attention_forward.3} parent=47 // pred_check_branch
        %2077 = sbr.rel (%p2075) target = $region52
      $region51: #{lstm_attention_forward.3} parent=47 // pred_region
        %s2078 = smul.u32 8, %s22
        %p2079 = scmp.lt.s32.totalorder %s2078, 15
        %s2080 = scalar_select %p2079, %s2078, 15
        %p2081 = scmp.lt.s32.totalorder %s21, 0
        %s2082 = scalar_select %p2081, %s21, 0
        %s2083 = sadd.s32 %s2082, %s2080
        %s2084 = smul.addr %s2083, 8
        %s2085 = scalar_lea.vmem %s4, %s2084
      $region52: #{lstm_attention_forward.3} parent=47 // pred_fallthru
        _
    $region48: #{lstm_attention_forward.3} parent=5 // pred_fallthru
      _
  $region6: #{lstm_attention_forward.3} parent=0 // loop_footer
    %s14 = sadd.s32 1, %s10
  $region7: #{lstm_attention_forward.3} parent=0 // loop_footer_branch
    %9 = sbr.rel target = $region3
  $region8: #{lstm_attention_forward.3} parent=0 // loop_exit
    _

// kernel: lstm_attention_forward.4
$region0: #{lstm_attention_forward.4}
  #allocation0 [shape = 'u32[]', space=smem, size = 0x4, offset = 0x4, fixed_abs, tag = 'smem constant byte address 0x4 - core index']
  #allocation1 [shape = 'u32[144,128]{1,0:T(1,128)}', space=vmem, size = 0x12000, scoped, tag = 'internal scratch']
  #allocation2 [shape = 'f32[8,128]{1,0:T(8,128)}', space=vmem, size = 0x1000, scoped, tag = 'scratch operand']
  #allocation3 [shape = 'f32[8,128]{1,0:T(8,128)}', space=vmem, size = 0x1000, scoped, tag = 'scratch operand']
  #allocation4 [shape = 'f32[64,512]{1,0:T(8,128)}', space=vmem, size = 0x20000, scoped, tag = 'scratch operand']
  %s0 = inlined_call_operand.vmem [shape: f32[16,8,128], index: 0, kind: input, shape index: {}]
  %s1 = inlined_call_operand.vmem [shape: f32[128,512], index: 1, kind: input, shape index: {}]
  %s2 = inlined_call_operand.vmem [shape: f32[128,512], index: 2, kind: input, shape index: {}]
  %s3 = inlined_call_operand.vmem [shape: f32[1,512], index: 3, kind: input, shape index: {}]
  %s4 = inlined_call_operand.vmem [shape: f32[16,8,128], index: 4, kind: output, shape index: {}]
  %s5 = sld [smem:[#allocation0]]
  $region53: #{lstm_attention_forward.4} parent=0
    _
  %s7 = ssub.s32 1, %s5
  %s8 = scalar_select 0, %s7, %s5
  loop: start=0, step=1, limit=4
  $region2: #{lstm_attention_forward.4} parent=0 // loop_pre_header
    _
  $region3: #{lstm_attention_forward.4} parent=0 // loop_header
    %s10 = sphi 0, %s14
    %p11 = scmp.ge.s32.totalorder %s10, 4
    %s17 = sphi 0, %s29
    %s18 = sphi 0, %s25
    %s19 = sphi 0, %s17
    %s20 = sphi 0, %s18
    %s21 = sphi 0, %s19
    %s22 = sphi 0, %s20
    %s34 = sphi 0, %s36
    %s37 = sphi 0, %s34
    %s38 = sphi 0, %s37
    %s54 = sphi 0, %s38
    %s58 = sphi 0, %s58
    %s60 = sphi 0, %s58
    %s61 = sphi 0, %s60
    %s75 = sphi 0, %s61
    %s79 = sphi 0, %s79
    %s81 = sphi 0, %s79
    %s82 = sphi 0, %s81
    %s96 = sphi 0, %s82
    %s100 = sphi 0, %s100
    %s102 = sphi 0, %s100
    %s103 = sphi 0, %s102
    %s117 = sphi 0, %s103
    %s125 = sphi 0, %s127
    %s128 = sphi 0, %s125
    %s129 = sphi 0, %s128
    %s145 = sphi 0, %s129
  $region4: #{lstm_attention_forward.4} parent=0 // loop_header_branch
    %13 = sbr.rel (%p11) target = $region8
  $region5: #{lstm_attention_forward.4} parent=0 // loop_body
    %s15 = ssub.s32 %s10, 1
    %s16 = ssub.s32 %s10, 2
    %s23 = sadd.s32 1, %s18
    %p24 = scmp.ge.s32.totalorder %s23, 2
    %s25 = scalar_select %p24, 0, %s23
    %s26 = sadd.s32 1, %s17
    %s27 = scalar_select %p24, %s26, %s17
    %p28 = scmp.ge.s32.totalorder %s27, 1
    %s29 = scalar_select %p28, 0, %s27
    %s30 = ssub.s32 %s18, %s25
    %s31 = ssub.s32 %s17, %s29
    %s32 = sor.u32 %s30, %s31
    %p33 = scmp.eq.s32.totalorder %s32, 0
    %s35 = sadd.s32 %s34, 1
    %s36 = scalar_select %p33, %s34, %s35
    %p39 = pneg %p33
    %p40 = scmp.eq.s32.totalorder %s10, 1
    %p41 = por %p39, %p40
    %p42 = scmp.ne.s32.totalorder %s34, %s37
    %p43 = scmp.eq.s32.totalorder %s10, 0
    %p44 = por %p42, %p43
    %p45 = scmp.ne.s32.totalorder %s34, %s37
    %p46 = scmp.eq.s32.totalorder %s15, 1
    %p47 = por %p45, %p46
    %p48 = scmp.ne.s32.totalorder %s37, %s38
    %p49 = scmp.eq.s32.totalorder %s15, 0
    %p50 = por %p48, %p49
    %p51 = scmp.ne.s32.totalorder %s37, %s38
    %p52 = scmp.eq.s32.totalorder %s16, 1
    %p53 = por %p51, %p52
    %p55 = scmp.ne.s32.totalorder %s38, %s54
    %p56 = scmp.eq.s32.totalorder %s16, 0
    %p57 = por %p55, %p56
    %s59 = sadd.s32 %s58, 1
    %p62 = scmp.eq.s32.totalorder %s10, 1
    %p63 = scmp.ne.s32.totalorder %s58, %s60
    %p64 = scmp.eq.s32.totalorder %s10, 0
    %p65 = por %p63, %p64
    %p66 = scmp.ne.s32.totalorder %s58, %s60
    %p67 = scmp.eq.s32.totalorder %s15, 1
    %p68 = por %p66, %p67
    %p69 = scmp.ne.s32.totalorder %s60, %s61
    %p70 = scmp.eq.s32.totalorder %s15, 0
    %p71 = por %p69, %p70
    %p72 = scmp.ne.s32.totalorder %s60, %s61
    %p73 = scmp.eq.s32.totalorder %s16, 1
    %p74 = por %p72, %p73
    %p76 = scmp.ne.s32.totalorder %s61, %s75
    %p77 = scmp.eq.s32.totalorder %s16, 0
    %p78 = por %p76, %p77
    %s80 = sadd.s32 %s79, 1
    %p83 = scmp.eq.s32.totalorder %s10, 1
    %p84 = scmp.ne.s32.totalorder %s79, %s81
    %p85 = scmp.eq.s32.totalorder %s10, 0
    %p86 = por %p84, %p85
    %p87 = scmp.ne.s32.totalorder %s79, %s81
    %p88 = scmp.eq.s32.totalorder %s15, 1
    %p89 = por %p87, %p88
    %p90 = scmp.ne.s32.totalorder %s81, %s82
    %p91 = scmp.eq.s32.totalorder %s15, 0
    %p92 = por %p90, %p91
    %p93 = scmp.ne.s32.totalorder %s81, %s82
    %p94 = scmp.eq.s32.totalorder %s16, 1
    %p95 = por %p93, %p94
    %p97 = scmp.ne.s32.totalorder %s82, %s96
    %p98 = scmp.eq.s32.totalorder %s16, 0
    %p99 = por %p97, %p98
    %s101 = sadd.s32 %s100, 1
    %p104 = scmp.eq.s32.totalorder %s10, 1
    %p105 = scmp.ne.s32.totalorder %s100, %s102
    %p106 = scmp.eq.s32.totalorder %s10, 0
    %p107 = por %p105, %p106
    %p108 = scmp.ne.s32.totalorder %s100, %s102
    %p109 = scmp.eq.s32.totalorder %s15, 1
    %p110 = por %p108, %p109
    %p111 = scmp.ne.s32.totalorder %s102, %s103
    %p112 = scmp.eq.s32.totalorder %s15, 0
    %p113 = por %p111, %p112
    %p114 = scmp.ne.s32.totalorder %s102, %s103
    %p115 = scmp.eq.s32.totalorder %s16, 1
    %p116 = por %p114, %p115
    %p118 = scmp.ne.s32.totalorder %s103, %s117
    %p119 = scmp.eq.s32.totalorder %s16, 0
    %p120 = por %p118, %p119
    %s121 = ssub.s32 %s18, %s25
    %s122 = ssub.s32 %s17, %s29
    %s123 = sor.u32 %s121, %s122
    %p124 = scmp.eq.s32.totalorder %s123, 0
    %s126 = sadd.s32 %s125, 1
    %s127 = scalar_select %p124, %s125, %s126
    %p130 = pneg %p124
    %p131 = scmp.eq.s32.totalorder %s10, 1
    %p132 = por %p130, %p131
    %p133 = scmp.ne.s32.totalorder %s125, %s128
    %p134 = scmp.eq.s32.totalorder %s10, 0
    %p135 = por %p133, %p134
    %p136 = scmp.ne.s32.totalorder %s125, %s128
    %p137 = scmp.eq.s32.totalorder %s15, 1
    %p138 = por %p136, %p137
    %p139 = scmp.ne.s32.totalorder %s128, %s129
    %p140 = scmp.eq.s32.totalorder %s15, 0
    %p141 = por %p139, %p140
    %p142 = scmp.ne.s32.totalorder %s128, %s129
    %p143 = scmp.eq.s32.totalorder %s16, 1
    %p144 = por %p142, %p143
    %p146 = scmp.ne.s32.totalorder %s129, %s145
    %p147 = scmp.eq.s32.totalorder %s16, 0
    %p148 = por %p146, %p147
    %p149 = scmp.le.s32.totalorder 1, %s10
    %p150 = scmp.lt.s32.totalorder %s10, 3
    %p151 = pnand %p149, %p150
    %p152 = pneg %p151
    // Predicated region
    $region9: #{lstm_attention_forward.4} parent=5 // pred_check
      _
    $region10: #{lstm_attention_forward.4} parent=5 // pred_check_branch
      %154 = sbr.rel (%p151) target = $region12
    $region11: #{lstm_attention_forward.4} parent=5 // pred_region
      %s155 = ssub.s32 %s10, 1
      // Predicated region
      $region13: #{lstm_attention_forward.4} parent=11 // pred_check
        %p156 = pneg %p71
      $region14: #{lstm_attention_forward.4} parent=11 // pred_check_branch
        %158 = sbr.rel (%p156) target = $region16
      $region15: #{lstm_attention_forward.4} parent=11 // pred_region
        _
      $region16: #{lstm_attention_forward.4} parent=11 // pred_fallthru
        _
      // Predicated region
      $region17: #{lstm_attention_forward.4} parent=11 // pred_check
        %p159 = pneg %p92
      $region18: #{lstm_attention_forward.4} parent=11 // pred_check_branch
        %161 = sbr.rel (%p159) target = $region20
      $region19: #{lstm_attention_forward.4} parent=11 // pred_region
        _
      $region20: #{lstm_attention_forward.4} parent=11 // pred_fallthru
        _
      // Predicated region
      $region21: #{lstm_attention_forward.4} parent=11 // pred_check
        %p162 = pneg %p113
      $region22: #{lstm_attention_forward.4} parent=11 // pred_check_branch
        %164 = sbr.rel (%p162) target = $region24
      $region23: #{lstm_attention_forward.4} parent=11 // pred_region
        _
      $region24: #{lstm_attention_forward.4} parent=11 // pred_fallthru
        _
    $region12: #{lstm_attention_forward.4} parent=5 // pred_fallthru
      _
    %p165 = scmp.lt.s32.totalorder %s10, 2
    // Predicated region
    $region25: #{lstm_attention_forward.4} parent=5 // pred_check
      %p166 = pneg %p165
    $region26: #{lstm_attention_forward.4} parent=5 // pred_check_branch
      %168 = sbr.rel (%p166) target = $region28
    $region27: #{lstm_attention_forward.4} parent=5 // pred_region
      // Predicated region
      $region29: #{lstm_attention_forward.4} parent=27 // pred_check
        %p169 = pneg %p44
      $region30: #{lstm_attention_forward.4} parent=27 // pred_check_branch
        %171 = sbr.rel (%p169) target = $region32
      $region31: #{lstm_attention_forward.4} parent=27 // pred_region
        %s172 = smul.u32 8, %s18
        %p173 = scmp.lt.s32.totalorder %s172, 15
        %s174 = scalar_select %p173, %s172, 15
        %p175 = scmp.lt.s32.totalorder %s17, 0
        %s176 = scalar_select %p175, %s17, 0
        %s177 = sadd.s32 %s176, %s174
        %s178 = smul.addr %s177, 8
        %s179 = scalar_lea.vmem %s0, %s178
        %s180 = smul.u32 8, %s18
      $region32: #{lstm_attention_forward.4} parent=27 // pred_fallthru
        _
    $region28: #{lstm_attention_forward.4} parent=5 // pred_fallthru
      _
    %p181 = scmp.le.s32.totalorder 1, %s10
    %p182 = scmp.lt.s32.totalorder %s10, 3
    %p183 = pnand %p181, %p182
    %p184 = pneg %p183
    // Predicated region
    $region33: #{lstm_attention_forward.4} parent=5 // pred_check
      _
    $region34: #{lstm_attention_forward.4} parent=5 // pred_check_branch
      %186 = sbr.rel (%p183) target = $region36
    $region35: #{lstm_attention_forward.4} parent=5 // pred_region
      %s187 = ssub.s32 %s10, 1
      %s188 = smul.u32 8, %s20
      %p189 = scmp.lt.s32.totalorder %s188, 15
      %s190 = scalar_select %p189, %s188, 15
      %p191 = scmp.lt.s32.totalorder %s19, 0
      %s192 = scalar_select %p191, %s19, 0
      %s193 = sadd.s32 %s192, %s190
      %s194 = smul.addr %s193, 8
      %s195 = scalar_lea.vmem %s0, %s194
      %p196 = pneg %p50
      %p197 = pneg %p47
      %p198 = pneg %p71
      %p199 = pneg %p68
      %p200 = pneg %p92
      %p201 = pneg %p89
      %p202 = pneg %p113
      %p203 = pneg %p110
      %p204 = pneg %p141
      %p205 = pneg %p138
      %s206 = smul.u32 8, %s20
      %p207 = scmp.lt.s32.totalorder %s206, 15
      %s208 = scalar_select %p207, %s206, 15
      %p209 = scmp.lt.s32.totalorder %s19, 0
      %s210 = scalar_select %p209, %s19, 0
      %s211 = sadd.s32 %s210, %s208
      %s212 = smul.addr %s211, 8
      %s213 = scalar_lea.vmem %s4, %s212
      %s214 = smul.u32 8, %s20
      %p215 = scmp.lt.s32.totalorder %s214, 15
      %s216 = scalar_select %p215, %s214, 15
      %p217 = scmp.lt.s32.totalorder %s19, 0
      %s218 = scalar_select %p217, %s19, 0
      %s219 = sadd.s32 %s218, %s216
      %s220 = smul.addr %s219, 8
      %s221 = scalar_lea.vmem %s0, %s220
      %s222 = smul.u32 8, %s20
      %s223 = smul.u32 8, %s20
      %p224 = scmp.lt.s32.totalorder %s223, 15
      %s225 = scalar_select %p224, %s223, 15
      %p226 = scmp.lt.s32.totalorder %s19, 0
      %s227 = scalar_select %p226, %s19, 0
      %s228 = sadd.s32 %s227, %s225
      %s229 = smul.addr %s228, 8
      %s230 = scalar_lea.vmem %s4, %s229
      %s231 = smul.u32 8, %s20
      %p232 = scmp.eq.s32.totalorder %s20, 0
      // Predicated region
      $region37: #{lstm_attention_forward.4} parent=35 // pred_check
        %p233 = pneg %p232
      $region38: #{lstm_attention_forward.4} parent=35 // pred_check_branch
        %235 = sbr.rel (%p233) target = $region40
      $region39: #{lstm_attention_forward.4} parent=35 // pred_region
        %236 = vst [vmem:[#allocation2] sm:$0xff] 0.0
        %237 = vst [vmem:[#allocation3] sm:$0xff] 0.0
      $region40: #{lstm_attention_forward.4} parent=35 // pred_fallthru
        _
      %v238 = vld [vmem:[%s221] sm:$0xff]
      %v239 = vld [vmem:[%s221 + $0x8] sm:$0xff]
      %v240 = vld [vmem:[%s221 + $0x10] sm:$0xff]
      %v241 = vld [vmem:[%s221 + $0x18] sm:$0xff]
      %v242 = vld [vmem:[%s221 + $0x20] sm:$0xff]
      %v243 = vld [vmem:[%s221 + $0x28] sm:$0xff]
      %v244 = vld [vmem:[%s221 + $0x30] sm:$0xff]
      %v245 = vld [vmem:[%s221 + $0x38] sm:$0xff]
      %v246 = vld [vmem:[%s1] sm:$0xff]
      %v247 = vld [vmem:[%s1 + $0x8] sm:$0xff]
      %v248 = vld [vmem:[%s1 + $0x10] sm:$0xff]
      %v249 = vld [vmem:[%s1 + $0x18] sm:$0xff]
      %v250 = vld [vmem:[%s1 + $0x20] sm:$0xff]
      %v251 = vld [vmem:[%s1 + $0x28] sm:$0xff]
      %v252 = vld [vmem:[%s1 + $0x30] sm:$0xff]
      %v253 = vld [vmem:[%s1 + $0x38] sm:$0xff]
      %v254 = vld [vmem:[%s1 + $0x40] sm:$0xff]
      %v255 = vld [vmem:[%s1 + $0x48] sm:$0xff]
      %v256 = vld [vmem:[%s1 + $0x50] sm:$0xff]
      %v257 = vld [vmem:[%s1 + $0x58] sm:$0xff]
      %v258 = vld [vmem:[%s1 + $0x60] sm:$0xff]
      %v259 = vld [vmem:[%s1 + $0x68] sm:$0xff]
      %v260 = vld [vmem:[%s1 + $0x70] sm:$0xff]
      %v261 = vld [vmem:[%s1 + $0x78] sm:$0xff]
      %v262 = vld [vmem:[%s1 + $0x80] sm:$0xff]
      %v263 = vld [vmem:[%s1 + $0x88] sm:$0xff]
      %v264 = vld [vmem:[%s1 + $0x90] sm:$0xff]
      %v265 = vld [vmem:[%s1 + $0x98] sm:$0xff]
      %v266 = vld [vmem:[%s1 + $0xa0] sm:$0xff]
      %v267 = vld [vmem:[%s1 + $0xa8] sm:$0xff]
      %v268 = vld [vmem:[%s1 + $0xb0] sm:$0xff]
      %v269 = vld [vmem:[%s1 + $0xb8] sm:$0xff]
      %v270 = vld [vmem:[%s1 + $0xc0] sm:$0xff]
      %v271 = vld [vmem:[%s1 + $0xc8] sm:$0xff]
      %v272 = vld [vmem:[%s1 + $0xd0] sm:$0xff]
      %v273 = vld [vmem:[%s1 + $0xd8] sm:$0xff]
      %v274 = vld [vmem:[%s1 + $0xe0] sm:$0xff]
      %v275 = vld [vmem:[%s1 + $0xe8] sm:$0xff]
      %v276 = vld [vmem:[%s1 + $0xf0] sm:$0xff]
      %v277 = vld [vmem:[%s1 + $0xf8] sm:$0xff]
      %v278 = vld [vmem:[%s1 + $0x100] sm:$0xff]
      %v279 = vld [vmem:[%s1 + $0x108] sm:$0xff]
      %v280 = vld [vmem:[%s1 + $0x110] sm:$0xff]
      %v281 = vld [vmem:[%s1 + $0x118] sm:$0xff]
      %v282 = vld [vmem:[%s1 + $0x120] sm:$0xff]
      %v283 = vld [vmem:[%s1 + $0x128] sm:$0xff]
      %v284 = vld [vmem:[%s1 + $0x130] sm:$0xff]
      %v285 = vld [vmem:[%s1 + $0x138] sm:$0xff]
      %v286 = vld [vmem:[%s1 + $0x140] sm:$0xff]
      %v287 = vld [vmem:[%s1 + $0x148] sm:$0xff]
      %v288 = vld [vmem:[%s1 + $0x150] sm:$0xff]
      %v289 = vld [vmem:[%s1 + $0x158] sm:$0xff]
      %v290 = vld [vmem:[%s1 + $0x160] sm:$0xff]
      %v291 = vld [vmem:[%s1 + $0x168] sm:$0xff]
      %v292 = vld [vmem:[%s1 + $0x170] sm:$0xff]
      %v293 = vld [vmem:[%s1 + $0x178] sm:$0xff]
      %v294 = vld [vmem:[%s1 + $0x180] sm:$0xff]
      %v295 = vld [vmem:[%s1 + $0x188] sm:$0xff]
      %v296 = vld [vmem:[%s1 + $0x190] sm:$0xff]
      %v297 = vld [vmem:[%s1 + $0x198] sm:$0xff]
      %v298 = vld [vmem:[%s1 + $0x1a0] sm:$0xff]
      %v299 = vld [vmem:[%s1 + $0x1a8] sm:$0xff]
      %v300 = vld [vmem:[%s1 + $0x1b0] sm:$0xff]
      %v301 = vld [vmem:[%s1 + $0x1b8] sm:$0xff]
      %v302 = vld [vmem:[%s1 + $0x1c0] sm:$0xff]
      %v303 = vld [vmem:[%s1 + $0x1c8] sm:$0xff]
      %v304 = vld [vmem:[%s1 + $0x1d0] sm:$0xff]
      %v305 = vld [vmem:[%s1 + $0x1d8] sm:$0xff]
      %v306 = vld [vmem:[%s1 + $0x1e0] sm:$0xff]
      %v307 = vld [vmem:[%s1 + $0x1e8] sm:$0xff]
      %v308 = vld [vmem:[%s1 + $0x1f0] sm:$0xff]
      %v309 = vld [vmem:[%s1 + $0x1f8] sm:$0xff]
      %v310 = vld [vmem:[%s3] sm:$0xf]
      %v312 = vlaneseq
      %v313 = vshrl.u32 %v312, 7
      %v314 = vsub.s32 0, %v313
      %v315 = vrot.slane %v310, %v314
      %v316 = vlaneseq
      %v317 = vshrl.u32 %v316, 7
      %v318 = vsub.s32 1, %v317
      %v319 = vrot.slane %v310, %v318
      %v320 = vlaneseq
      %v321 = vshrl.u32 %v320, 7
      %v322 = vsub.s32 2, %v321
      %v323 = vrot.slane %v310, %v322
      %v324 = vlaneseq
      %v325 = vshrl.u32 %v324, 7
      %v326 = vsub.s32 3, %v325
      %v327 = vrot.slane %v310, %v326
      %332 = vmatprep.subr.mxu0 %v247
      %333 = vmatpush1.msra.mxu0 %v246
      %334 = vmatprep.subr.mxu0 %v251
      %335 = vmatpush1.msra.mxu0 %v250
      %336 = vmatprep.subr.mxu0 %v255
      %337 = vmatpush1.msra.mxu0 %v254
      %338 = vmatprep.subr.mxu0 %v259
      %339 = vmatpush1.msra.mxu0 %v258
      %340 = vmatprep.subr.mxu0 %v263
      %341 = vmatpush1.msra.mxu0 %v262
      %342 = vmatprep.subr.mxu0 %v267
      %343 = vmatpush1.msra.mxu0 %v266
      %344 = vmatprep.subr.mxu0 %v271
      %345 = vmatpush1.msra.mxu0 %v270
      %346 = vmatprep.subr.mxu0 %v275
      %347 = vmatpush1.msra.mxu0 %v274
      %348 = vmatprep.subr.mxu0 %v279
      %349 = vmatpush1.msra.mxu0 %v278
      %350 = vmatprep.subr.mxu0 %v283
      %351 = vmatpush1.msra.mxu0 %v282
      %352 = vmatprep.subr.mxu0 %v287
      %353 = vmatpush1.msra.mxu0 %v286
      %354 = vmatprep.subr.mxu0 %v291
      %355 = vmatpush1.msra.mxu0 %v290
      %356 = vmatprep.subr.mxu0 %v295
      %357 = vmatpush1.msra.mxu0 %v294
      %358 = vmatprep.subr.mxu0 %v299
      %359 = vmatpush1.msra.mxu0 %v298
      %360 = vmatprep.subr.mxu0 %v303
      %361 = vmatpush1.msra.mxu0 %v302
      %362 = vmatprep.subr.mxu0 %v307
      %363 = vmatpush1.msra.mxu0 %v306
      %364 = vmatprep.subr.mxu0 0.0
      %365 = vmatpush1.msra.mxu0 0.0
      %366 = vmatprep.subr.mxu0 0.0
      %367 = vmatpush1.msra.mxu0 0.0
      %368 = vmatprep.subr.mxu0 0.0
      %369 = vmatpush1.msra.mxu0 0.0
      %370 = vmatprep.subr.mxu0 0.0
      %371 = vmatpush1.msra.mxu0 0.0
      %372 = vmatprep.subr.mxu0 0.0
      %373 = vmatpush1.msra.mxu0 0.0
      %374 = vmatprep.subr.mxu0 0.0
      %375 = vmatpush1.msra.mxu0 0.0
      %376 = vmatprep.subr.mxu0 0.0
      %377 = vmatpush1.msra.mxu0 0.0
      %378 = vmatprep.subr.mxu0 0.0
      %379 = vmatpush1.msra.mxu0 0.0
      %380 = vmatprep.subr.mxu0 0.0
      %381 = vmatpush1.msra.mxu0 0.0
      %382 = vmatprep.subr.mxu0 0.0
      %383 = vmatpush1.msra.mxu0 0.0
      %384 = vmatprep.subr.mxu0 0.0
      %385 = vmatpush1.msra.mxu0 0.0
      %386 = vmatprep.subr.mxu0 0.0
      %387 = vmatpush1.msra.mxu0 0.0
      %388 = vmatprep.subr.mxu0 0.0
      %389 = vmatpush1.msra.mxu0 0.0
      %390 = vmatprep.subr.mxu0 0.0
      %391 = vmatpush1.msra.mxu0 0.0
      %392 = vmatprep.subr.mxu0 0.0
      %393 = vmatpush1.msra.mxu0 0.0
      %394 = vmatprep.subr.mxu0 0.0
      %395 = vmatpush1.msra.mxu0 0.0
      %396 = vmatprep.mubr.f32.mxu0 0.0
      %397 = vmatmul.mubr.f32.gmra.mrb[0].mxu0 %v238
      %v398 = vpop.f32.mrb[0].mxu0
      %v399 = vadd.f32 %v315, %v398
      %v400 = vpop.f32.mrb[0].mxu0
      %v401 = vadd.f32 %v319, %v400
      %402 = vmatprep.mubr.f32.mxu0 0.0
      %403 = vmatmul.mubr.f32.gmra.mrb[0].mxu0 %v239
      %v404 = vpop.f32.mrb[0].mxu0
      %v405 = vadd.f32 %v315, %v404
      %v406 = vpop.f32.mrb[0].mxu0
      %v407 = vadd.f32 %v319, %v406
      %408 = vmatprep.mubr.f32.mxu0 0.0
      %409 = vmatmul.mubr.f32.gmra.mrb[0].mxu0 %v240
      %v410 = vpop.f32.mrb[0].mxu0
      %v411 = vadd.f32 %v315, %v410
      %v412 = vpop.f32.mrb[0].mxu0
      %v413 = vadd.f32 %v319, %v412
      %414 = vmatprep.mubr.f32.mxu0 0.0
      %415 = vmatmul.mubr.f32.gmra.mrb[0].mxu0 %v241
      %v416 = vpop.f32.mrb[0].mxu0
      %v417 = vadd.f32 %v315, %v416
      %v418 = vpop.f32.mrb[0].mxu0
      %v419 = vadd.f32 %v319, %v418
      %420 = vmatprep.mubr.f32.mxu0 0.0
      %421 = vmatmul.mubr.f32.gmra.mrb[0].mxu0 %v242
      %v422 = vpop.f32.mrb[0].mxu0
      %v423 = vadd.f32 %v315, %v422
      %v424 = vpop.f32.mrb[0].mxu0
      %v425 = vadd.f32 %v319, %v424
      %426 = vmatprep.mubr.f32.mxu0 0.0
      %427 = vmatmul.mubr.f32.gmra.mrb[0].mxu0 %v243
      %v428 = vpop.f32.mrb[0].mxu0
      %v429 = vadd.f32 %v315, %v428
      %v430 = vpop.f32.mrb[0].mxu0
      %v431 = vadd.f32 %v319, %v430
      %432 = vmatprep.mubr.f32.mxu0 0.0
      %433 = vmatmul.mubr.f32.gmra.mrb[0].mxu0 %v244
      %v434 = vpop.f32.mrb[0].mxu0
      %v435 = vadd.f32 %v315, %v434
      %v436 = vpop.f32.mrb[0].mxu0
      %v437 = vadd.f32 %v319, %v436
      %438 = vmatprep.mubr.f32.mxu0 0.0
      %439 = vmatmul.mubr.f32.gmra.mrb[0].mxu0 %v245
      %v440 = vpop.f32.mrb[0].mxu0
      %v441 = vadd.f32 %v315, %v440
      %v442 = vpop.f32.mrb[0].mxu0
      %v443 = vadd.f32 %v319, %v442
      %444 = vdwg.mxu0
      %445 = vmatprep.subr.mxu0 %v249
      %446 = vmatpush1.msra.mxu0 %v248
      %447 = vmatprep.subr.mxu0 %v253
      %448 = vmatpush1.msra.mxu0 %v252
      %449 = vmatprep.subr.mxu0 %v257
      %450 = vmatpush1.msra.mxu0 %v256
      %451 = vmatprep.subr.mxu0 %v261
      %452 = vmatpush1.msra.mxu0 %v260
      %453 = vmatprep.subr.mxu0 %v265
      %454 = vmatpush1.msra.mxu0 %v264
      %455 = vmatprep.subr.mxu0 %v269
      %456 = vmatpush1.msra.mxu0 %v268
      %457 = vmatprep.subr.mxu0 %v273
      %458 = vmatpush1.msra.mxu0 %v272
      %459 = vmatprep.subr.mxu0 %v277
      %460 = vmatpush1.msra.mxu0 %v276
      %461 = vmatprep.subr.mxu0 %v281
      %462 = vmatpush1.msra.mxu0 %v280
      %463 = vmatprep.subr.mxu0 %v285
      %464 = vmatpush1.msra.mxu0 %v284
      %465 = vmatprep.subr.mxu0 %v289
      %466 = vmatpush1.msra.mxu0 %v288
      %467 = vmatprep.subr.mxu0 %v293
      %468 = vmatpush1.msra.mxu0 %v292
      %469 = vmatprep.subr.mxu0 %v297
      %470 = vmatpush1.msra.mxu0 %v296
      %471 = vmatprep.subr.mxu0 %v301
      %472 = vmatpush1.msra.mxu0 %v300
      %473 = vmatprep.subr.mxu0 %v305
      %474 = vmatpush1.msra.mxu0 %v304
      %475 = vmatprep.subr.mxu0 %v309
      %476 = vmatpush1.msra.mxu0 %v308
      %477 = vmatprep.subr.mxu0 0.0
      %478 = vmatpush1.msra.mxu0 0.0
      %479 = vmatprep.subr.mxu0 0.0
      %480 = vmatpush1.msra.mxu0 0.0
      %481 = vmatprep.subr.mxu0 0.0
      %482 = vmatpush1.msra.mxu0 0.0
      %483 = vmatprep.subr.mxu0 0.0
      %484 = vmatpush1.msra.mxu0 0.0
      %485 = vmatprep.subr.mxu0 0.0
      %486 = vmatpush1.msra.mxu0 0.0
      %487 = vmatprep.subr.mxu0 0.0
      %488 = vmatpush1.msra.mxu0 0.0
      %489 = vmatprep.subr.mxu0 0.0
      %490 = vmatpush1.msra.mxu0 0.0
      %491 = vmatprep.subr.mxu0 0.0
      %492 = vmatpush1.msra.mxu0 0.0
      %493 = vmatprep.subr.mxu0 0.0
      %494 = vmatpush1.msra.mxu0 0.0
      %495 = vmatprep.subr.mxu0 0.0
      %496 = vmatpush1.msra.mxu0 0.0
      %497 = vmatprep.subr.mxu0 0.0
      %498 = vmatpush1.msra.mxu0 0.0
      %499 = vmatprep.subr.mxu0 0.0
      %500 = vmatpush1.msra.mxu0 0.0
      %501 = vmatprep.subr.mxu0 0.0
      %502 = vmatpush1.msra.mxu0 0.0
      %503 = vmatprep.subr.mxu0 0.0
      %504 = vmatpush1.msra.mxu0 0.0
      %505 = vmatprep.subr.mxu0 0.0
      %506 = vmatpush1.msra.mxu0 0.0
      %507 = vmatprep.subr.mxu0 0.0
      %508 = vmatpush1.msra.mxu0 0.0
      %509 = vmatprep.mubr.f32.mxu0 0.0
      %510 = vmatmul.mubr.f32.gmra.mrb[0].mxu0 %v238
      %v511 = vpop.f32.mrb[0].mxu0
      %v512 = vadd.f32 %v323, %v511
      %v513 = vpop.f32.mrb[0].mxu0
      %v514 = vadd.f32 %v327, %v513
      %515 = vmatprep.mubr.f32.mxu0 0.0
      %516 = vmatmul.mubr.f32.gmra.mrb[0].mxu0 %v239
      %v517 = vpop.f32.mrb[0].mxu0
      %v518 = vadd.f32 %v323, %v517
      %v519 = vpop.f32.mrb[0].mxu0
      %v520 = vadd.f32 %v327, %v519
      %521 = vmatprep.mubr.f32.mxu0 0.0
      %522 = vmatmul.mubr.f32.gmra.mrb[0].mxu0 %v240
      %v523 = vpop.f32.mrb[0].mxu0
      %v524 = vadd.f32 %v323, %v523
      %v525 = vpop.f32.mrb[0].mxu0
      %v526 = vadd.f32 %v327, %v525
      %527 = vmatprep.mubr.f32.mxu0 0.0
      %528 = vmatmul.mubr.f32.gmra.mrb[0].mxu0 %v241
      %v529 = vpop.f32.mrb[0].mxu0
      %v530 = vadd.f32 %v323, %v529
      %v531 = vpop.f32.mrb[0].mxu0
      %v532 = vadd.f32 %v327, %v531
      %533 = vmatprep.mubr.f32.mxu0 0.0
      %534 = vmatmul.mubr.f32.gmra.mrb[0].mxu0 %v242
      %v535 = vpop.f32.mrb[0].mxu0
      %v536 = vadd.f32 %v323, %v535
      %v537 = vpop.f32.mrb[0].mxu0
      %v538 = vadd.f32 %v327, %v537
      %539 = vmatprep.mubr.f32.mxu0 0.0
      %540 = vmatmul.mubr.f32.gmra.mrb[0].mxu0 %v243
      %v541 = vpop.f32.mrb[0].mxu0
      %v542 = vadd.f32 %v323, %v541
      %v543 = vpop.f32.mrb[0].mxu0
      %v544 = vadd.f32 %v327, %v543
      %545 = vmatprep.mubr.f32.mxu0 0.0
      %546 = vmatmul.mubr.f32.gmra.mrb[0].mxu0 %v244
      %v547 = vpop.f32.mrb[0].mxu0
      %v548 = vadd.f32 %v323, %v547
      %v549 = vpop.f32.mrb[0].mxu0
      %v550 = vadd.f32 %v327, %v549
      %551 = vmatprep.mubr.f32.mxu0 0.0
      %552 = vmatmul.mubr.f32.gmra.mrb[0].mxu0 %v245
      %v553 = vpop.f32.mrb[0].mxu0
      %v554 = vadd.f32 %v323, %v553
      %v555 = vpop.f32.mrb[0].mxu0
      %v556 = vadd.f32 %v327, %v555
      %557 = vdwg.mxu0
      %558 = vst [vmem:[#allocation4] sm:$0xff] %v399
      %559 = vst [vmem:[#allocation4 + $0x8] sm:$0xff] %v401
      %560 = vst [vmem:[#allocation4 + $0x10] sm:$0xff] %v512
      %561 = vst [vmem:[#allocation4 + $0x18] sm:$0xff] %v514
      %562 = vst [vmem:[#allocation4 + $0x20] sm:$0xff] %v405
      %563 = vst [vmem:[#allocation4 + $0x28] sm:$0xff] %v407
      %564 = vst [vmem:[#allocation4 + $0x30] sm:$0xff] %v518
      %565 = vst [vmem:[#allocation4 + $0x38] sm:$0xff] %v520
      %566 = vst [vmem:[#allocation4 + $0x40] sm:$0xff] %v411
      %567 = vst [vmem:[#allocation4 + $0x48] sm:$0xff] %v413
      %568 = vst [vmem:[#allocation4 + $0x50] sm:$0xff] %v524
      %569 = vst [vmem:[#allocation4 + $0x58] sm:$0xff] %v526
      %570 = vst [vmem:[#allocation4 + $0x60] sm:$0xff] %v417
      %571 = vst [vmem:[#allocation4 + $0x68] sm:$0xff] %v419
      %572 = vst [vmem:[#allocation4 + $0x70] sm:$0xff] %v530
      %573 = vst [vmem:[#allocation4 + $0x78] sm:$0xff] %v532
      %574 = vst [vmem:[#allocation4 + $0x80] sm:$0xff] %v423
      %575 = vst [vmem:[#allocation4 + $0x88] sm:$0xff] %v425
      %576 = vst [vmem:[#allocation4 + $0x90] sm:$0xff] %v536
      %577 = vst [vmem:[#allocation4 + $0x98] sm:$0xff] %v538
      %578 = vst [vmem:[#allocation4 + $0xa0] sm:$0xff] %v429
      %579 = vst [vmem:[#allocation4 + $0xa8] sm:$0xff] %v431
      %580 = vst [vmem:[#allocation4 + $0xb0] sm:$0xff] %v542
      %581 = vst [vmem:[#allocation4 + $0xb8] sm:$0xff] %v544
      %582 = vst [vmem:[#allocation4 + $0xc0] sm:$0xff] %v435
      %583 = vst [vmem:[#allocation4 + $0xc8] sm:$0xff] %v437
      %584 = vst [vmem:[#allocation4 + $0xd0] sm:$0xff] %v548
      %585 = vst [vmem:[#allocation4 + $0xd8] sm:$0xff] %v550
      %586 = vst [vmem:[#allocation4 + $0xe0] sm:$0xff] %v441
      %587 = vst [vmem:[#allocation4 + $0xe8] sm:$0xff] %v443
      %588 = vst [vmem:[#allocation4 + $0xf0] sm:$0xff] %v554
      %589 = vst [vmem:[#allocation4 + $0xf8] sm:$0xff] %v556
      %v590 = vld [vmem:[%s2] sm:$0xff]
      %v591 = vld [vmem:[%s2 + $0x8] sm:$0xff]
      %v592 = vld [vmem:[%s2 + $0x10] sm:$0xff]
      %v593 = vld [vmem:[%s2 + $0x18] sm:$0xff]
      %v594 = vld [vmem:[%s2 + $0x20] sm:$0xff]
      %v595 = vld [vmem:[%s2 + $0x28] sm:$0xff]
      %v596 = vld [vmem:[%s2 + $0x30] sm:$0xff]
      %v597 = vld [vmem:[%s2 + $0x38] sm:$0xff]
      %v598 = vld [vmem:[%s2 + $0x40] sm:$0xff]
      %v599 = vld [vmem:[%s2 + $0x48] sm:$0xff]
      %v600 = vld [vmem:[%s2 + $0x50] sm:$0xff]
      %v601 = vld [vmem:[%s2 + $0x58] sm:$0xff]
      %v602 = vld [vmem:[%s2 + $0x60] sm:$0xff]
      %v603 = vld [vmem:[%s2 + $0x68] sm:$0xff]
      %v604 = vld [vmem:[%s2 + $0x70] sm:$0xff]
      %v605 = vld [vmem:[%s2 + $0x78] sm:$0xff]
      %v606 = vld [vmem:[%s2 + $0x80] sm:$0xff]
      %v607 = vld [vmem:[%s2 + $0x88] sm:$0xff]
      %v608 = vld [vmem:[%s2 + $0x90] sm:$0xff]
      %v609 = vld [vmem:[%s2 + $0x98] sm:$0xff]
      %v610 = vld [vmem:[%s2 + $0xa0] sm:$0xff]
      %v611 = vld [vmem:[%s2 + $0xa8] sm:$0xff]
      %v612 = vld [vmem:[%s2 + $0xb0] sm:$0xff]
      %v613 = vld [vmem:[%s2 + $0xb8] sm:$0xff]
      %v614 = vld [vmem:[%s2 + $0xc0] sm:$0xff]
      %v615 = vld [vmem:[%s2 + $0xc8] sm:$0xff]
      %v616 = vld [vmem:[%s2 + $0xd0] sm:$0xff]
      %v617 = vld [vmem:[%s2 + $0xd8] sm:$0xff]
      %v618 = vld [vmem:[%s2 + $0xe0] sm:$0xff]
      %v619 = vld [vmem:[%s2 + $0xe8] sm:$0xff]
      %v620 = vld [vmem:[%s2 + $0xf0] sm:$0xff]
      %v621 = vld [vmem:[%s2 + $0xf8] sm:$0xff]
      %v622 = vld [vmem:[%s2 + $0x100] sm:$0xff]
      %v623 = vld [vmem:[%s2 + $0x108] sm:$0xff]
      %v624 = vld [vmem:[%s2 + $0x110] sm:$0xff]
      %v625 = vld [vmem:[%s2 + $0x118] sm:$0xff]
      %v626 = vld [vmem:[%s2 + $0x120] sm:$0xff]
      %v627 = vld [vmem:[%s2 + $0x128] sm:$0xff]
      %v628 = vld [vmem:[%s2 + $0x130] sm:$0xff]
      %v629 = vld [vmem:[%s2 + $0x138] sm:$0xff]
      %v630 = vld [vmem:[%s2 + $0x140] sm:$0xff]
      %v631 = vld [vmem:[%s2 + $0x148] sm:$0xff]
      %v632 = vld [vmem:[%s2 + $0x150] sm:$0xff]
      %v633 = vld [vmem:[%s2 + $0x158] sm:$0xff]
      %v634 = vld [vmem:[%s2 + $0x160] sm:$0xff]
      %v635 = vld [vmem:[%s2 + $0x168] sm:$0xff]
      %v636 = vld [vmem:[%s2 + $0x170] sm:$0xff]
      %v637 = vld [vmem:[%s2 + $0x178] sm:$0xff]
      %v638 = vld [vmem:[%s2 + $0x180] sm:$0xff]
      %v639 = vld [vmem:[%s2 + $0x188] sm:$0xff]
      %v640 = vld [vmem:[%s2 + $0x190] sm:$0xff]
      %v641 = vld [vmem:[%s2 + $0x198] sm:$0xff]
      %v642 = vld [vmem:[%s2 + $0x1a0] sm:$0xff]
      %v643 = vld [vmem:[%s2 + $0x1a8] sm:$0xff]
      %v644 = vld [vmem:[%s2 + $0x1b0] sm:$0xff]
      %v645 = vld [vmem:[%s2 + $0x1b8] sm:$0xff]
      %v646 = vld [vmem:[%s2 + $0x1c0] sm:$0xff]
      %v647 = vld [vmem:[%s2 + $0x1c8] sm:$0xff]
      %v648 = vld [vmem:[%s2 + $0x1d0] sm:$0xff]
      %v649 = vld [vmem:[%s2 + $0x1d8] sm:$0xff]
      %v650 = vld [vmem:[%s2 + $0x1e0] sm:$0xff]
      %v651 = vld [vmem:[%s2 + $0x1e8] sm:$0xff]
      %v652 = vld [vmem:[%s2 + $0x1f0] sm:$0xff]
      %v653 = vld [vmem:[%s2 + $0x1f8] sm:$0xff]
      %v654 = vld [vmem:[#allocation2] sm:$0xff]
      %v655 = vld [vmem:[#allocation3] sm:$0xff]
      %s656 = smul.u32 0, 4
      %s657 = smul.addr %s656, 8
      %s658 = scalar_lea.vmem [#allocation4], %s657
      %v659 = vld [vmem:[%s658] sm:$0xff]
      %v660 = vld [vmem:[%s658 + $0x8] sm:$0xff]
      %v661 = vld [vmem:[%s658 + $0x10] sm:$0xff]
      %v662 = vld [vmem:[%s658 + $0x18] sm:$0xff]
      %663 = vmatprep.subr.mxu0 %v591
      %664 = vmatpush1.msra.mxu0 %v590
      %665 = vmatprep.subr.mxu0 %v595
      %666 = vmatpush1.msra.mxu0 %v594
      %667 = vmatprep.subr.mxu0 %v599
      %668 = vmatpush1.msra.mxu0 %v598
      %669 = vmatprep.subr.mxu0 %v603
      %670 = vmatpush1.msra.mxu0 %v602
      %671 = vmatprep.subr.mxu0 %v607
      %672 = vmatpush1.msra.mxu0 %v606
      %673 = vmatprep.subr.mxu0 %v611
      %674 = vmatpush1.msra.mxu0 %v610
      %675 = vmatprep.subr.mxu0 %v615
      %676 = vmatpush1.msra.mxu0 %v614
      %677 = vmatprep.subr.mxu0 %v619
      %678 = vmatpush1.msra.mxu0 %v618
      %679 = vmatprep.subr.mxu0 %v623
      %680 = vmatpush1.msra.mxu0 %v622
      %681 = vmatprep.subr.mxu0 %v627
      %682 = vmatpush1.msra.mxu0 %v626
      %683 = vmatprep.subr.mxu0 %v631
      %684 = vmatpush1.msra.mxu0 %v630
      %685 = vmatprep.subr.mxu0 %v635
      %686 = vmatpush1.msra.mxu0 %v634
      %687 = vmatprep.subr.mxu0 %v639
      %688 = vmatpush1.msra.mxu0 %v638
      %689 = vmatprep.subr.mxu0 %v643
      %690 = vmatpush1.msra.mxu0 %v642
      %691 = vmatprep.subr.mxu0 %v647
      %692 = vmatpush1.msra.mxu0 %v646
      %693 = vmatprep.subr.mxu0 %v651
      %694 = vmatpush1.msra.mxu0 %v650
      %695 = vmatprep.subr.mxu0 0.0
      %696 = vmatpush1.msra.mxu0 0.0
      %697 = vmatprep.subr.mxu0 0.0
      %698 = vmatpush1.msra.mxu0 0.0
      %699 = vmatprep.subr.mxu0 0.0
      %700 = vmatpush1.msra.mxu0 0.0
      %701 = vmatprep.subr.mxu0 0.0
      %702 = vmatpush1.msra.mxu0 0.0
      %703 = vmatprep.subr.mxu0 0.0
      %704 = vmatpush1.msra.mxu0 0.0
      %705 = vmatprep.subr.mxu0 0.0
      %706 = vmatpush1.msra.mxu0 0.0
      %707 = vmatprep.subr.mxu0 0.0
      %708 = vmatpush1.msra.mxu0 0.0
      %709 = vmatprep.subr.mxu0 0.0
      %710 = vmatpush1.msra.mxu0 0.0
      %711 = vmatprep.subr.mxu0 0.0
      %712 = vmatpush1.msra.mxu0 0.0
      %713 = vmatprep.subr.mxu0 0.0
      %714 = vmatpush1.msra.mxu0 0.0
      %715 = vmatprep.subr.mxu0 0.0
      %716 = vmatpush1.msra.mxu0 0.0
      %717 = vmatprep.subr.mxu0 0.0
      %718 = vmatpush1.msra.mxu0 0.0
      %719 = vmatprep.subr.mxu0 0.0
      %720 = vmatpush1.msra.mxu0 0.0
      %721 = vmatprep.subr.mxu0 0.0
      %722 = vmatpush1.msra.mxu0 0.0
      %723 = vmatprep.subr.mxu0 0.0
      %724 = vmatpush1.msra.mxu0 0.0
      %725 = vmatprep.subr.mxu0 0.0
      %726 = vmatpush1.msra.mxu0 0.0
      %727 = vmatprep.mubr.f32.mxu0 0.0
      %728 = vmatmul.mubr.f32.gmra.mrb[0].mxu0 %v654
      %v729 = vpop.f32.mrb[0].mxu0
      %v730 = vadd.f32 0.0, %v729
      %v731 = vpop.f32.mrb[0].mxu0
      %v732 = vadd.f32 0.0, %v731
      %733 = vdwg.mxu0
      %734 = vmatprep.subr.mxu0 %v593
      %735 = vmatpush1.msra.mxu0 %v592
      %736 = vmatprep.subr.mxu0 %v597
      %737 = vmatpush1.msra.mxu0 %v596
      %738 = vmatprep.subr.mxu0 %v601
      %739 = vmatpush1.msra.mxu0 %v600
      %740 = vmatprep.subr.mxu0 %v605
      %741 = vmatpush1.msra.mxu0 %v604
      %742 = vmatprep.subr.mxu0 %v609
      %743 = vmatpush1.msra.mxu0 %v608
      %744 = vmatprep.subr.mxu0 %v613
      %745 = vmatpush1.msra.mxu0 %v612
      %746 = vmatprep.subr.mxu0 %v617
      %747 = vmatpush1.msra.mxu0 %v616
      %748 = vmatprep.subr.mxu0 %v621
      %749 = vmatpush1.msra.mxu0 %v620
      %750 = vmatprep.subr.mxu0 %v625
      %751 = vmatpush1.msra.mxu0 %v624
      %752 = vmatprep.subr.mxu0 %v629
      %753 = vmatpush1.msra.mxu0 %v628
      %754 = vmatprep.subr.mxu0 %v633
      %755 = vmatpush1.msra.mxu0 %v632
      %756 = vmatprep.subr.mxu0 %v637
      %757 = vmatpush1.msra.mxu0 %v636
      %758 = vmatprep.subr.mxu0 %v641
      %759 = vmatpush1.msra.mxu0 %v640
      %760 = vmatprep.subr.mxu0 %v645
      %761 = vmatpush1.msra.mxu0 %v644
      %762 = vmatprep.subr.mxu0 %v649
      %763 = vmatpush1.msra.mxu0 %v648
      %764 = vmatprep.subr.mxu0 %v653
      %765 = vmatpush1.msra.mxu0 %v652
      %766 = vmatprep.subr.mxu0 0.0
      %767 = vmatpush1.msra.mxu0 0.0
      %768 = vmatprep.subr.mxu0 0.0
      %769 = vmatpush1.msra.mxu0 0.0
      %770 = vmatprep.subr.mxu0 0.0
      %771 = vmatpush1.msra.mxu0 0.0
      %772 = vmatprep.subr.mxu0 0.0
      %773 = vmatpush1.msra.mxu0 0.0
      %774 = vmatprep.subr.mxu0 0.0
      %775 = vmatpush1.msra.mxu0 0.0
      %776 = vmatprep.subr.mxu0 0.0
      %777 = vmatpush1.msra.mxu0 0.0
      %778 = vmatprep.subr.mxu0 0.0
      %779 = vmatpush1.msra.mxu0 0.0
      %780 = vmatprep.subr.mxu0 0.0
      %781 = vmatpush1.msra.mxu0 0.0
      %782 = vmatprep.subr.mxu0 0.0
      %783 = vmatpush1.msra.mxu0 0.0
      %784 = vmatprep.subr.mxu0 0.0
      %785 = vmatpush1.msra.mxu0 0.0
      %786 = vmatprep.subr.mxu0 0.0
      %787 = vmatpush1.msra.mxu0 0.0
      %788 = vmatprep.subr.mxu0 0.0
      %789 = vmatpush1.msra.mxu0 0.0
      %790 = vmatprep.subr.mxu0 0.0
      %791 = vmatpush1.msra.mxu0 0.0
      %792 = vmatprep.subr.mxu0 0.0
      %793 = vmatpush1.msra.mxu0 0.0
      %794 = vmatprep.subr.mxu0 0.0
      %795 = vmatpush1.msra.mxu0 0.0
      %796 = vmatprep.subr.mxu0 0.0
      %797 = vmatpush1.msra.mxu0 0.0
      %798 = vmatprep.mubr.f32.mxu0 0.0
      %799 = vmatmul.mubr.f32.gmra.mrb[0].mxu0 %v654
      %v800 = vpop.f32.mrb[0].mxu0
      %v801 = vadd.f32 0.0, %v800
      %v802 = vpop.f32.mrb[0].mxu0
      %v803 = vadd.f32 0.0, %v802
      %804 = vdwg.mxu0
      %v805 = vadd.f32 %v659, %v730
      %v806 = vadd.f32 %v660, %v732
      %v807 = vadd.f32 %v661, %v801
      %v808 = vadd.f32 %v662, %v803
      %v809 = vxor.u32 %v805, 2147483648
      %v810 = vxor.u32 %v806, 2147483648
      %v811 = vxor.u32 %v807, 2147483648
      %v812 = vmul.f32 %v809, 1.442695
      %v813 = vpow.pop %v812
      %v814 = vmul.f32 %v810, 1.442695
      %v815 = vpow.pop %v814
      %v816 = vmul.f32 %v811, 1.442695
      %v817 = vpow.pop %v816
      %v818 = vadd.f32 %v813, 1.0
      %v819 = vadd.f32 %v815, 1.0
      %v820 = vadd.f32 %v817, 1.0
      %v821 = vrcp.pop %v818
      %v822 = vmul.f32 1.0, %v821
      %v823 = vrcp.pop %v819
      %v824 = vmul.f32 1.0, %v823
      %v825 = vrcp.pop %v820
      %v826 = vmul.f32 1.0, %v825
      %v827 = vtanh.pop %v808
      %v828 = vmul.f32 %v824, %v655
      %v829 = vmul.f32 %v822, %v827
      %v830 = vadd.f32 %v828, %v829
      %v831 = vtanh.pop %v830
      %v832 = vmul.f32 %v826, %v831
      %833 = vst [vmem:[%s230] sm:$0xff] %v832
      %s834 = smul.u32 1, 4
      %s835 = smul.addr %s834, 8
      %s836 = scalar_lea.vmem [#allocation4], %s835
      %v837 = vld [vmem:[%s836] sm:$0xff]
      %v838 = vld [vmem:[%s836 + $0x8] sm:$0xff]
      %v839 = vld [vmem:[%s836 + $0x10] sm:$0xff]
      %v840 = vld [vmem:[%s836 + $0x18] sm:$0xff]
      %841 = vmatprep.subr.mxu0 %v591
      %842 = vmatpush1.msra.mxu0 %v590
      %843 = vmatprep.subr.mxu0 %v595
      %844 = vmatpush1.msra.mxu0 %v594
      %845 = vmatprep.subr.mxu0 %v599
      %846 = vmatpush1.msra.mxu0 %v598
      %847 = vmatprep.subr.mxu0 %v603
      %848 = vmatpush1.msra.mxu0 %v602
      %849 = vmatprep.subr.mxu0 %v607
      %850 = vmatpush1.msra.mxu0 %v606
      %851 = vmatprep.subr.mxu0 %v611
      %852 = vmatpush1.msra.mxu0 %v610
      %853 = vmatprep.subr.mxu0 %v615
      %854 = vmatpush1.msra.mxu0 %v614
      %855 = vmatprep.subr.mxu0 %v619
      %856 = vmatpush1.msra.mxu0 %v618
      %857 = vmatprep.subr.mxu0 %v623
      %858 = vmatpush1.msra.mxu0 %v622
      %859 = vmatprep.subr.mxu0 %v627
      %860 = vmatpush1.msra.mxu0 %v626
      %861 = vmatprep.subr.mxu0 %v631
      %862 = vmatpush1.msra.mxu0 %v630
      %863 = vmatprep.subr.mxu0 %v635
      %864 = vmatpush1.msra.mxu0 %v634
      %865 = vmatprep.subr.mxu0 %v639
      %866 = vmatpush1.msra.mxu0 %v638
      %867 = vmatprep.subr.mxu0 %v643
      %868 = vmatpush1.msra.mxu0 %v642
      %869 = vmatprep.subr.mxu0 %v647
      %870 = vmatpush1.msra.mxu0 %v646
      %871 = vmatprep.subr.mxu0 %v651
      %872 = vmatpush1.msra.mxu0 %v650
      %873 = vmatprep.subr.mxu0 0.0
      %874 = vmatpush1.msra.mxu0 0.0
      %875 = vmatprep.subr.mxu0 0.0
      %876 = vmatpush1.msra.mxu0 0.0
      %877 = vmatprep.subr.mxu0 0.0
      %878 = vmatpush1.msra.mxu0 0.0
      %879 = vmatprep.subr.mxu0 0.0
      %880 = vmatpush1.msra.mxu0 0.0
      %881 = vmatprep.subr.mxu0 0.0
      %882 = vmatpush1.msra.mxu0 0.0
      %883 = vmatprep.subr.mxu0 0.0
      %884 = vmatpush1.msra.mxu0 0.0
      %885 = vmatprep.subr.mxu0 0.0
      %886 = vmatpush1.msra.mxu0 0.0
      %887 = vmatprep.subr.mxu0 0.0
      %888 = vmatpush1.msra.mxu0 0.0
      %889 = vmatprep.subr.mxu0 0.0
      %890 = vmatpush1.msra.mxu0 0.0
      %891 = vmatprep.subr.mxu0 0.0
      %892 = vmatpush1.msra.mxu0 0.0
      %893 = vmatprep.subr.mxu0 0.0
      %894 = vmatpush1.msra.mxu0 0.0
      %895 = vmatprep.subr.mxu0 0.0
      %896 = vmatpush1.msra.mxu0 0.0
      %897 = vmatprep.subr.mxu0 0.0
      %898 = vmatpush1.msra.mxu0 0.0
      %899 = vmatprep.subr.mxu0 0.0
      %900 = vmatpush1.msra.mxu0 0.0
      %901 = vmatprep.subr.mxu0 0.0
      %902 = vmatpush1.msra.mxu0 0.0
      %903 = vmatprep.subr.mxu0 0.0
      %904 = vmatpush1.msra.mxu0 0.0
      %905 = vmatprep.mubr.f32.mxu0 0.0
      %906 = vmatmul.mubr.f32.gmra.mrb[0].mxu0 %v832
      %v907 = vpop.f32.mrb[0].mxu0
      %v908 = vadd.f32 0.0, %v907
      %v909 = vpop.f32.mrb[0].mxu0
      %v910 = vadd.f32 0.0, %v909
      %911 = vdwg.mxu0
      %912 = vmatprep.subr.mxu0 %v593
      %913 = vmatpush1.msra.mxu0 %v592
      %914 = vmatprep.subr.mxu0 %v597
      %915 = vmatpush1.msra.mxu0 %v596
      %916 = vmatprep.subr.mxu0 %v601
      %917 = vmatpush1.msra.mxu0 %v600
      %918 = vmatprep.subr.mxu0 %v605
      %919 = vmatpush1.msra.mxu0 %v604
      %920 = vmatprep.subr.mxu0 %v609
      %921 = vmatpush1.msra.mxu0 %v608
      %922 = vmatprep.subr.mxu0 %v613
      %923 = vmatpush1.msra.mxu0 %v612
      %924 = vmatprep.subr.mxu0 %v617
      %925 = vmatpush1.msra.mxu0 %v616
      %926 = vmatprep.subr.mxu0 %v621
      %927 = vmatpush1.msra.mxu0 %v620
      %928 = vmatprep.subr.mxu0 %v625
      %929 = vmatpush1.msra.mxu0 %v624
      %930 = vmatprep.subr.mxu0 %v629
      %931 = vmatpush1.msra.mxu0 %v628
      %932 = vmatprep.subr.mxu0 %v633
      %933 = vmatpush1.msra.mxu0 %v632
      %934 = vmatprep.subr.mxu0 %v637
      %935 = vmatpush1.msra.mxu0 %v636
      %936 = vmatprep.subr.mxu0 %v641
      %937 = vmatpush1.msra.mxu0 %v640
      %938 = vmatprep.subr.mxu0 %v645
      %939 = vmatpush1.msra.mxu0 %v644
      %940 = vmatprep.subr.mxu0 %v649
      %941 = vmatpush1.msra.mxu0 %v648
      %942 = vmatprep.subr.mxu0 %v653
      %943 = vmatpush1.msra.mxu0 %v652
      %944 = vmatprep.subr.mxu0 0.0
      %945 = vmatpush1.msra.mxu0 0.0
      %946 = vmatprep.subr.mxu0 0.0
      %947 = vmatpush1.msra.mxu0 0.0
      %948 = vmatprep.subr.mxu0 0.0
      %949 = vmatpush1.msra.mxu0 0.0
      %950 = vmatprep.subr.mxu0 0.0
      %951 = vmatpush1.msra.mxu0 0.0
      %952 = vmatprep.subr.mxu0 0.0
      %953 = vmatpush1.msra.mxu0 0.0
      %954 = vmatprep.subr.mxu0 0.0
      %955 = vmatpush1.msra.mxu0 0.0
      %956 = vmatprep.subr.mxu0 0.0
      %957 = vmatpush1.msra.mxu0 0.0
      %958 = vmatprep.subr.mxu0 0.0
      %959 = vmatpush1.msra.mxu0 0.0
      %960 = vmatprep.subr.mxu0 0.0
      %961 = vmatpush1.msra.mxu0 0.0
      %962 = vmatprep.subr.mxu0 0.0
      %963 = vmatpush1.msra.mxu0 0.0
      %964 = vmatprep.subr.mxu0 0.0
      %965 = vmatpush1.msra.mxu0 0.0
      %966 = vmatprep.subr.mxu0 0.0
      %967 = vmatpush1.msra.mxu0 0.0
      %968 = vmatprep.subr.mxu0 0.0
      %969 = vmatpush1.msra.mxu0 0.0
      %970 = vmatprep.subr.mxu0 0.0
      %971 = vmatpush1.msra.mxu0 0.0
      %972 = vmatprep.subr.mxu0 0.0
      %973 = vmatpush1.msra.mxu0 0.0
      %974 = vmatprep.subr.mxu0 0.0
      %975 = vmatpush1.msra.mxu0 0.0
      %976 = vmatprep.mubr.f32.mxu0 0.0
      %977 = vmatmul.mubr.f32.gmra.mrb[0].mxu0 %v832
      %v978 = vpop.f32.mrb[0].mxu0
      %v979 = vadd.f32 0.0, %v978
      %v980 = vpop.f32.mrb[0].mxu0
      %v981 = vadd.f32 0.0, %v980
      %982 = vdwg.mxu0
      %v983 = vadd.f32 %v837, %v908
      %v984 = vadd.f32 %v838, %v910
      %v985 = vadd.f32 %v839, %v979
      %v986 = vadd.f32 %v840, %v981
      %v987 = vxor.u32 %v983, 2147483648
      %v988 = vxor.u32 %v984, 2147483648
      %v989 = vxor.u32 %v985, 2147483648
      %v990 = vmul.f32 %v987, 1.442695
      %v991 = vpow.pop %v990
      %v992 = vmul.f32 %v988, 1.442695
      %v993 = vpow.pop %v992
      %v994 = vmul.f32 %v989, 1.442695
      %v995 = vpow.pop %v994
      %v996 = vadd.f32 %v991, 1.0
      %v997 = vadd.f32 %v993, 1.0
      %v998 = vadd.f32 %v995, 1.0
      %v999 = vrcp.pop %v996
      %v1000 = vmul.f32 1.0, %v999
      %v1001 = vrcp.pop %v997
      %v1002 = vmul.f32 1.0, %v1001
      %v1003 = vrcp.pop %v998
      %v1004 = vmul.f32 1.0, %v1003
      %v1005 = vtanh.pop %v986
      %v1006 = vmul.f32 %v1002, %v830
      %v1007 = vmul.f32 %v1000, %v1005
      %v1008 = vadd.f32 %v1006, %v1007
      %v1009 = vtanh.pop %v1008
      %v1010 = vmul.f32 %v1004, %v1009
      %s1011 = scalar_lea.vmem %s230, 8
      %1012 = vst [vmem:[%s1011] sm:$0xff] %v1010
      %s1013 = smul.u32 2, 4
      %s1014 = smul.addr %s1013, 8
      %s1015 = scalar_lea.vmem [#allocation4], %s1014
      %v1016 = vld [vmem:[%s1015] sm:$0xff]
      %v1017 = vld [vmem:[%s1015 + $0x8] sm:$0xff]
      %v1018 = vld [vmem:[%s1015 + $0x10] sm:$0xff]
      %v1019 = vld [vmem:[%s1015 + $0x18] sm:$0xff]
      %1020 = vmatprep.subr.mxu0 %v591
      %1021 = vmatpush1.msra.mxu0 %v590
      %1022 = vmatprep.subr.mxu0 %v595
      %1023 = vmatpush1.msra.mxu0 %v594
      %1024 = vmatprep.subr.mxu0 %v599
      %1025 = vmatpush1.msra.mxu0 %v598
      %1026 = vmatprep.subr.mxu0 %v603
      %1027 = vmatpush1.msra.mxu0 %v602
      %1028 = vmatprep.subr.mxu0 %v607
      %1029 = vmatpush1.msra.mxu0 %v606
      %1030 = vmatprep.subr.mxu0 %v611
      %1031 = vmatpush1.msra.mxu0 %v610
      %1032 = vmatprep.subr.mxu0 %v615
      %1033 = vmatpush1.msra.mxu0 %v614
      %1034 = vmatprep.subr.mxu0 %v619
      %1035 = vmatpush1.msra.mxu0 %v618
      %1036 = vmatprep.subr.mxu0 %v623
      %1037 = vmatpush1.msra.mxu0 %v622
      %1038 = vmatprep.subr.mxu0 %v627
      %1039 = vmatpush1.msra.mxu0 %v626
      %1040 = vmatprep.subr.mxu0 %v631
      %1041 = vmatpush1.msra.mxu0 %v630
      %1042 = vmatprep.subr.mxu0 %v635
      %1043 = vmatpush1.msra.mxu0 %v634
      %1044 = vmatprep.subr.mxu0 %v639
      %1045 = vmatpush1.msra.mxu0 %v638
      %1046 = vmatprep.subr.mxu0 %v643
      %1047 = vmatpush1.msra.mxu0 %v642
      %1048 = vmatprep.subr.mxu0 %v647
      %1049 = vmatpush1.msra.mxu0 %v646
      %1050 = vmatprep.subr.mxu0 %v651
      %1051 = vmatpush1.msra.mxu0 %v650
      %1052 = vmatprep.subr.mxu0 0.0
      %1053 = vmatpush1.msra.mxu0 0.0
      %1054 = vmatprep.subr.mxu0 0.0
      %1055 = vmatpush1.msra.mxu0 0.0
      %1056 = vmatprep.subr.mxu0 0.0
      %1057 = vmatpush1.msra.mxu0 0.0
      %1058 = vmatprep.subr.mxu0 0.0
      %1059 = vmatpush1.msra.mxu0 0.0
      %1060 = vmatprep.subr.mxu0 0.0
      %1061 = vmatpush1.msra.mxu0 0.0
      %1062 = vmatprep.subr.mxu0 0.0
      %1063 = vmatpush1.msra.mxu0 0.0
      %1064 = vmatprep.subr.mxu0 0.0
      %1065 = vmatpush1.msra.mxu0 0.0
      %1066 = vmatprep.subr.mxu0 0.0
      %1067 = vmatpush1.msra.mxu0 0.0
      %1068 = vmatprep.subr.mxu0 0.0
      %1069 = vmatpush1.msra.mxu0 0.0
      %1070 = vmatprep.subr.mxu0 0.0
      %1071 = vmatpush1.msra.mxu0 0.0
      %1072 = vmatprep.subr.mxu0 0.0
      %1073 = vmatpush1.msra.mxu0 0.0
      %1074 = vmatprep.subr.mxu0 0.0
      %1075 = vmatpush1.msra.mxu0 0.0
      %1076 = vmatprep.subr.mxu0 0.0
      %1077 = vmatpush1.msra.mxu0 0.0
      %1078 = vmatprep.subr.mxu0 0.0
      %1079 = vmatpush1.msra.mxu0 0.0
      %1080 = vmatprep.subr.mxu0 0.0
      %1081 = vmatpush1.msra.mxu0 0.0
      %1082 = vmatprep.subr.mxu0 0.0
      %1083 = vmatpush1.msra.mxu0 0.0
      %1084 = vmatprep.mubr.f32.mxu0 0.0
      %1085 = vmatmul.mubr.f32.gmra.mrb[0].mxu0 %v1010
      %v1086 = vpop.f32.mrb[0].mxu0
      %v1087 = vadd.f32 0.0, %v1086
      %v1088 = vpop.f32.mrb[0].mxu0
      %v1089 = vadd.f32 0.0, %v1088
      %1090 = vdwg.mxu0
      %1091 = vmatprep.subr.mxu0 %v593
      %1092 = vmatpush1.msra.mxu0 %v592
      %1093 = vmatprep.subr.mxu0 %v597
      %1094 = vmatpush1.msra.mxu0 %v596
      %1095 = vmatprep.subr.mxu0 %v601
      %1096 = vmatpush1.msra.mxu0 %v600
      %1097 = vmatprep.subr.mxu0 %v605
      %1098 = vmatpush1.msra.mxu0 %v604
      %1099 = vmatprep.subr.mxu0 %v609
      %1100 = vmatpush1.msra.mxu0 %v608
      %1101 = vmatprep.subr.mxu0 %v613
      %1102 = vmatpush1.msra.mxu0 %v612
      %1103 = vmatprep.subr.mxu0 %v617
      %1104 = vmatpush1.msra.mxu0 %v616
      %1105 = vmatprep.subr.mxu0 %v621
      %1106 = vmatpush1.msra.mxu0 %v620
      %1107 = vmatprep.subr.mxu0 %v625
      %1108 = vmatpush1.msra.mxu0 %v624
      %1109 = vmatprep.subr.mxu0 %v629
      %1110 = vmatpush1.msra.mxu0 %v628
      %1111 = vmatprep.subr.mxu0 %v633
      %1112 = vmatpush1.msra.mxu0 %v632
      %1113 = vmatprep.subr.mxu0 %v637
      %1114 = vmatpush1.msra.mxu0 %v636
      %1115 = vmatprep.subr.mxu0 %v641
      %1116 = vmatpush1.msra.mxu0 %v640
      %1117 = vmatprep.subr.mxu0 %v645
      %1118 = vmatpush1.msra.mxu0 %v644
      %1119 = vmatprep.subr.mxu0 %v649
      %1120 = vmatpush1.msra.mxu0 %v648
      %1121 = vmatprep.subr.mxu0 %v653
      %1122 = vmatpush1.msra.mxu0 %v652
      %1123 = vmatprep.subr.mxu0 0.0
      %1124 = vmatpush1.msra.mxu0 0.0
      %1125 = vmatprep.subr.mxu0 0.0
      %1126 = vmatpush1.msra.mxu0 0.0
      %1127 = vmatprep.subr.mxu0 0.0
      %1128 = vmatpush1.msra.mxu0 0.0
      %1129 = vmatprep.subr.mxu0 0.0
      %1130 = vmatpush1.msra.mxu0 0.0
      %1131 = vmatprep.subr.mxu0 0.0
      %1132 = vmatpush1.msra.mxu0 0.0
      %1133 = vmatprep.subr.mxu0 0.0
      %1134 = vmatpush1.msra.mxu0 0.0
      %1135 = vmatprep.subr.mxu0 0.0
      %1136 = vmatpush1.msra.mxu0 0.0
      %1137 = vmatprep.subr.mxu0 0.0
      %1138 = vmatpush1.msra.mxu0 0.0
      %1139 = vmatprep.subr.mxu0 0.0
      %1140 = vmatpush1.msra.mxu0 0.0
      %1141 = vmatprep.subr.mxu0 0.0
      %1142 = vmatpush1.msra.mxu0 0.0
      %1143 = vmatprep.subr.mxu0 0.0
      %1144 = vmatpush1.msra.mxu0 0.0
      %1145 = vmatprep.subr.mxu0 0.0
      %1146 = vmatpush1.msra.mxu0 0.0
      %1147 = vmatprep.subr.mxu0 0.0
      %1148 = vmatpush1.msra.mxu0 0.0
      %1149 = vmatprep.subr.mxu0 0.0
      %1150 = vmatpush1.msra.mxu0 0.0
      %1151 = vmatprep.subr.mxu0 0.0
      %1152 = vmatpush1.msra.mxu0 0.0
      %1153 = vmatprep.subr.mxu0 0.0
      %1154 = vmatpush1.msra.mxu0 0.0
      %1155 = vmatprep.mubr.f32.mxu0 0.0
      %1156 = vmatmul.mubr.f32.gmra.mrb[0].mxu0 %v1010
      %v1157 = vpop.f32.mrb[0].mxu0
      %v1158 = vadd.f32 0.0, %v1157
      %v1159 = vpop.f32.mrb[0].mxu0
      %v1160 = vadd.f32 0.0, %v1159
      %1161 = vdwg.mxu0
      %v1162 = vadd.f32 %v1016, %v1087
      %v1163 = vadd.f32 %v1017, %v1089
      %v1164 = vadd.f32 %v1018, %v1158
      %v1165 = vadd.f32 %v1019, %v1160
      %v1166 = vxor.u32 %v1162, 2147483648
      %v1167 = vxor.u32 %v1163, 2147483648
      %v1168 = vxor.u32 %v1164, 2147483648
      %v1169 = vmul.f32 %v1166, 1.442695
      %v1170 = vpow.pop %v1169
      %v1171 = vmul.f32 %v1167, 1.442695
      %v1172 = vpow.pop %v1171
      %v1173 = vmul.f32 %v1168, 1.442695
      %v1174 = vpow.pop %v1173
      %v1175 = vadd.f32 %v1170, 1.0
      %v1176 = vadd.f32 %v1172, 1.0
      %v1177 = vadd.f32 %v1174, 1.0
      %v1178 = vrcp.pop %v1175
      %v1179 = vmul.f32 1.0, %v1178
      %v1180 = vrcp.pop %v1176
      %v1181 = vmul.f32 1.0, %v1180
      %v1182 = vrcp.pop %v1177
      %v1183 = vmul.f32 1.0, %v1182
      %v1184 = vtanh.pop %v1165
      %v1185 = vmul.f32 %v1181, %v1008
      %v1186 = vmul.f32 %v1179, %v1184
      %v1187 = vadd.f32 %v1185, %v1186
      %v1188 = vtanh.pop %v1187
      %v1189 = vmul.f32 %v1183, %v1188
      %s1190 = scalar_lea.vmem %s230, 16
      %1191 = vst [vmem:[%s1190] sm:$0xff] %v1189
      %s1192 = smul.u32 3, 4
      %s1193 = smul.addr %s1192, 8
      %s1194 = scalar_lea.vmem [#allocation4], %s1193
      %v1195 = vld [vmem:[%s1194] sm:$0xff]
      %v1196 = vld [vmem:[%s1194 + $0x8] sm:$0xff]
      %v1197 = vld [vmem:[%s1194 + $0x10] sm:$0xff]
      %v1198 = vld [vmem:[%s1194 + $0x18] sm:$0xff]
      %1199 = vmatprep.subr.mxu0 %v591
      %1200 = vmatpush1.msra.mxu0 %v590
      %1201 = vmatprep.subr.mxu0 %v595
      %1202 = vmatpush1.msra.mxu0 %v594
      %1203 = vmatprep.subr.mxu0 %v599
      %1204 = vmatpush1.msra.mxu0 %v598
      %1205 = vmatprep.subr.mxu0 %v603
      %1206 = vmatpush1.msra.mxu0 %v602
      %1207 = vmatprep.subr.mxu0 %v607
      %1208 = vmatpush1.msra.mxu0 %v606
      %1209 = vmatprep.subr.mxu0 %v611
      %1210 = vmatpush1.msra.mxu0 %v610
      %1211 = vmatprep.subr.mxu0 %v615
      %1212 = vmatpush1.msra.mxu0 %v614
      %1213 = vmatprep.subr.mxu0 %v619
      %1214 = vmatpush1.msra.mxu0 %v618
      %1215 = vmatprep.subr.mxu0 %v623
      %1216 = vmatpush1.msra.mxu0 %v622
      %1217 = vmatprep.subr.mxu0 %v627
      %1218 = vmatpush1.msra.mxu0 %v626
      %1219 = vmatprep.subr.mxu0 %v631
      %1220 = vmatpush1.msra.mxu0 %v630
      %1221 = vmatprep.subr.mxu0 %v635
      %1222 = vmatpush1.msra.mxu0 %v634
      %1223 = vmatprep.subr.mxu0 %v639
      %1224 = vmatpush1.msra.mxu0 %v638
      %1225 = vmatprep.subr.mxu0 %v643
      %1226 = vmatpush1.msra.mxu0 %v642
      %1227 = vmatprep.subr.mxu0 %v647
      %1228 = vmatpush1.msra.mxu0 %v646
      %1229 = vmatprep.subr.mxu0 %v651
      %1230 = vmatpush1.msra.mxu0 %v650
      %1231 = vmatprep.subr.mxu0 0.0
      %1232 = vmatpush1.msra.mxu0 0.0
      %1233 = vmatprep.subr.mxu0 0.0
      %1234 = vmatpush1.msra.mxu0 0.0
      %1235 = vmatprep.subr.mxu0 0.0
      %1236 = vmatpush1.msra.mxu0 0.0
      %1237 = vmatprep.subr.mxu0 0.0
      %1238 = vmatpush1.msra.mxu0 0.0
      %1239 = vmatprep.subr.mxu0 0.0
      %1240 = vmatpush1.msra.mxu0 0.0
      %1241 = vmatprep.subr.mxu0 0.0
      %1242 = vmatpush1.msra.mxu0 0.0
      %1243 = vmatprep.subr.mxu0 0.0
      %1244 = vmatpush1.msra.mxu0 0.0
      %1245 = vmatprep.subr.mxu0 0.0
      %1246 = vmatpush1.msra.mxu0 0.0
      %1247 = vmatprep.subr.mxu0 0.0
      %1248 = vmatpush1.msra.mxu0 0.0
      %1249 = vmatprep.subr.mxu0 0.0
      %1250 = vmatpush1.msra.mxu0 0.0
      %1251 = vmatprep.subr.mxu0 0.0
      %1252 = vmatpush1.msra.mxu0 0.0
      %1253 = vmatprep.subr.mxu0 0.0
      %1254 = vmatpush1.msra.mxu0 0.0
      %1255 = vmatprep.subr.mxu0 0.0
      %1256 = vmatpush1.msra.mxu0 0.0
      %1257 = vmatprep.subr.mxu0 0.0
      %1258 = vmatpush1.msra.mxu0 0.0
      %1259 = vmatprep.subr.mxu0 0.0
      %1260 = vmatpush1.msra.mxu0 0.0
      %1261 = vmatprep.subr.mxu0 0.0
      %1262 = vmatpush1.msra.mxu0 0.0
      %1263 = vmatprep.mubr.f32.mxu0 0.0
      %1264 = vmatmul.mubr.f32.gmra.mrb[0].mxu0 %v1189
      %v1265 = vpop.f32.mrb[0].mxu0
      %v1266 = vadd.f32 0.0, %v1265
      %v1267 = vpop.f32.mrb[0].mxu0
      %v1268 = vadd.f32 0.0, %v1267
      %1269 = vdwg.mxu0
      %1270 = vmatprep.subr.mxu0 %v593
      %1271 = vmatpush1.msra.mxu0 %v592
      %1272 = vmatprep.subr.mxu0 %v597
      %1273 = vmatpush1.msra.mxu0 %v596
      %1274 = vmatprep.subr.mxu0 %v601
      %1275 = vmatpush1.msra.mxu0 %v600
      %1276 = vmatprep.subr.mxu0 %v605
      %1277 = vmatpush1.msra.mxu0 %v604
      %1278 = vmatprep.subr.mxu0 %v609
      %1279 = vmatpush1.msra.mxu0 %v608
      %1280 = vmatprep.subr.mxu0 %v613
      %1281 = vmatpush1.msra.mxu0 %v612
      %1282 = vmatprep.subr.mxu0 %v617
      %1283 = vmatpush1.msra.mxu0 %v616
      %1284 = vmatprep.subr.mxu0 %v621
      %1285 = vmatpush1.msra.mxu0 %v620
      %1286 = vmatprep.subr.mxu0 %v625
      %1287 = vmatpush1.msra.mxu0 %v624
      %1288 = vmatprep.subr.mxu0 %v629
      %1289 = vmatpush1.msra.mxu0 %v628
      %1290 = vmatprep.subr.mxu0 %v633
      %1291 = vmatpush1.msra.mxu0 %v632
      %1292 = vmatprep.subr.mxu0 %v637
      %1293 = vmatpush1.msra.mxu0 %v636
      %1294 = vmatprep.subr.mxu0 %v641
      %1295 = vmatpush1.msra.mxu0 %v640
      %1296 = vmatprep.subr.mxu0 %v645
      %1297 = vmatpush1.msra.mxu0 %v644
      %1298 = vmatprep.subr.mxu0 %v649
      %1299 = vmatpush1.msra.mxu0 %v648
      %1300 = vmatprep.subr.mxu0 %v653
      %1301 = vmatpush1.msra.mxu0 %v652
      %1302 = vmatprep.subr.mxu0 0.0
      %1303 = vmatpush1.msra.mxu0 0.0
      %1304 = vmatprep.subr.mxu0 0.0
      %1305 = vmatpush1.msra.mxu0 0.0
      %1306 = vmatprep.subr.mxu0 0.0
      %1307 = vmatpush1.msra.mxu0 0.0
      %1308 = vmatprep.subr.mxu0 0.0
      %1309 = vmatpush1.msra.mxu0 0.0
      %1310 = vmatprep.subr.mxu0 0.0
      %1311 = vmatpush1.msra.mxu0 0.0
      %1312 = vmatprep.subr.mxu0 0.0
      %1313 = vmatpush1.msra.mxu0 0.0
      %1314 = vmatprep.subr.mxu0 0.0
      %1315 = vmatpush1.msra.mxu0 0.0
      %1316 = vmatprep.subr.mxu0 0.0
      %1317 = vmatpush1.msra.mxu0 0.0
      %1318 = vmatprep.subr.mxu0 0.0
      %1319 = vmatpush1.msra.mxu0 0.0
      %1320 = vmatprep.subr.mxu0 0.0
      %1321 = vmatpush1.msra.mxu0 0.0
      %1322 = vmatprep.subr.mxu0 0.0
      %1323 = vmatpush1.msra.mxu0 0.0
      %1324 = vmatprep.subr.mxu0 0.0
      %1325 = vmatpush1.msra.mxu0 0.0
      %1326 = vmatprep.subr.mxu0 0.0
      %1327 = vmatpush1.msra.mxu0 0.0
      %1328 = vmatprep.subr.mxu0 0.0
      %1329 = vmatpush1.msra.mxu0 0.0
      %1330 = vmatprep.subr.mxu0 0.0
      %1331 = vmatpush1.msra.mxu0 0.0
      %1332 = vmatprep.subr.mxu0 0.0
      %1333 = vmatpush1.msra.mxu0 0.0
      %1334 = vmatprep.mubr.f32.mxu0 0.0
      %1335 = vmatmul.mubr.f32.gmra.mrb[0].mxu0 %v1189
      %v1336 = vpop.f32.mrb[0].mxu0
      %v1337 = vadd.f32 0.0, %v1336
      %v1338 = vpop.f32.mrb[0].mxu0
      %v1339 = vadd.f32 0.0, %v1338
      %1340 = vdwg.mxu0
      %v1341 = vadd.f32 %v1195, %v1266
      %v1342 = vadd.f32 %v1196, %v1268
      %v1343 = vadd.f32 %v1197, %v1337
      %v1344 = vadd.f32 %v1198, %v1339
      %v1345 = vxor.u32 %v1341, 2147483648
      %v1346 = vxor.u32 %v1342, 2147483648
      %v1347 = vxor.u32 %v1343, 2147483648
      %v1348 = vmul.f32 %v1345, 1.442695
      %v1349 = vpow.pop %v1348
      %v1350 = vmul.f32 %v1346, 1.442695
      %v1351 = vpow.pop %v1350
      %v1352 = vmul.f32 %v1347, 1.442695
      %v1353 = vpow.pop %v1352
      %v1354 = vadd.f32 %v1349, 1.0
      %v1355 = vadd.f32 %v1351, 1.0
      %v1356 = vadd.f32 %v1353, 1.0
      %v1357 = vrcp.pop %v1354
      %v1358 = vmul.f32 1.0, %v1357
      %v1359 = vrcp.pop %v1355
      %v1360 = vmul.f32 1.0, %v1359
      %v1361 = vrcp.pop %v1356
      %v1362 = vmul.f32 1.0, %v1361
      %v1363 = vtanh.pop %v1344
      %v1364 = vmul.f32 %v1360, %v1187
      %v1365 = vmul.f32 %v1358, %v1363
      %v1366 = vadd.f32 %v1364, %v1365
      %v1367 = vtanh.pop %v1366
      %v1368 = vmul.f32 %v1362, %v1367
      %s1369 = scalar_lea.vmem %s230, 24
      %1370 = vst [vmem:[%s1369] sm:$0xff] %v1368
      %s1371 = smul.u32 4, 4
      %s1372 = smul.addr %s1371, 8
      %s1373 = scalar_lea.vmem [#allocation4], %s1372
      %v1374 = vld [vmem:[%s1373] sm:$0xff]
      %v1375 = vld [vmem:[%s1373 + $0x8] sm:$0xff]
      %v1376 = vld [vmem:[%s1373 + $0x10] sm:$0xff]
      %v1377 = vld [vmem:[%s1373 + $0x18] sm:$0xff]
      %1378 = vmatprep.subr.mxu0 %v591
      %1379 = vmatpush1.msra.mxu0 %v590
      %1380 = vmatprep.subr.mxu0 %v595
      %1381 = vmatpush1.msra.mxu0 %v594
      %1382 = vmatprep.subr.mxu0 %v599
      %1383 = vmatpush1.msra.mxu0 %v598
      %1384 = vmatprep.subr.mxu0 %v603
      %1385 = vmatpush1.msra.mxu0 %v602
      %1386 = vmatprep.subr.mxu0 %v607
      %1387 = vmatpush1.msra.mxu0 %v606
      %1388 = vmatprep.subr.mxu0 %v611
      %1389 = vmatpush1.msra.mxu0 %v610
      %1390 = vmatprep.subr.mxu0 %v615
      %1391 = vmatpush1.msra.mxu0 %v614
      %1392 = vmatprep.subr.mxu0 %v619
      %1393 = vmatpush1.msra.mxu0 %v618
      %1394 = vmatprep.subr.mxu0 %v623
      %1395 = vmatpush1.msra.mxu0 %v622
      %1396 = vmatprep.subr.mxu0 %v627
      %1397 = vmatpush1.msra.mxu0 %v626
      %1398 = vmatprep.subr.mxu0 %v631
      %1399 = vmatpush1.msra.mxu0 %v630
      %1400 = vmatprep.subr.mxu0 %v635
      %1401 = vmatpush1.msra.mxu0 %v634
      %1402 = vmatprep.subr.mxu0 %v639
      %1403 = vmatpush1.msra.mxu0 %v638
      %1404 = vmatprep.subr.mxu0 %v643
      %1405 = vmatpush1.msra.mxu0 %v642
      %1406 = vmatprep.subr.mxu0 %v647
      %1407 = vmatpush1.msra.mxu0 %v646
      %1408 = vmatprep.subr.mxu0 %v651
      %1409 = vmatpush1.msra.mxu0 %v650
      %1410 = vmatprep.subr.mxu0 0.0
      %1411 = vmatpush1.msra.mxu0 0.0
      %1412 = vmatprep.subr.mxu0 0.0
      %1413 = vmatpush1.msra.mxu0 0.0
      %1414 = vmatprep.subr.mxu0 0.0
      %1415 = vmatpush1.msra.mxu0 0.0
      %1416 = vmatprep.subr.mxu0 0.0
      %1417 = vmatpush1.msra.mxu0 0.0
      %1418 = vmatprep.subr.mxu0 0.0
      %1419 = vmatpush1.msra.mxu0 0.0
      %1420 = vmatprep.subr.mxu0 0.0
      %1421 = vmatpush1.msra.mxu0 0.0
      %1422 = vmatprep.subr.mxu0 0.0
      %1423 = vmatpush1.msra.mxu0 0.0
      %1424 = vmatprep.subr.mxu0 0.0
      %1425 = vmatpush1.msra.mxu0 0.0
      %1426 = vmatprep.subr.mxu0 0.0
      %1427 = vmatpush1.msra.mxu0 0.0
      %1428 = vmatprep.subr.mxu0 0.0
      %1429 = vmatpush1.msra.mxu0 0.0
      %1430 = vmatprep.subr.mxu0 0.0
      %1431 = vmatpush1.msra.mxu0 0.0
      %1432 = vmatprep.subr.mxu0 0.0
      %1433 = vmatpush1.msra.mxu0 0.0
      %1434 = vmatprep.subr.mxu0 0.0
      %1435 = vmatpush1.msra.mxu0 0.0
      %1436 = vmatprep.subr.mxu0 0.0
      %1437 = vmatpush1.msra.mxu0 0.0
      %1438 = vmatprep.subr.mxu0 0.0
      %1439 = vmatpush1.msra.mxu0 0.0
      %1440 = vmatprep.subr.mxu0 0.0
      %1441 = vmatpush1.msra.mxu0 0.0
      %1442 = vmatprep.mubr.f32.mxu0 0.0
      %1443 = vmatmul.mubr.f32.gmra.mrb[0].mxu0 %v1368
      %v1444 = vpop.f32.mrb[0].mxu0
      %v1445 = vadd.f32 0.0, %v1444
      %v1446 = vpop.f32.mrb[0].mxu0
      %v1447 = vadd.f32 0.0, %v1446
      %1448 = vdwg.mxu0
      %1449 = vmatprep.subr.mxu0 %v593
      %1450 = vmatpush1.msra.mxu0 %v592
      %1451 = vmatprep.subr.mxu0 %v597
      %1452 = vmatpush1.msra.mxu0 %v596
      %1453 = vmatprep.subr.mxu0 %v601
      %1454 = vmatpush1.msra.mxu0 %v600
      %1455 = vmatprep.subr.mxu0 %v605
      %1456 = vmatpush1.msra.mxu0 %v604
      %1457 = vmatprep.subr.mxu0 %v609
      %1458 = vmatpush1.msra.mxu0 %v608
      %1459 = vmatprep.subr.mxu0 %v613
      %1460 = vmatpush1.msra.mxu0 %v612
      %1461 = vmatprep.subr.mxu0 %v617
      %1462 = vmatpush1.msra.mxu0 %v616
      %1463 = vmatprep.subr.mxu0 %v621
      %1464 = vmatpush1.msra.mxu0 %v620
      %1465 = vmatprep.subr.mxu0 %v625
      %1466 = vmatpush1.msra.mxu0 %v624
      %1467 = vmatprep.subr.mxu0 %v629
      %1468 = vmatpush1.msra.mxu0 %v628
      %1469 = vmatprep.subr.mxu0 %v633
      %1470 = vmatpush1.msra.mxu0 %v632
      %1471 = vmatprep.subr.mxu0 %v637
      %1472 = vmatpush1.msra.mxu0 %v636
      %1473 = vmatprep.subr.mxu0 %v641
      %1474 = vmatpush1.msra.mxu0 %v640
      %1475 = vmatprep.subr.mxu0 %v645
      %1476 = vmatpush1.msra.mxu0 %v644
      %1477 = vmatprep.subr.mxu0 %v649
      %1478 = vmatpush1.msra.mxu0 %v648
      %1479 = vmatprep.subr.mxu0 %v653
      %1480 = vmatpush1.msra.mxu0 %v652
      %1481 = vmatprep.subr.mxu0 0.0
      %1482 = vmatpush1.msra.mxu0 0.0
      %1483 = vmatprep.subr.mxu0 0.0
      %1484 = vmatpush1.msra.mxu0 0.0
      %1485 = vmatprep.subr.mxu0 0.0
      %1486 = vmatpush1.msra.mxu0 0.0
      %1487 = vmatprep.subr.mxu0 0.0
      %1488 = vmatpush1.msra.mxu0 0.0
      %1489 = vmatprep.subr.mxu0 0.0
      %1490 = vmatpush1.msra.mxu0 0.0
      %1491 = vmatprep.subr.mxu0 0.0
      %1492 = vmatpush1.msra.mxu0 0.0
      %1493 = vmatprep.subr.mxu0 0.0
      %1494 = vmatpush1.msra.mxu0 0.0
      %1495 = vmatprep.subr.mxu0 0.0
      %1496 = vmatpush1.msra.mxu0 0.0
      %1497 = vmatprep.subr.mxu0 0.0
      %1498 = vmatpush1.msra.mxu0 0.0
      %1499 = vmatprep.subr.mxu0 0.0
      %1500 = vmatpush1.msra.mxu0 0.0
      %1501 = vmatprep.subr.mxu0 0.0
      %1502 = vmatpush1.msra.mxu0 0.0
      %1503 = vmatprep.subr.mxu0 0.0
      %1504 = vmatpush1.msra.mxu0 0.0
      %1505 = vmatprep.subr.mxu0 0.0
      %1506 = vmatpush1.msra.mxu0 0.0
      %1507 = vmatprep.subr.mxu0 0.0
      %1508 = vmatpush1.msra.mxu0 0.0
      %1509 = vmatprep.subr.mxu0 0.0
      %1510 = vmatpush1.msra.mxu0 0.0
      %1511 = vmatprep.subr.mxu0 0.0
      %1512 = vmatpush1.msra.mxu0 0.0
      %1513 = vmatprep.mubr.f32.mxu0 0.0
      %1514 = vmatmul.mubr.f32.gmra.mrb[0].mxu0 %v1368
      %v1515 = vpop.f32.mrb[0].mxu0
      %v1516 = vadd.f32 0.0, %v1515
      %v1517 = vpop.f32.mrb[0].mxu0
      %v1518 = vadd.f32 0.0, %v1517
      %1519 = vdwg.mxu0
      %v1520 = vadd.f32 %v1374, %v1445
      %v1521 = vadd.f32 %v1375, %v1447
      %v1522 = vadd.f32 %v1376, %v1516
      %v1523 = vadd.f32 %v1377, %v1518
      %v1524 = vxor.u32 %v1520, 2147483648
      %v1525 = vxor.u32 %v1521, 2147483648
      %v1526 = vxor.u32 %v1522, 2147483648
      %v1527 = vmul.f32 %v1524, 1.442695
      %v1528 = vpow.pop %v1527
      %v1529 = vmul.f32 %v1525, 1.442695
      %v1530 = vpow.pop %v1529
      %v1531 = vmul.f32 %v1526, 1.442695
      %v1532 = vpow.pop %v1531
      %v1533 = vadd.f32 %v1528, 1.0
      %v1534 = vadd.f32 %v1530, 1.0
      %v1535 = vadd.f32 %v1532, 1.0
      %v1536 = vrcp.pop %v1533
      %v1537 = vmul.f32 1.0, %v1536
      %v1538 = vrcp.pop %v1534
      %v1539 = vmul.f32 1.0, %v1538
      %v1540 = vrcp.pop %v1535
      %v1541 = vmul.f32 1.0, %v1540
      %v1542 = vtanh.pop %v1523
      %v1543 = vmul.f32 %v1539, %v1366
      %v1544 = vmul.f32 %v1537, %v1542
      %v1545 = vadd.f32 %v1543, %v1544
      %v1546 = vtanh.pop %v1545
      %v1547 = vmul.f32 %v1541, %v1546
      %s1548 = scalar_lea.vmem %s230, 32
      %1549 = vst [vmem:[%s1548] sm:$0xff] %v1547
      %s1550 = smul.u32 5, 4
      %s1551 = smul.addr %s1550, 8
      %s1552 = scalar_lea.vmem [#allocation4], %s1551
      %v1553 = vld [vmem:[%s1552] sm:$0xff]
      %v1554 = vld [vmem:[%s1552 + $0x8] sm:$0xff]
      %v1555 = vld [vmem:[%s1552 + $0x10] sm:$0xff]
      %v1556 = vld [vmem:[%s1552 + $0x18] sm:$0xff]
      %1557 = vmatprep.subr.mxu0 %v591
      %1558 = vmatpush1.msra.mxu0 %v590
      %1559 = vmatprep.subr.mxu0 %v595
      %1560 = vmatpush1.msra.mxu0 %v594
      %1561 = vmatprep.subr.mxu0 %v599
      %1562 = vmatpush1.msra.mxu0 %v598
      %1563 = vmatprep.subr.mxu0 %v603
      %1564 = vmatpush1.msra.mxu0 %v602
      %1565 = vmatprep.subr.mxu0 %v607
      %1566 = vmatpush1.msra.mxu0 %v606
      %1567 = vmatprep.subr.mxu0 %v611
      %1568 = vmatpush1.msra.mxu0 %v610
      %1569 = vmatprep.subr.mxu0 %v615
      %1570 = vmatpush1.msra.mxu0 %v614
      %1571 = vmatprep.subr.mxu0 %v619
      %1572 = vmatpush1.msra.mxu0 %v618
      %1573 = vmatprep.subr.mxu0 %v623
      %1574 = vmatpush1.msra.mxu0 %v622
      %1575 = vmatprep.subr.mxu0 %v627
      %1576 = vmatpush1.msra.mxu0 %v626
      %1577 = vmatprep.subr.mxu0 %v631
      %1578 = vmatpush1.msra.mxu0 %v630
      %1579 = vmatprep.subr.mxu0 %v635
      %1580 = vmatpush1.msra.mxu0 %v634
      %1581 = vmatprep.subr.mxu0 %v639
      %1582 = vmatpush1.msra.mxu0 %v638
      %1583 = vmatprep.subr.mxu0 %v643
      %1584 = vmatpush1.msra.mxu0 %v642
      %1585 = vmatprep.subr.mxu0 %v647
      %1586 = vmatpush1.msra.mxu0 %v646
      %1587 = vmatprep.subr.mxu0 %v651
      %1588 = vmatpush1.msra.mxu0 %v650
      %1589 = vmatprep.subr.mxu0 0.0
      %1590 = vmatpush1.msra.mxu0 0.0
      %1591 = vmatprep.subr.mxu0 0.0
      %1592 = vmatpush1.msra.mxu0 0.0
      %1593 = vmatprep.subr.mxu0 0.0
      %1594 = vmatpush1.msra.mxu0 0.0
      %1595 = vmatprep.subr.mxu0 0.0
      %1596 = vmatpush1.msra.mxu0 0.0
      %1597 = vmatprep.subr.mxu0 0.0
      %1598 = vmatpush1.msra.mxu0 0.0
      %1599 = vmatprep.subr.mxu0 0.0
      %1600 = vmatpush1.msra.mxu0 0.0
      %1601 = vmatprep.subr.mxu0 0.0
      %1602 = vmatpush1.msra.mxu0 0.0
      %1603 = vmatprep.subr.mxu0 0.0
      %1604 = vmatpush1.msra.mxu0 0.0
      %1605 = vmatprep.subr.mxu0 0.0
      %1606 = vmatpush1.msra.mxu0 0.0
      %1607 = vmatprep.subr.mxu0 0.0
      %1608 = vmatpush1.msra.mxu0 0.0
      %1609 = vmatprep.subr.mxu0 0.0
      %1610 = vmatpush1.msra.mxu0 0.0
      %1611 = vmatprep.subr.mxu0 0.0
      %1612 = vmatpush1.msra.mxu0 0.0
      %1613 = vmatprep.subr.mxu0 0.0
      %1614 = vmatpush1.msra.mxu0 0.0
      %1615 = vmatprep.subr.mxu0 0.0
      %1616 = vmatpush1.msra.mxu0 0.0
      %1617 = vmatprep.subr.mxu0 0.0
      %1618 = vmatpush1.msra.mxu0 0.0
      %1619 = vmatprep.subr.mxu0 0.0
      %1620 = vmatpush1.msra.mxu0 0.0
      %1621 = vmatprep.mubr.f32.mxu0 0.0
      %1622 = vmatmul.mubr.f32.gmra.mrb[0].mxu0 %v1547
      %v1623 = vpop.f32.mrb[0].mxu0
      %v1624 = vadd.f32 0.0, %v1623
      %v1625 = vpop.f32.mrb[0].mxu0
      %v1626 = vadd.f32 0.0, %v1625
      %1627 = vdwg.mxu0
      %1628 = vmatprep.subr.mxu0 %v593
      %1629 = vmatpush1.msra.mxu0 %v592
      %1630 = vmatprep.subr.mxu0 %v597
      %1631 = vmatpush1.msra.mxu0 %v596
      %1632 = vmatprep.subr.mxu0 %v601
      %1633 = vmatpush1.msra.mxu0 %v600
      %1634 = vmatprep.subr.mxu0 %v605
      %1635 = vmatpush1.msra.mxu0 %v604
      %1636 = vmatprep.subr.mxu0 %v609
      %1637 = vmatpush1.msra.mxu0 %v608
      %1638 = vmatprep.subr.mxu0 %v613
      %1639 = vmatpush1.msra.mxu0 %v612
      %1640 = vmatprep.subr.mxu0 %v617
      %1641 = vmatpush1.msra.mxu0 %v616
      %1642 = vmatprep.subr.mxu0 %v621
      %1643 = vmatpush1.msra.mxu0 %v620
      %1644 = vmatprep.subr.mxu0 %v625
      %1645 = vmatpush1.msra.mxu0 %v624
      %1646 = vmatprep.subr.mxu0 %v629
      %1647 = vmatpush1.msra.mxu0 %v628
      %1648 = vmatprep.subr.mxu0 %v633
      %1649 = vmatpush1.msra.mxu0 %v632
      %1650 = vmatprep.subr.mxu0 %v637
      %1651 = vmatpush1.msra.mxu0 %v636
      %1652 = vmatprep.subr.mxu0 %v641
      %1653 = vmatpush1.msra.mxu0 %v640
      %1654 = vmatprep.subr.mxu0 %v645
      %1655 = vmatpush1.msra.mxu0 %v644
      %1656 = vmatprep.subr.mxu0 %v649
      %1657 = vmatpush1.msra.mxu0 %v648
      %1658 = vmatprep.subr.mxu0 %v653
      %1659 = vmatpush1.msra.mxu0 %v652
      %1660 = vmatprep.subr.mxu0 0.0
      %1661 = vmatpush1.msra.mxu0 0.0
      %1662 = vmatprep.subr.mxu0 0.0
      %1663 = vmatpush1.msra.mxu0 0.0
      %1664 = vmatprep.subr.mxu0 0.0
      %1665 = vmatpush1.msra.mxu0 0.0
      %1666 = vmatprep.subr.mxu0 0.0
      %1667 = vmatpush1.msra.mxu0 0.0
      %1668 = vmatprep.subr.mxu0 0.0
      %1669 = vmatpush1.msra.mxu0 0.0
      %1670 = vmatprep.subr.mxu0 0.0
      %1671 = vmatpush1.msra.mxu0 0.0
      %1672 = vmatprep.subr.mxu0 0.0
      %1673 = vmatpush1.msra.mxu0 0.0
      %1674 = vmatprep.subr.mxu0 0.0
      %1675 = vmatpush1.msra.mxu0 0.0
      %1676 = vmatprep.subr.mxu0 0.0
      %1677 = vmatpush1.msra.mxu0 0.0
      %1678 = vmatprep.subr.mxu0 0.0
      %1679 = vmatpush1.msra.mxu0 0.0
      %1680 = vmatprep.subr.mxu0 0.0
      %1681 = vmatpush1.msra.mxu0 0.0
      %1682 = vmatprep.subr.mxu0 0.0
      %1683 = vmatpush1.msra.mxu0 0.0
      %1684 = vmatprep.subr.mxu0 0.0
      %1685 = vmatpush1.msra.mxu0 0.0
      %1686 = vmatprep.subr.mxu0 0.0
      %1687 = vmatpush1.msra.mxu0 0.0
      %1688 = vmatprep.subr.mxu0 0.0
      %1689 = vmatpush1.msra.mxu0 0.0
      %1690 = vmatprep.subr.mxu0 0.0
      %1691 = vmatpush1.msra.mxu0 0.0
      %1692 = vmatprep.mubr.f32.mxu0 0.0
      %1693 = vmatmul.mubr.f32.gmra.mrb[0].mxu0 %v1547
      %v1694 = vpop.f32.mrb[0].mxu0
      %v1695 = vadd.f32 0.0, %v1694
      %v1696 = vpop.f32.mrb[0].mxu0
      %v1697 = vadd.f32 0.0, %v1696
      %1698 = vdwg.mxu0
      %v1699 = vadd.f32 %v1553, %v1624
      %v1700 = vadd.f32 %v1554, %v1626
      %v1701 = vadd.f32 %v1555, %v1695
      %v1702 = vadd.f32 %v1556, %v1697
      %v1703 = vxor.u32 %v1699, 2147483648
      %v1704 = vxor.u32 %v1700, 2147483648
      %v1705 = vxor.u32 %v1701, 2147483648
      %v1706 = vmul.f32 %v1703, 1.442695
      %v1707 = vpow.pop %v1706
      %v1708 = vmul.f32 %v1704, 1.442695
      %v1709 = vpow.pop %v1708
      %v1710 = vmul.f32 %v1705, 1.442695
      %v1711 = vpow.pop %v1710
      %v1712 = vadd.f32 %v1707, 1.0
      %v1713 = vadd.f32 %v1709, 1.0
      %v1714 = vadd.f32 %v1711, 1.0
      %v1715 = vrcp.pop %v1712
      %v1716 = vmul.f32 1.0, %v1715
      %v1717 = vrcp.pop %v1713
      %v1718 = vmul.f32 1.0, %v1717
      %v1719 = vrcp.pop %v1714
      %v1720 = vmul.f32 1.0, %v1719
      %v1721 = vtanh.pop %v1702
      %v1722 = vmul.f32 %v1718, %v1545
      %v1723 = vmul.f32 %v1716, %v1721
      %v1724 = vadd.f32 %v1722, %v1723
      %v1725 = vtanh.pop %v1724
      %v1726 = vmul.f32 %v1720, %v1725
      %s1727 = scalar_lea.vmem %s230, 40
      %1728 = vst [vmem:[%s1727] sm:$0xff] %v1726
      %s1729 = smul.u32 6, 4
      %s1730 = smul.addr %s1729, 8
      %s1731 = scalar_lea.vmem [#allocation4], %s1730
      %v1732 = vld [vmem:[%s1731] sm:$0xff]
      %v1733 = vld [vmem:[%s1731 + $0x8] sm:$0xff]
      %v1734 = vld [vmem:[%s1731 + $0x10] sm:$0xff]
      %v1735 = vld [vmem:[%s1731 + $0x18] sm:$0xff]
      %1736 = vmatprep.subr.mxu0 %v591
      %1737 = vmatpush1.msra.mxu0 %v590
      %1738 = vmatprep.subr.mxu0 %v595
      %1739 = vmatpush1.msra.mxu0 %v594
      %1740 = vmatprep.subr.mxu0 %v599
      %1741 = vmatpush1.msra.mxu0 %v598
      %1742 = vmatprep.subr.mxu0 %v603
      %1743 = vmatpush1.msra.mxu0 %v602
      %1744 = vmatprep.subr.mxu0 %v607
      %1745 = vmatpush1.msra.mxu0 %v606
      %1746 = vmatprep.subr.mxu0 %v611
      %1747 = vmatpush1.msra.mxu0 %v610
      %1748 = vmatprep.subr.mxu0 %v615
      %1749 = vmatpush1.msra.mxu0 %v614
      %1750 = vmatprep.subr.mxu0 %v619
      %1751 = vmatpush1.msra.mxu0 %v618
      %1752 = vmatprep.subr.mxu0 %v623
      %1753 = vmatpush1.msra.mxu0 %v622
      %1754 = vmatprep.subr.mxu0 %v627
      %1755 = vmatpush1.msra.mxu0 %v626
      %1756 = vmatprep.subr.mxu0 %v631
      %1757 = vmatpush1.msra.mxu0 %v630
      %1758 = vmatprep.subr.mxu0 %v635
      %1759 = vmatpush1.msra.mxu0 %v634
      %1760 = vmatprep.subr.mxu0 %v639
      %1761 = vmatpush1.msra.mxu0 %v638
      %1762 = vmatprep.subr.mxu0 %v643
      %1763 = vmatpush1.msra.mxu0 %v642
      %1764 = vmatprep.subr.mxu0 %v647
      %1765 = vmatpush1.msra.mxu0 %v646
      %1766 = vmatprep.subr.mxu0 %v651
      %1767 = vmatpush1.msra.mxu0 %v650
      %1768 = vmatprep.subr.mxu0 0.0
      %1769 = vmatpush1.msra.mxu0 0.0
      %1770 = vmatprep.subr.mxu0 0.0
      %1771 = vmatpush1.msra.mxu0 0.0
      %1772 = vmatprep.subr.mxu0 0.0
      %1773 = vmatpush1.msra.mxu0 0.0
      %1774 = vmatprep.subr.mxu0 0.0
      %1775 = vmatpush1.msra.mxu0 0.0
      %1776 = vmatprep.subr.mxu0 0.0
      %1777 = vmatpush1.msra.mxu0 0.0
      %1778 = vmatprep.subr.mxu0 0.0
      %1779 = vmatpush1.msra.mxu0 0.0
      %1780 = vmatprep.subr.mxu0 0.0
      %1781 = vmatpush1.msra.mxu0 0.0
      %1782 = vmatprep.subr.mxu0 0.0
      %1783 = vmatpush1.msra.mxu0 0.0
      %1784 = vmatprep.subr.mxu0 0.0
      %1785 = vmatpush1.msra.mxu0 0.0
      %1786 = vmatprep.subr.mxu0 0.0
      %1787 = vmatpush1.msra.mxu0 0.0
      %1788 = vmatprep.subr.mxu0 0.0
      %1789 = vmatpush1.msra.mxu0 0.0
      %1790 = vmatprep.subr.mxu0 0.0
      %1791 = vmatpush1.msra.mxu0 0.0
      %1792 = vmatprep.subr.mxu0 0.0
      %1793 = vmatpush1.msra.mxu0 0.0
      %1794 = vmatprep.subr.mxu0 0.0
      %1795 = vmatpush1.msra.mxu0 0.0
      %1796 = vmatprep.subr.mxu0 0.0
      %1797 = vmatpush1.msra.mxu0 0.0
      %1798 = vmatprep.subr.mxu0 0.0
      %1799 = vmatpush1.msra.mxu0 0.0
      %1800 = vmatprep.mubr.f32.mxu0 0.0
      %1801 = vmatmul.mubr.f32.gmra.mrb[0].mxu0 %v1726
      %v1802 = vpop.f32.mrb[0].mxu0
      %v1803 = vadd.f32 0.0, %v1802
      %v1804 = vpop.f32.mrb[0].mxu0
      %v1805 = vadd.f32 0.0, %v1804
      %1806 = vdwg.mxu0
      %1807 = vmatprep.subr.mxu0 %v593
      %1808 = vmatpush1.msra.mxu0 %v592
      %1809 = vmatprep.subr.mxu0 %v597
      %1810 = vmatpush1.msra.mxu0 %v596
      %1811 = vmatprep.subr.mxu0 %v601
      %1812 = vmatpush1.msra.mxu0 %v600
      %1813 = vmatprep.subr.mxu0 %v605
      %1814 = vmatpush1.msra.mxu0 %v604
      %1815 = vmatprep.subr.mxu0 %v609
      %1816 = vmatpush1.msra.mxu0 %v608
      %1817 = vmatprep.subr.mxu0 %v613
      %1818 = vmatpush1.msra.mxu0 %v612
      %1819 = vmatprep.subr.mxu0 %v617
      %1820 = vmatpush1.msra.mxu0 %v616
      %1821 = vmatprep.subr.mxu0 %v621
      %1822 = vmatpush1.msra.mxu0 %v620
      %1823 = vmatprep.subr.mxu0 %v625
      %1824 = vmatpush1.msra.mxu0 %v624
      %1825 = vmatprep.subr.mxu0 %v629
      %1826 = vmatpush1.msra.mxu0 %v628
      %1827 = vmatprep.subr.mxu0 %v633
      %1828 = vmatpush1.msra.mxu0 %v632
      %1829 = vmatprep.subr.mxu0 %v637
      %1830 = vmatpush1.msra.mxu0 %v636
      %1831 = vmatprep.subr.mxu0 %v641
      %1832 = vmatpush1.msra.mxu0 %v640
      %1833 = vmatprep.subr.mxu0 %v645
      %1834 = vmatpush1.msra.mxu0 %v644
      %1835 = vmatprep.subr.mxu0 %v649
      %1836 = vmatpush1.msra.mxu0 %v648
      %1837 = vmatprep.subr.mxu0 %v653
      %1838 = vmatpush1.msra.mxu0 %v652
      %1839 = vmatprep.subr.mxu0 0.0
      %1840 = vmatpush1.msra.mxu0 0.0
      %1841 = vmatprep.subr.mxu0 0.0
      %1842 = vmatpush1.msra.mxu0 0.0
      %1843 = vmatprep.subr.mxu0 0.0
      %1844 = vmatpush1.msra.mxu0 0.0
      %1845 = vmatprep.subr.mxu0 0.0
      %1846 = vmatpush1.msra.mxu0 0.0
      %1847 = vmatprep.subr.mxu0 0.0
      %1848 = vmatpush1.msra.mxu0 0.0
      %1849 = vmatprep.subr.mxu0 0.0
      %1850 = vmatpush1.msra.mxu0 0.0
      %1851 = vmatprep.subr.mxu0 0.0
      %1852 = vmatpush1.msra.mxu0 0.0
      %1853 = vmatprep.subr.mxu0 0.0
      %1854 = vmatpush1.msra.mxu0 0.0
      %1855 = vmatprep.subr.mxu0 0.0
      %1856 = vmatpush1.msra.mxu0 0.0
      %1857 = vmatprep.subr.mxu0 0.0
      %1858 = vmatpush1.msra.mxu0 0.0
      %1859 = vmatprep.subr.mxu0 0.0
      %1860 = vmatpush1.msra.mxu0 0.0
      %1861 = vmatprep.subr.mxu0 0.0
      %1862 = vmatpush1.msra.mxu0 0.0
      %1863 = vmatprep.subr.mxu0 0.0
      %1864 = vmatpush1.msra.mxu0 0.0
      %1865 = vmatprep.subr.mxu0 0.0
      %1866 = vmatpush1.msra.mxu0 0.0
      %1867 = vmatprep.subr.mxu0 0.0
      %1868 = vmatpush1.msra.mxu0 0.0
      %1869 = vmatprep.subr.mxu0 0.0
      %1870 = vmatpush1.msra.mxu0 0.0
      %1871 = vmatprep.mubr.f32.mxu0 0.0
      %1872 = vmatmul.mubr.f32.gmra.mrb[0].mxu0 %v1726
      %v1873 = vpop.f32.mrb[0].mxu0
      %v1874 = vadd.f32 0.0, %v1873
      %v1875 = vpop.f32.mrb[0].mxu0
      %v1876 = vadd.f32 0.0, %v1875
      %1877 = vdwg.mxu0
      %v1878 = vadd.f32 %v1732, %v1803
      %v1879 = vadd.f32 %v1733, %v1805
      %v1880 = vadd.f32 %v1734, %v1874
      %v1881 = vadd.f32 %v1735, %v1876
      %v1882 = vxor.u32 %v1878, 2147483648
      %v1883 = vxor.u32 %v1879, 2147483648
      %v1884 = vxor.u32 %v1880, 2147483648
      %v1885 = vmul.f32 %v1882, 1.442695
      %v1886 = vpow.pop %v1885
      %v1887 = vmul.f32 %v1883, 1.442695
      %v1888 = vpow.pop %v1887
      %v1889 = vmul.f32 %v1884, 1.442695
      %v1890 = vpow.pop %v1889
      %v1891 = vadd.f32 %v1886, 1.0
      %v1892 = vadd.f32 %v1888, 1.0
      %v1893 = vadd.f32 %v1890, 1.0
      %v1894 = vrcp.pop %v1891
      %v1895 = vmul.f32 1.0, %v1894
      %v1896 = vrcp.pop %v1892
      %v1897 = vmul.f32 1.0, %v1896
      %v1898 = vrcp.pop %v1893
      %v1899 = vmul.f32 1.0, %v1898
      %v1900 = vtanh.pop %v1881
      %v1901 = vmul.f32 %v1897, %v1724
      %v1902 = vmul.f32 %v1895, %v1900
      %v1903 = vadd.f32 %v1901, %v1902
      %v1904 = vtanh.pop %v1903
      %v1905 = vmul.f32 %v1899, %v1904
      %s1906 = scalar_lea.vmem %s230, 48
      %1907 = vst [vmem:[%s1906] sm:$0xff] %v1905
      %s1908 = smul.u32 7, 4
      %s1909 = smul.addr %s1908, 8
      %s1910 = scalar_lea.vmem [#allocation4], %s1909
      %v1911 = vld [vmem:[%s1910] sm:$0xff]
      %v1912 = vld [vmem:[%s1910 + $0x8] sm:$0xff]
      %v1913 = vld [vmem:[%s1910 + $0x10] sm:$0xff]
      %v1914 = vld [vmem:[%s1910 + $0x18] sm:$0xff]
      %1915 = vmatprep.subr.mxu0 %v591
      %1916 = vmatpush1.msra.mxu0 %v590
      %1917 = vmatprep.subr.mxu0 %v595
      %1918 = vmatpush1.msra.mxu0 %v594
      %1919 = vmatprep.subr.mxu0 %v599
      %1920 = vmatpush1.msra.mxu0 %v598
      %1921 = vmatprep.subr.mxu0 %v603
      %1922 = vmatpush1.msra.mxu0 %v602
      %1923 = vmatprep.subr.mxu0 %v607
      %1924 = vmatpush1.msra.mxu0 %v606
      %1925 = vmatprep.subr.mxu0 %v611
      %1926 = vmatpush1.msra.mxu0 %v610
      %1927 = vmatprep.subr.mxu0 %v615
      %1928 = vmatpush1.msra.mxu0 %v614
      %1929 = vmatprep.subr.mxu0 %v619
      %1930 = vmatpush1.msra.mxu0 %v618
      %1931 = vmatprep.subr.mxu0 %v623
      %1932 = vmatpush1.msra.mxu0 %v622
      %1933 = vmatprep.subr.mxu0 %v627
      %1934 = vmatpush1.msra.mxu0 %v626
      %1935 = vmatprep.subr.mxu0 %v631
      %1936 = vmatpush1.msra.mxu0 %v630
      %1937 = vmatprep.subr.mxu0 %v635
      %1938 = vmatpush1.msra.mxu0 %v634
      %1939 = vmatprep.subr.mxu0 %v639
      %1940 = vmatpush1.msra.mxu0 %v638
      %1941 = vmatprep.subr.mxu0 %v643
      %1942 = vmatpush1.msra.mxu0 %v642
      %1943 = vmatprep.subr.mxu0 %v647
      %1944 = vmatpush1.msra.mxu0 %v646
      %1945 = vmatprep.subr.mxu0 %v651
      %1946 = vmatpush1.msra.mxu0 %v650
      %1947 = vmatprep.subr.mxu0 0.0
      %1948 = vmatpush1.msra.mxu0 0.0
      %1949 = vmatprep.subr.mxu0 0.0
      %1950 = vmatpush1.msra.mxu0 0.0
      %1951 = vmatprep.subr.mxu0 0.0
      %1952 = vmatpush1.msra.mxu0 0.0
      %1953 = vmatprep.subr.mxu0 0.0
      %1954 = vmatpush1.msra.mxu0 0.0
      %1955 = vmatprep.subr.mxu0 0.0
      %1956 = vmatpush1.msra.mxu0 0.0
      %1957 = vmatprep.subr.mxu0 0.0
      %1958 = vmatpush1.msra.mxu0 0.0
      %1959 = vmatprep.subr.mxu0 0.0
      %1960 = vmatpush1.msra.mxu0 0.0
      %1961 = vmatprep.subr.mxu0 0.0
      %1962 = vmatpush1.msra.mxu0 0.0
      %1963 = vmatprep.subr.mxu0 0.0
      %1964 = vmatpush1.msra.mxu0 0.0
      %1965 = vmatprep.subr.mxu0 0.0
      %1966 = vmatpush1.msra.mxu0 0.0
      %1967 = vmatprep.subr.mxu0 0.0
      %1968 = vmatpush1.msra.mxu0 0.0
      %1969 = vmatprep.subr.mxu0 0.0
      %1970 = vmatpush1.msra.mxu0 0.0
      %1971 = vmatprep.subr.mxu0 0.0
      %1972 = vmatpush1.msra.mxu0 0.0
      %1973 = vmatprep.subr.mxu0 0.0
      %1974 = vmatpush1.msra.mxu0 0.0
      %1975 = vmatprep.subr.mxu0 0.0
      %1976 = vmatpush1.msra.mxu0 0.0
      %1977 = vmatprep.subr.mxu0 0.0
      %1978 = vmatpush1.msra.mxu0 0.0
      %1979 = vmatprep.mubr.f32.mxu0 0.0
      %1980 = vmatmul.mubr.f32.gmra.mrb[0].mxu0 %v1905
      %v1981 = vpop.f32.mrb[0].mxu0
      %v1982 = vadd.f32 0.0, %v1981
      %v1983 = vpop.f32.mrb[0].mxu0
      %v1984 = vadd.f32 0.0, %v1983
      %1985 = vdwg.mxu0
      %1986 = vmatprep.subr.mxu0 %v593
      %1987 = vmatpush1.msra.mxu0 %v592
      %1988 = vmatprep.subr.mxu0 %v597
      %1989 = vmatpush1.msra.mxu0 %v596
      %1990 = vmatprep.subr.mxu0 %v601
      %1991 = vmatpush1.msra.mxu0 %v600
      %1992 = vmatprep.subr.mxu0 %v605
      %1993 = vmatpush1.msra.mxu0 %v604
      %1994 = vmatprep.subr.mxu0 %v609
      %1995 = vmatpush1.msra.mxu0 %v608
      %1996 = vmatprep.subr.mxu0 %v613
      %1997 = vmatpush1.msra.mxu0 %v612
      %1998 = vmatprep.subr.mxu0 %v617
      %1999 = vmatpush1.msra.mxu0 %v616
      %2000 = vmatprep.subr.mxu0 %v621
      %2001 = vmatpush1.msra.mxu0 %v620
      %2002 = vmatprep.subr.mxu0 %v625
      %2003 = vmatpush1.msra.mxu0 %v624
      %2004 = vmatprep.subr.mxu0 %v629
      %2005 = vmatpush1.msra.mxu0 %v628
      %2006 = vmatprep.subr.mxu0 %v633
      %2007 = vmatpush1.msra.mxu0 %v632
      %2008 = vmatprep.subr.mxu0 %v637
      %2009 = vmatpush1.msra.mxu0 %v636
      %2010 = vmatprep.subr.mxu0 %v641
      %2011 = vmatpush1.msra.mxu0 %v640
      %2012 = vmatprep.subr.mxu0 %v645
      %2013 = vmatpush1.msra.mxu0 %v644
      %2014 = vmatprep.subr.mxu0 %v649
      %2015 = vmatpush1.msra.mxu0 %v648
      %2016 = vmatprep.subr.mxu0 %v653
      %2017 = vmatpush1.msra.mxu0 %v652
      %2018 = vmatprep.subr.mxu0 0.0
      %2019 = vmatpush1.msra.mxu0 0.0
      %2020 = vmatprep.subr.mxu0 0.0
      %2021 = vmatpush1.msra.mxu0 0.0
      %2022 = vmatprep.subr.mxu0 0.0
      %2023 = vmatpush1.msra.mxu0 0.0
      %2024 = vmatprep.subr.mxu0 0.0
      %2025 = vmatpush1.msra.mxu0 0.0
      %2026 = vmatprep.subr.mxu0 0.0
      %2027 = vmatpush1.msra.mxu0 0.0
      %2028 = vmatprep.subr.mxu0 0.0
      %2029 = vmatpush1.msra.mxu0 0.0
      %2030 = vmatprep.subr.mxu0 0.0
      %2031 = vmatpush1.msra.mxu0 0.0
      %2032 = vmatprep.subr.mxu0 0.0
      %2033 = vmatpush1.msra.mxu0 0.0
      %2034 = vmatprep.subr.mxu0 0.0
      %2035 = vmatpush1.msra.mxu0 0.0
      %2036 = vmatprep.subr.mxu0 0.0
      %2037 = vmatpush1.msra.mxu0 0.0
      %2038 = vmatprep.subr.mxu0 0.0
      %2039 = vmatpush1.msra.mxu0 0.0
      %2040 = vmatprep.subr.mxu0 0.0
      %2041 = vmatpush1.msra.mxu0 0.0
      %2042 = vmatprep.subr.mxu0 0.0
      %2043 = vmatpush1.msra.mxu0 0.0
      %2044 = vmatprep.subr.mxu0 0.0
      %2045 = vmatpush1.msra.mxu0 0.0
      %2046 = vmatprep.subr.mxu0 0.0
      %2047 = vmatpush1.msra.mxu0 0.0
      %2048 = vmatprep.subr.mxu0 0.0
      %2049 = vmatpush1.msra.mxu0 0.0
      %2050 = vmatprep.mubr.f32.mxu0 0.0
      %2051 = vmatmul.mubr.f32.gmra.mrb[0].mxu0 %v1905
      %v2052 = vpop.f32.mrb[0].mxu0
      %v2053 = vadd.f32 0.0, %v2052
      %v2054 = vpop.f32.mrb[0].mxu0
      %v2055 = vadd.f32 0.0, %v2054
      %2056 = vdwg.mxu0
      %v2057 = vadd.f32 %v1911, %v1982
      %v2058 = vadd.f32 %v1912, %v1984
      %v2059 = vadd.f32 %v1913, %v2053
      %v2060 = vadd.f32 %v1914, %v2055
      %v2061 = vxor.u32 %v2057, 2147483648
      %v2062 = vxor.u32 %v2058, 2147483648
      %v2063 = vxor.u32 %v2059, 2147483648
      %v2064 = vmul.f32 %v2061, 1.442695
      %v2065 = vpow.pop %v2064
      %v2066 = vmul.f32 %v2062, 1.442695
      %v2067 = vpow.pop %v2066
      %v2068 = vmul.f32 %v2063, 1.442695
      %v2069 = vpow.pop %v2068
      %v2070 = vadd.f32 %v2065, 1.0
      %v2071 = vadd.f32 %v2067, 1.0
      %v2072 = vadd.f32 %v2069, 1.0
      %v2073 = vrcp.pop %v2070
      %v2074 = vmul.f32 1.0, %v2073
      %v2075 = vrcp.pop %v2071
      %v2076 = vmul.f32 1.0, %v2075
      %v2077 = vrcp.pop %v2072
      %v2078 = vmul.f32 1.0, %v2077
      %v2079 = vtanh.pop %v2060
      %v2080 = vmul.f32 %v2076, %v1903
      %v2081 = vmul.f32 %v2074, %v2079
      %v2082 = vadd.f32 %v2080, %v2081
      %v2083 = vtanh.pop %v2082
      %v2084 = vmul.f32 %v2078, %v2083
      %s2085 = scalar_lea.vmem %s230, 56
      %2086 = vst [vmem:[%s2085] sm:$0xff] %v2084
      %2087 = vst [vmem:[#allocation2] sm:$0xff] %v2084
      %2088 = vst [vmem:[#allocation3] sm:$0xff] %v2082
      %s2089 = smul.u32 8, %s20
      %p2090 = scmp.lt.s32.totalorder %s2089, 15
      %s2091 = scalar_select %p2090, %s2089, 15
      %p2092 = scmp.lt.s32.totalorder %s19, 0
      %s2093 = scalar_select %p2092, %s19, 0
      %s2094 = sadd.s32 %s2093, %s2091
      %s2095 = smul.addr %s2094, 8
      %s2096 = scalar_lea.vmem %s4, %s2095
      // Predicated region
      $region41: #{lstm_attention_forward.4} parent=35 // pred_check
        %p2097 = pneg %p138
      $region42: #{lstm_attention_forward.4} parent=35 // pred_check_branch
        %2099 = sbr.rel (%p2097) target = $region44
      $region43: #{lstm_attention_forward.4} parent=35 // pred_region
        %s2100 = smul.u32 8, %s20
      $region44: #{lstm_attention_forward.4} parent=35 // pred_fallthru
        _
    $region36: #{lstm_attention_forward.4} parent=5 // pred_fallthru
      _
    %p2101 = scmp.le.s32.totalorder 2, %s10
    // Predicated region
    $region45: #{lstm_attention_forward.4} parent=5 // pred_check
      %p2102 = pneg %p2101
    $region46: #{lstm_attention_forward.4} parent=5 // pred_check_branch
      %2104 = sbr.rel (%p2102) target = $region48
    $region47: #{lstm_attention_forward.4} parent=5 // pred_region
      %s2105 = ssub.s32 %s10, 2
      // Predicated region
      $region49: #{lstm_attention_forward.4} parent=47 // pred_check
        %p2106 = pneg %p144
      $region50: #{lstm_attention_forward.4} parent=47 // pred_check_branch
        %2108 = sbr.rel (%p2106) target = $region52
      $region51: #{lstm_attention_forward.4} parent=47 // pred_region
        %s2109 = smul.u32 8, %s22
        %p2110 = scmp.lt.s32.totalorder %s2109, 15
        %s2111 = scalar_select %p2110, %s2109, 15
        %p2112 = scmp.lt.s32.totalorder %s21, 0
        %s2113 = scalar_select %p2112, %s21, 0
        %s2114 = sadd.s32 %s2113, %s2111
        %s2115 = smul.addr %s2114, 8
        %s2116 = scalar_lea.vmem %s4, %s2115
      $region52: #{lstm_attention_forward.4} parent=47 // pred_fallthru
        _
    $region48: #{lstm_attention_forward.4} parent=5 // pred_fallthru
      _
  $region6: #{lstm_attention_forward.4} parent=0 // loop_footer
    %s14 = sadd.s32 1, %s10
  $region7: #{lstm_attention_forward.4} parent=0 // loop_footer_branch
    %9 = sbr.rel target = $region3
  $region8: #{lstm_attention_forward.4} parent=0 // loop_exit
    _

</llo_original>
